<compile_context>
chip_gen: v7x
topology: tpu7x:2x2x1
jax: 0.10.0
libtpu: 0.0.40
codegen_flags: <defaults>
</compile_context>

<pallas_src>
import functools
from collections import OrderedDict

import jax
import jax.numpy as jnp
from jax import lax
from jax.experimental import pallas as pl
from jax.experimental.pallas import tpu as pltpu


_SQUEEZED = pl.Squeezed() if hasattr(pl, "Squeezed") else None


def _round_up(x, m):
    return (x + m - 1) // m * m


def _vmem_limit_bytes():
    """Generation-aware scoped-VMEM limit: ~75% of physical, capped at 100 MiB."""
    try:
        cap = int(pltpu.get_tpu_info().vmem_capacity_bytes)
    except Exception:
        cap = 64 * 1024 * 1024  # conservative (v7x-sized) fallback
    return max(32 * 1024 * 1024, min(100 * 1024 * 1024, (cap * 3) // 4))


def _pick_cout_tile(c_out_pad, n_batch, target):
    """Largest multiple of 128 dividing c_out_pad and <= target (prefers big,
    256-aligned tiles for the v6e/v7x MXU); then split once more if needed so
    the parallel grid has >= 2 tiles (v7x megacore)."""
    tn = 128
    t = 128
    while t <= c_out_pad:
        if c_out_pad % t == 0 and t <= target:
            tn = t
        t += 128
    if n_batch * (c_out_pad // tn) < 2 and tn % 256 == 0:
        tn //= 2
    return tn


# ----------------------------------------------------------------------------
# Pallas kernel: fused im2col 3x3 / stride-2 conv + bias + ReLU.
# One grid step = (one image, one C_out tile).
# ----------------------------------------------------------------------------
def _fused_conv_kernel(xe_ref, xo_ref, w_ref, b_ref, o_ref):
    # xe_ref / xo_ref : (2*H_out+1, W_out+1, C_in) bf16 — even / odd column
    #                   phases of the zero-padded NHWC input:
    #                   xe[r, c] = x_pad[r, 2c], xo[r, c] = x_pad[r, 2c+1].
    # w_ref           : (3, 3, C_in, tn) bf16 — per-tap weight matrices.
    # b_ref           : (1, tn) f32.
    # o_ref           : (H_out, W_out, tn) f32 — lane-dense (tn % 128 == 0).
    h_out, w_out, tn = o_ref.shape
    bias = jnp.broadcast_to(b_ref[...].astype(jnp.float32), (w_out, tn))
    # Hoist the 9 tap weight matrices out of the row loop (loop-invariant).
    w_tap = [[w_ref[dy, dx] for dx in range(3)] for dy in range(3)]

    def row_body(i, carry):
        acc = bias                                            # f32 (W_out, tn)
        for dy in range(3):
            xe_row = xe_ref[2 * i + dy]                       # (W_out+1, C_in)
            xo_row = xo_ref[2 * i + dy]
            acc = acc + jnp.dot(xe_row[:w_out], w_tap[dy][0],
                                preferred_element_type=jnp.float32)
            acc = acc + jnp.dot(xo_row[:w_out], w_tap[dy][1],
                                preferred_element_type=jnp.float32)
            acc = acc + jnp.dot(xe_row[1:w_out + 1], w_tap[dy][2],
                                preferred_element_type=jnp.float32)
        o_ref[i] = jnp.maximum(acc, 0.0).astype(o_ref.dtype)
        return carry

    if h_out <= 32:
        # Short static trip count: full unroll (static row indices for Mosaic).
        for i in range(h_out):
            row_body(i, 0)
    else:
        lax.fori_loop(0, h_out, row_body, 0)


@functools.partial(jax.jit, static_argnames=("cout_tile_target",))
def _conv3x3_s2_relu_pallas(x_nchw, weight, bias, *, cout_tile_target=512):
    """3x3 conv, stride 2, padding 1, + ReLU.  Fused-im2col Pallas kernel.

    x_nchw : (N, C_in, H, W) float32
    weight : (C_out, C_in, 3, 3) float32 (PyTorch layout)
    bias   : (C_out,) float32
    returns: (N, C_out, H_out, W_out) float32
    """
    N, C_in, H, W = x_nchw.shape
    C_out = weight.shape[0]
    pad, kh, kw, stride = 1, 3, 3, 2
    h_out = (H + 2 * pad - kh) // stride + 1
    w_out = (W + 2 * pad - kw) // stride + 1

    # --- prologue: one cheap layout pass, NO HBM im2col stream ---------------
    # TODO(synk): accept NHWC activations at the backbone boundary to drop this
    # transpose entirely (DETR's 1x1 input_proj consumes NHWC just as well).
    x = jnp.transpose(x_nchw, (0, 2, 3, 1)).astype(jnp.bfloat16)   # NHWC bf16
    x = jnp.pad(x, ((0, 0), (pad, pad), (pad, pad), (0, 0)))
    rows = 2 * h_out + 1                 # padded input rows actually used
    wp = w_out + 1                       # phase width incl. +1 column halo
    xe = x[:, :rows, 0::2, :][:, :, :wp, :]        # x_pad[..., 2j,   :]
    xo = x[:, :rows, 1::2, :][:, :, :wp, :]        # x_pad[..., 2j+1, :]
    if xo.shape[2] < wp:
        xo = jnp.pad(xo, ((0, 0), (0, 0), (0, wp - xo.shape[2]), (0, 0)))

    # weights (C_out, C_in, 3, 3) -> (3, 3, C_in, C_out_pad); bias -> (1, C_out_pad)
    c_out_pad = _round_up(C_out, 128)    # lane-dense output tiles
    w_mat = jnp.transpose(weight, (2, 3, 1, 0)).astype(jnp.bfloat16)
    w_mat = jnp.pad(w_mat, ((0, 0), (0, 0), (0, 0), (0, c_out_pad - C_out)))
    b_mat = jnp.pad(bias.reshape(1, C_out).astype(jnp.float32),
                    ((0, 0), (0, c_out_pad - C_out)))

    # --- C_out tile / VMEM budget --------------------------------------------
    vmem_limit = _vmem_limit_bytes()
    tn = _pick_cout_tile(c_out_pad, N, cout_tile_target)

    def _step_bytes(t):
        return (2 * (kh * kw * C_in * t * 2)            # weights  (x2 buffers)
                + 2 * 2 * (rows * wp * C_in * 2)        # xe + xo  (x2 buffers)
                + 2 * (h_out * w_out * t * 4))          # output   (x2 buffers)

    while tn % 256 == 0 and _step_bytes(tn) > (vmem_limit * 3) // 4:
        tn //= 2
    # TODO(synk): for very large spatial inputs, additionally tile H_out with a
    # 1-row halo instead of holding a whole image's phases in VMEM.

    grid = (N, c_out_pad // tn)          # both axes parallel (megacore-friendly)

    cost = pl.CostEstimate(
        flops=2 * N * h_out * w_out * kh * kw * C_in * c_out_pad,
        transcendentals=0,
        bytes_accessed=(2 * N * rows * wp * C_in * 2
                        + kh * kw * C_in * c_out_pad * 2
                        + c_out_pad * 4
                        + N * h_out * w_out * c_out_pad * 4),
    )

    out = pl.pallas_call(
        _fused_conv_kernel,
        out_shape=jax.ShapeDtypeStruct((N, h_out, w_out, c_out_pad), jnp.float32),
        grid_spec=pltpu.PrefetchScalarGridSpec(
            num_scalar_prefetch=0,
            grid=grid,
            in_specs=[
                pl.BlockSpec((_SQUEEZED, rows, wp, C_in),
                             lambda n, j: (n, 0, 0, 0)),
                pl.BlockSpec((_SQUEEZED, rows, wp, C_in),
                             lambda n, j: (n, 0, 0, 0)),
                pl.BlockSpec((kh, kw, C_in, tn), lambda n, j: (0, 0, 0, j)),
                pl.BlockSpec((1, tn), lambda n, j: (0, j)),
            ],
            out_specs=pl.BlockSpec((_SQUEEZED, h_out, w_out, tn),
                                   lambda n, j: (n, 0, 0, j)),
        ),
        compiler_params=pltpu.CompilerParams(
            dimension_semantics=("parallel", "parallel"),
            vmem_limit_bytes=vmem_limit,
        ),
        cost_estimate=cost,
    )(xe, xo, w_mat, b_mat)

    out = out[..., :C_out]               # drop C_out lane padding
    # TODO(synk): returning NHWC (and bf16) here would drop this transpose and
    # halve output HBM writes; kept NCHW/f32 to match the PyTorch module.
    return jnp.transpose(out, (0, 3, 1, 2))


# ----------------------------------------------------------------------------
# Mask nearest interpolation (glue: pure gather; matches F.interpolate default
# mode='nearest': src = floor(dst * in/out), then .bool()).
# ----------------------------------------------------------------------------
def _interpolate_mask_nearest(mask, size):
    N, H, W = mask.shape
    H_out, W_out = size
    idx_h = jnp.floor(jnp.arange(H_out) * (H / H_out)).astype(jnp.int32)
    idx_w = jnp.floor(jnp.arange(W_out) * (W / W_out)).astype(jnp.int32)
    m = mask.astype(jnp.float32)[:, idx_h, :][:, :, idx_w]
    return m.astype(bool)


# ----------------------------------------------------------------------------
# BackboneBase equivalent
# ----------------------------------------------------------------------------
class BackboneBasePallas:
    """Synthetic BackboneBase: body = one 'layer4'-like conv stage.

    return_interm_layers=False -> return_layers = {'layer4': 0}, so the output
    OrderedDict has the single key 0 mapping to (features, mask) — the
    NestedTensor pair of the original module.
    """

    def __init__(self, num_channels: int, in_channels: int, key):
        self.num_channels = num_channels
        k_w, k_b = jax.random.split(key)
        fan_in = in_channels * 3 * 3
        scale = (2.0 / fan_in) ** 0.5
        self.weight = scale * jax.random.normal(
            k_w, (num_channels, in_channels, 3, 3), dtype=jnp.float32)
        self.bias = 0.01 * jax.random.normal(
            k_b, (num_channels,), dtype=jnp.float32)
        # TODO(synk): a real ResNet body (stem + layer1..layer4, BN, residuals)
        # is not reproduced; a single conv stage stands in for IntermediateLayerGetter.

    def __call__(self, tensors, mask):
        # tensors: (N, C, H, W) float32 ; mask: (N, H, W) bool (True = padded)
        feat = _conv3x3_s2_relu_pallas(tensors, self.weight, self.bias)
        xs = {0: feat}  # return_layers = {'layer4': 0}
        out = OrderedDict()
        for name, x in xs.items():
            m = _interpolate_mask_nearest(mask, x.shape[-2:])
            out[name] = (x, m)  # NestedTensor(x, mask)
        return out


if __name__ == "__main__":
    key = jax.random.PRNGKey(0)
    k_x, k_m, k_p = jax.random.split(key, 3)

    N, C_in, H, W = 2, 4, 16, 16
    num_channels = 8

    x = jax.random.normal(k_x, (N, C_in, H, W), dtype=jnp.float32)
    mask = jax.random.uniform(k_m, (N, H, W)) > 0.7   # True where padded

    backbone = BackboneBasePallas(num_channels=num_channels, in_channels=C_in, key=k_p)
    out = backbone(x, mask)

    feat, feat_mask = out[0]
    jax.block_until_ready(feat)
    jax.block_until_ready(feat_mask)

    assert feat.shape == (N, num_channels, H // 2, W // 2)
    assert feat_mask.shape == (N, H // 2, W // 2)
    assert feat_mask.dtype == jnp.bool_

    # correctness vs a pure-JAX reference conv (loose tol: bf16 MXU inputs)
    ref = jax.lax.conv_general_dilated(
        x, jnp.transpose(backbone.weight, (2, 3, 1, 0)),
        window_strides=(2, 2), padding=((1, 1), (1, 1)),
        dimension_numbers=("NCHW", "HWIO", "NCHW"))
    ref = jnp.maximum(ref + backbone.bias[None, :, None, None], 0.0)
    max_err = float(jnp.max(jnp.abs(feat - ref)))
    assert max_err < 0.15, f"max abs error {max_err}"

    # mask check vs floor-index nearest interpolation
    ref_mask = mask[:, ::2, ::2]
    assert bool(jnp.all(feat_mask == ref_mask))

    print("KERNEL_OK")
</pallas_src>

<mosaic_0001>
module attributes {stable_mosaic.version = 11 : i64} {
  func.func @_fused_conv_kernel(%arg0: i32, %arg1: i32, %arg2: memref<1x17x9x4xbf16, #tpu.memory_space<vmem>>, %arg3: memref<1x17x9x4xbf16, #tpu.memory_space<vmem>>, %arg4: memref<3x3x4x128xbf16, #tpu.memory_space<vmem>>, %arg5: memref<1x128xf32, #tpu.memory_space<vmem>>, %arg6: memref<1x8x8x128xf32, #tpu.memory_space<vmem>>) attributes {dimension_semantics = [#tpu.dimension_semantics<parallel>, #tpu.dimension_semantics<parallel>], iteration_bounds = array<i64: 2, 1>, scalar_prefetch = 0 : i64, scratch_operands = 0 : i64, tpu.core_type = #tpu.core_type<tc>, window_params = [{transform_indices = @transform_0, window_bounds = array<i64: 1, 17, 9, 4>}, {transform_indices = @transform_1, window_bounds = array<i64: 1, 17, 9, 4>}, {transform_indices = @transform_2, window_bounds = array<i64: 3, 3, 4, 128>}, {transform_indices = @transform_3, window_bounds = array<i64: 1, 128>}, {transform_indices = @transform_4, window_bounds = array<i64: 1, 8, 8, 128>}]} {
    %c0 = arith.constant 0 : index
    %c0_0 = arith.constant 0 : index
    %0 = vector.load %arg5[%c0, %c0_0] : memref<1x128xf32, #tpu.memory_space<vmem>>, vector<1x128xf32>
    %1 = vector.shape_cast %0 : vector<1x128xf32> to vector<1x128xf32>
    %2 = vector.broadcast %1 : vector<1x128xf32> to vector<8x128xf32>
    %c0_1 = arith.constant 0 : index
    %c0_2 = arith.constant 0 : index
    %c0_3 = arith.constant 0 : index
    %c0_4 = arith.constant 0 : index
    %3 = vector.load %arg4[%c0_1, %c0_2, %c0_3, %c0_4] : memref<3x3x4x128xbf16, #tpu.memory_space<vmem>>, vector<1x1x4x128xbf16>
    %4 = vector.shape_cast %3 : vector<1x1x4x128xbf16> to vector<4x128xbf16>
    %c0_5 = arith.constant 0 : index
    %c1 = arith.constant 1 : index
    %c0_6 = arith.constant 0 : index
    %c0_7 = arith.constant 0 : index
    %5 = vector.load %arg4[%c0_5, %c1, %c0_6, %c0_7] : memref<3x3x4x128xbf16, #tpu.memory_space<vmem>>, vector<1x1x4x128xbf16>
    %6 = vector.shape_cast %5 : vector<1x1x4x128xbf16> to vector<4x128xbf16>
    %c0_8 = arith.constant 0 : index
    %c2 = arith.constant 2 : index
    %c0_9 = arith.constant 0 : index
    %c0_10 = arith.constant 0 : index
    %7 = vector.load %arg4[%c0_8, %c2, %c0_9, %c0_10] : memref<3x3x4x128xbf16, #tpu.memory_space<vmem>>, vector<1x1x4x128xbf16>
    %8 = vector.shape_cast %7 : vector<1x1x4x128xbf16> to vector<4x128xbf16>
    %c1_11 = arith.constant 1 : index
    %c0_12 = arith.constant 0 : index
    %c0_13 = arith.constant 0 : index
    %c0_14 = arith.constant 0 : index
    %9 = vector.load %arg4[%c1_11, %c0_12, %c0_13, %c0_14] : memref<3x3x4x128xbf16, #tpu.memory_space<vmem>>, vector<1x1x4x128xbf16>
    %10 = vector.shape_cast %9 : vector<1x1x4x128xbf16> to vector<4x128xbf16>
    %c1_15 = arith.constant 1 : index
    %c1_16 = arith.constant 1 : index
    %c0_17 = arith.constant 0 : index
    %c0_18 = arith.constant 0 : index
    %11 = vector.load %arg4[%c1_15, %c1_16, %c0_17, %c0_18] : memref<3x3x4x128xbf16, #tpu.memory_space<vmem>>, vector<1x1x4x128xbf16>
    %12 = vector.shape_cast %11 : vector<1x1x4x128xbf16> to vector<4x128xbf16>
    %c1_19 = arith.constant 1 : index
    %c2_20 = arith.constant 2 : index
    %c0_21 = arith.constant 0 : index
    %c0_22 = arith.constant 0 : index
    %13 = vector.load %arg4[%c1_19, %c2_20, %c0_21, %c0_22] : memref<3x3x4x128xbf16, #tpu.memory_space<vmem>>, vector<1x1x4x128xbf16>
    %14 = vector.shape_cast %13 : vector<1x1x4x128xbf16> to vector<4x128xbf16>
    %c2_23 = arith.constant 2 : index
    %c0_24 = arith.constant 0 : index
    %c0_25 = arith.constant 0 : index
    %c0_26 = arith.constant 0 : index
    %15 = vector.load %arg4[%c2_23, %c0_24, %c0_25, %c0_26] : memref<3x3x4x128xbf16, #tpu.memory_space<vmem>>, vector<1x1x4x128xbf16>
    %16 = vector.shape_cast %15 : vector<1x1x4x128xbf16> to vector<4x128xbf16>
    %c2_27 = arith.constant 2 : index
    %c1_28 = arith.constant 1 : index
    %c0_29 = arith.constant 0 : index
    %c0_30 = arith.constant 0 : index
    %17 = vector.load %arg4[%c2_27, %c1_28, %c0_29, %c0_30] : memref<3x3x4x128xbf16, #tpu.memory_space<vmem>>, vector<1x1x4x128xbf16>
    %18 = vector.shape_cast %17 : vector<1x1x4x128xbf16> to vector<4x128xbf16>
    %c2_31 = arith.constant 2 : index
    %c2_32 = arith.constant 2 : index
    %c0_33 = arith.constant 0 : index
    %c0_34 = arith.constant 0 : index
    %19 = vector.load %arg4[%c2_31, %c2_32, %c0_33, %c0_34] : memref<3x3x4x128xbf16, #tpu.memory_space<vmem>>, vector<1x1x4x128xbf16>
    %20 = vector.shape_cast %19 : vector<1x1x4x128xbf16> to vector<4x128xbf16>
    %c0_35 = arith.constant 0 : index
    %c0_36 = arith.constant 0 : index
    %c0_37 = arith.constant 0 : index
    %c0_38 = arith.constant 0 : index
    %21 = vector.load %arg2[%c0_35, %c0_36, %c0_37, %c0_38] : memref<1x17x9x4xbf16, #tpu.memory_space<vmem>>, vector<1x1x9x4xbf16>
    %22 = vector.shape_cast %21 : vector<1x1x9x4xbf16> to vector<9x4xbf16>
    %c0_39 = arith.constant 0 : index
    %c0_40 = arith.constant 0 : index
    %c0_41 = arith.constant 0 : index
    %c0_42 = arith.constant 0 : index
    %23 = vector.load %arg3[%c0_39, %c0_40, %c0_41, %c0_42] : memref<1x17x9x4xbf16, #tpu.memory_space<vmem>>, vector<1x1x9x4xbf16>
    %24 = vector.shape_cast %23 : vector<1x1x9x4xbf16> to vector<9x4xbf16>
    %25 = vector.extract_strided_slice %22 {offsets = [0, 0], sizes = [8, 4], strides = [1, 1]} : vector<9x4xbf16> to vector<8x4xbf16>
    %cst = arith.constant dense<0.000000e+00> : vector<8x128xf32>
    %26 = tpu.matmul %25, %4, %cst {dimension_numbers = #tpu.dot_dimension_numbers<[1], [0], [0], [1], [0, 0, 1, 1], [], []>} : vector<8x4xbf16>, vector<4x128xbf16>, vector<8x128xf32> -> vector<8x128xf32>
    %27 = arith.addf %2, %26 : vector<8x128xf32>
    %28 = vector.extract_strided_slice %24 {offsets = [0, 0], sizes = [8, 4], strides = [1, 1]} : vector<9x4xbf16> to vector<8x4xbf16>
    %cst_43 = arith.constant dense<0.000000e+00> : vector<8x128xf32>
    %29 = tpu.matmul %28, %6, %cst_43 {dimension_numbers = #tpu.dot_dimension_numbers<[1], [0], [0], [1], [0, 0, 1, 1], [], []>} : vector<8x4xbf16>, vector<4x128xbf16>, vector<8x128xf32> -> vector<8x128xf32>
    %30 = arith.addf %27, %29 : vector<8x128xf32>
    %31 = vector.extract_strided_slice %22 {offsets = [1, 0], sizes = [8, 4], strides = [1, 1]} : vector<9x4xbf16> to vector<8x4xbf16>
    %cst_44 = arith.constant dense<0.000000e+00> : vector<8x128xf32>
    %32 = tpu.matmul %31, %8, %cst_44 {dimension_numbers = #tpu.dot_dimension_numbers<[1], [0], [0], [1], [0, 0, 1, 1], [], []>} : vector<8x4xbf16>, vector<4x128xbf16>, vector<8x128xf32> -> vector<8x128xf32>
    %33 = arith.addf %30, %32 : vector<8x128xf32>
    %c0_45 = arith.constant 0 : index
    %c1_46 = arith.constant 1 : index
    %c0_47 = arith.constant 0 : index
    %c0_48 = arith.constant 0 : index
    %34 = vector.load %arg2[%c0_45, %c1_46, %c0_47, %c0_48] : memref<1x17x9x4xbf16, #tpu.memory_space<vmem>>, vector<1x1x9x4xbf16>
    %35 = vector.shape_cast %34 : vector<1x1x9x4xbf16> to vector<9x4xbf16>
    %c0_49 = arith.constant 0 : index
    %c1_50 = arith.constant 1 : index
    %c0_51 = arith.constant 0 : index
    %c0_52 = arith.constant 0 : index
    %36 = vector.load %arg3[%c0_49, %c1_50, %c0_51, %c0_52] : memref<1x17x9x4xbf16, #tpu.memory_space<vmem>>, vector<1x1x9x4xbf16>
    %37 = vector.shape_cast %36 : vector<1x1x9x4xbf16> to vector<9x4xbf16>
    %38 = vector.extract_strided_slice %35 {offsets = [0, 0], sizes = [8, 4], strides = [1, 1]} : vector<9x4xbf16> to vector<8x4xbf16>
    %cst_53 = arith.constant dense<0.000000e+00> : vector<8x128xf32>
    %39 = tpu.matmul %38, %10, %cst_53 {dimension_numbers = #tpu.dot_dimension_numbers<[1], [0], [0], [1], [0, 0, 1, 1], [], []>} : vector<8x4xbf16>, vector<4x128xbf16>, vector<8x128xf32> -> vector<8x128xf32>
    %40 = arith.addf %33, %39 : vector<8x128xf32>
    %41 = vector.extract_strided_slice %37 {offsets = [0, 0], sizes = [8, 4], strides = [1, 1]} : vector<9x4xbf16> to vector<8x4xbf16>
    %cst_54 = arith.constant dense<0.000000e+00> : vector<8x128xf32>
    %42 = tpu.matmul %41, %12, %cst_54 {dimension_numbers = #tpu.dot_dimension_numbers<[1], [0], [0], [1], [0, 0, 1, 1], [], []>} : vector<8x4xbf16>, vector<4x128xbf16>, vector<8x128xf32> -> vector<8x128xf32>
    %43 = arith.addf %40, %42 : vector<8x128xf32>
    %44 = vector.extract_strided_slice %35 {offsets = [1, 0], sizes = [8, 4], strides = [1, 1]} : vector<9x4xbf16> to vector<8x4xbf16>
    %cst_55 = arith.constant dense<0.000000e+00> : vector<8x128xf32>
    %45 = tpu.matmul %44, %14, %cst_55 {dimension_numbers = #tpu.dot_dimension_numbers<[1], [0], [0], [1], [0, 0, 1, 1], [], []>} : vector<8x4xbf16>, vector<4x128xbf16>, vector<8x128xf32> -> vector<8x128xf32>
    %46 = arith.addf %43, %45 : vector<8x128xf32>
    %c0_56 = arith.constant 0 : index
    %c2_57 = arith.constant 2 : index
    %c0_58 = arith.constant 0 : index
    %c0_59 = arith.constant 0 : index
    %47 = vector.load %arg2[%c0_56, %c2_57, %c0_58, %c0_59] : memref<1x17x9x4xbf16, #tpu.memory_space<vmem>>, vector<1x1x9x4xbf16>
    %48 = vector.shape_cast %47 : vector<1x1x9x4xbf16> to vector<9x4xbf16>
    %c0_60 = arith.constant 0 : index
    %c2_61 = arith.constant 2 : index
    %c0_62 = arith.constant 0 : index
    %c0_63 = arith.constant 0 : index
    %49 = vector.load %arg3[%c0_60, %c2_61, %c0_62, %c0_63] : memref<1x17x9x4xbf16, #tpu.memory_space<vmem>>, vector<1x1x9x4xbf16>
    %50 = vector.shape_cast %49 : vector<1x1x9x4xbf16> to vector<9x4xbf16>
    %51 = vector.extract_strided_slice %48 {offsets = [0, 0], sizes = [8, 4], strides = [1, 1]} : vector<9x4xbf16> to vector<8x4xbf16>
    %cst_64 = arith.constant dense<0.000000e+00> : vector<8x128xf32>
    %52 = tpu.matmul %51, %16, %cst_64 {dimension_numbers = #tpu.dot_dimension_numbers<[1], [0], [0], [1], [0, 0, 1, 1], [], []>} : vector<8x4xbf16>, vector<4x128xbf16>, vector<8x128xf32> -> vector<8x128xf32>
    %53 = arith.addf %46, %52 : vector<8x128xf32>
    %54 = vector.extract_strided_slice %50 {offsets = [0, 0], sizes = [8, 4], strides = [1, 1]} : vector<9x4xbf16> to vector<8x4xbf16>
    %cst_65 = arith.constant dense<0.000000e+00> : vector<8x128xf32>
    %55 = tpu.matmul %54, %18, %cst_65 {dimension_numbers = #tpu.dot_dimension_numbers<[1], [0], [0], [1], [0, 0, 1, 1], [], []>} : vector<8x4xbf16>, vector<4x128xbf16>, vector<8x128xf32> -> vector<8x128xf32>
    %56 = arith.addf %53, %55 : vector<8x128xf32>
    %57 = vector.extract_strided_slice %48 {offsets = [1, 0], sizes = [8, 4], strides = [1, 1]} : vector<9x4xbf16> to vector<8x4xbf16>
    %cst_66 = arith.constant dense<0.000000e+00> : vector<8x128xf32>
    %58 = tpu.matmul %57, %20, %cst_66 {dimension_numbers = #tpu.dot_dimension_numbers<[1], [0], [0], [1], [0, 0, 1, 1], [], []>} : vector<8x4xbf16>, vector<4x128xbf16>, vector<8x128xf32> -> vector<8x128xf32>
    %59 = arith.addf %56, %58 : vector<8x128xf32>
    %cst_67 = arith.constant 0.000000e+00 : f32
    %60 = vector.broadcast %cst_67 : f32 to vector<8x128xf32>
    %61 = arith.maximumf %59, %60 : vector<8x128xf32>
    %c0_68 = arith.constant 0 : index
    %c0_69 = arith.constant 0 : index
    %c0_70 = arith.constant 0 : index
    %c0_71 = arith.constant 0 : index
    %62 = vector.load %arg6[%c0_68, %c0_69, %c0_70, %c0_71] : memref<1x8x8x128xf32, #tpu.memory_space<vmem>>, vector<1x1x8x128xf32>
    %63 = vector.shape_cast %62 : vector<1x1x8x128xf32> to vector<8x128xf32>
    %64 = vector.shape_cast %61 : vector<8x128xf32> to vector<1x1x8x128xf32>
    tpu.vector_store %arg6[%c0_68, %c0_69, %c0_70, %c0_71], %64 {strides = array<i32>} : memref<1x8x8x128xf32, #tpu.memory_space<vmem>>, vector<1x1x8x128xf32>,
    %c0_72 = arith.constant 0 : index
    %c2_73 = arith.constant 2 : index
    %c0_74 = arith.constant 0 : index
    %c0_75 = arith.constant 0 : index
    %65 = vector.load %arg2[%c0_72, %c2_73, %c0_74, %c0_75] : memref<1x17x9x4xbf16, #tpu.memory_space<vmem>>, vector<1x1x9x4xbf16>
    %66 = vector.shape_cast %65 : vector<1x1x9x4xbf16> to vector<9x4xbf16>
    %c0_76 = arith.constant 0 : index
    %c2_77 = arith.constant 2 : index
    %c0_78 = arith.constant 0 : index
    %c0_79 = arith.constant 0 : index
    %67 = vector.load %arg3[%c0_76, %c2_77, %c0_78, %c0_79] : memref<1x17x9x4xbf16, #tpu.memory_space<vmem>>, vector<1x1x9x4xbf16>
    %68 = vector.shape_cast %67 : vector<1x1x9x4xbf16> to vector<9x4xbf16>
    %69 = vector.extract_strided_slice %66 {offsets = [0, 0], sizes = [8, 4], strides = [1, 1]} : vector<9x4xbf16> to vector<8x4xbf16>
    %cst_80 = arith.constant dense<0.000000e+00> : vector<8x128xf32>
    %70 = tpu.matmul %69, %4, %cst_80 {dimension_numbers = #tpu.dot_dimension_numbers<[1], [0], [0], [1], [0, 0, 1, 1], [], []>} : vector<8x4xbf16>, vector<4x128xbf16>, vector<8x128xf32> -> vector<8x128xf32>
    %71 = arith.addf %2, %70 : vector<8x128xf32>
    %72 = vector.extract_strided_slice %68 {offsets = [0, 0], sizes = [8, 4], strides = [1, 1]} : vector<9x4xbf16> to vector<8x4xbf16>
    %cst_81 = arith.constant dense<0.000000e+00> : vector<8x128xf32>
    %73 = tpu.matmul %72, %6, %cst_81 {dimension_numbers = #tpu.dot_dimension_numbers<[1], [0], [0], [1], [0, 0, 1, 1], [], []>} : vector<8x4xbf16>, vector<4x128xbf16>, vector<8x128xf32> -> vector<8x128xf32>
    %74 = arith.addf %71, %73 : vector<8x128xf32>
    %75 = vector.extract_strided_slice %66 {offsets = [1, 0], sizes = [8, 4], strides = [1, 1]} : vector<9x4xbf16> to vector<8x4xbf16>
    %cst_82 = arith.constant dense<0.000000e+00> : vector<8x128xf32>
    %76 = tpu.matmul %75, %8, %cst_82 {dimension_numbers = #tpu.dot_dimension_numbers<[1], [0], [0], [1], [0, 0, 1, 1], [], []>} : vector<8x4xbf16>, vector<4x128xbf16>, vector<8x128xf32> -> vector<8x128xf32>
    %77 = arith.addf %74, %76 : vector<8x128xf32>
    %c0_83 = arith.constant 0 : index
    %c3 = arith.constant 3 : index
    %c0_84 = arith.constant 0 : index
    %c0_85 = arith.constant 0 : index
    %78 = vector.load %arg2[%c0_83, %c3, %c0_84, %c0_85] : memref<1x17x9x4xbf16, #tpu.memory_space<vmem>>, vector<1x1x9x4xbf16>
    %79 = vector.shape_cast %78 : vector<1x1x9x4xbf16> to vector<9x4xbf16>
    %c0_86 = arith.constant 0 : index
    %c3_87 = arith.constant 3 : index
    %c0_88 = arith.constant 0 : index
    %c0_89 = arith.constant 0 : index
    %80 = vector.load %arg3[%c0_86, %c3_87, %c0_88, %c0_89] : memref<1x17x9x4xbf16, #tpu.memory_space<vmem>>, vector<1x1x9x4xbf16>
    %81 = vector.shape_cast %80 : vector<1x1x9x4xbf16> to vector<9x4xbf16>
    %82 = vector.extract_strided_slice %79 {offsets = [0, 0], sizes = [8, 4], strides = [1, 1]} : vector<9x4xbf16> to vector<8x4xbf16>
    %cst_90 = arith.constant dense<0.000000e+00> : vector<8x128xf32>
    %83 = tpu.matmul %82, %10, %cst_90 {dimension_numbers = #tpu.dot_dimension_numbers<[1], [0], [0], [1], [0, 0, 1, 1], [], []>} : vector<8x4xbf16>, vector<4x128xbf16>, vector<8x128xf32> -> vector<8x128xf32>
    %84 = arith.addf %77, %83 : vector<8x128xf32>
    %85 = vector.extract_strided_slice %81 {offsets = [0, 0], sizes = [8, 4], strides = [1, 1]} : vector<9x4xbf16> to vector<8x4xbf16>
    %cst_91 = arith.constant dense<0.000000e+00> : vector<8x128xf32>
    %86 = tpu.matmul %85, %12, %cst_91 {dimension_numbers = #tpu.dot_dimension_numbers<[1], [0], [0], [1], [0, 0, 1, 1], [], []>} : vector<8x4xbf16>, vector<4x128xbf16>, vector<8x128xf32> -> vector<8x128xf32>
    %87 = arith.addf %84, %86 : vector<8x128xf32>
    %88 = vector.extract_strided_slice %79 {offsets = [1, 0], sizes = [8, 4], strides = [1, 1]} : vector<9x4xbf16> to vector<8x4xbf16>
    %cst_92 = arith.constant dense<0.000000e+00> : vector<8x128xf32>
    %89 = tpu.matmul %88, %14, %cst_92 {dimension_numbers = #tpu.dot_dimension_numbers<[1], [0], [0], [1], [0, 0, 1, 1], [], []>} : vector<8x4xbf16>, vector<4x128xbf16>, vector<8x128xf32> -> vector<8x128xf32>
    %90 = arith.addf %87, %89 : vector<8x128xf32>
    %c0_93 = arith.constant 0 : index
    %c4 = arith.constant 4 : index
    %c0_94 = arith.constant 0 : index
    %c0_95 = arith.constant 0 : index
    %91 = vector.load %arg2[%c0_93, %c4, %c0_94, %c0_95] : memref<1x17x9x4xbf16, #tpu.memory_space<vmem>>, vector<1x1x9x4xbf16>
    %92 = vector.shape_cast %91 : vector<1x1x9x4xbf16> to vector<9x4xbf16>
    %c0_96 = arith.constant 0 : index
    %c4_97 = arith.constant 4 : index
    %c0_98 = arith.constant 0 : index
    %c0_99 = arith.constant 0 : index
    %93 = vector.load %arg3[%c0_96, %c4_97, %c0_98, %c0_99] : memref<1x17x9x4xbf16, #tpu.memory_space<vmem>>, vector<1x1x9x4xbf16>
    %94 = vector.shape_cast %93 : vector<1x1x9x4xbf16> to vector<9x4xbf16>
    %95 = vector.extract_strided_slice %92 {offsets = [0, 0], sizes = [8, 4], strides = [1, 1]} : vector<9x4xbf16> to vector<8x4xbf16>
    %cst_100 = arith.constant dense<0.000000e+00> : vector<8x128xf32>
    %96 = tpu.matmul %95, %16, %cst_100 {dimension_numbers = #tpu.dot_dimension_numbers<[1], [0], [0], [1], [0, 0, 1, 1], [], []>} : vector<8x4xbf16>, vector<4x128xbf16>, vector<8x128xf32> -> vector<8x128xf32>
    %97 = arith.addf %90, %96 : vector<8x128xf32>
    %98 = vector.extract_strided_slice %94 {offsets = [0, 0], sizes = [8, 4], strides = [1, 1]} : vector<9x4xbf16> to vector<8x4xbf16>
    %cst_101 = arith.constant dense<0.000000e+00> : vector<8x128xf32>
    %99 = tpu.matmul %98, %18, %cst_101 {dimension_numbers = #tpu.dot_dimension_numbers<[1], [0], [0], [1], [0, 0, 1, 1], [], []>} : vector<8x4xbf16>, vector<4x128xbf16>, vector<8x128xf32> -> vector<8x128xf32>
    %100 = arith.addf %97, %99 : vector<8x128xf32>
    %101 = vector.extract_strided_slice %92 {offsets = [1, 0], sizes = [8, 4], strides = [1, 1]} : vector<9x4xbf16> to vector<8x4xbf16>
    %cst_102 = arith.constant dense<0.000000e+00> : vector<8x128xf32>
    %102 = tpu.matmul %101, %20, %cst_102 {dimension_numbers = #tpu.dot_dimension_numbers<[1], [0], [0], [1], [0, 0, 1, 1], [], []>} : vector<8x4xbf16>, vector<4x128xbf16>, vector<8x128xf32> -> vector<8x128xf32>
    %103 = arith.addf %100, %102 : vector<8x128xf32>
    %cst_103 = arith.constant 0.000000e+00 : f32
    %104 = vector.broadcast %cst_103 : f32 to vector<8x128xf32>
    %105 = arith.maximumf %103, %104 : vector<8x128xf32>
    %c0_104 = arith.constant 0 : index
    %c1_105 = arith.constant 1 : index
    %c0_106 = arith.constant 0 : index
    %c0_107 = arith.constant 0 : index
    %106 = vector.load %arg6[%c0_104, %c1_105, %c0_106, %c0_107] : memref<1x8x8x128xf32, #tpu.memory_space<vmem>>, vector<1x1x8x128xf32>
    %107 = vector.shape_cast %106 : vector<1x1x8x128xf32> to vector<8x128xf32>
    %108 = vector.shape_cast %105 : vector<8x128xf32> to vector<1x1x8x128xf32>
    tpu.vector_store %arg6[%c0_104, %c1_105, %c0_106, %c0_107], %108 {strides = array<i32>} : memref<1x8x8x128xf32, #tpu.memory_space<vmem>>, vector<1x1x8x128xf32>,
    %c0_108 = arith.constant 0 : index
    %c4_109 = arith.constant 4 : index
    %c0_110 = arith.constant 0 : index
    %c0_111 = arith.constant 0 : index
    %109 = vector.load %arg2[%c0_108, %c4_109, %c0_110, %c0_111] : memref<1x17x9x4xbf16, #tpu.memory_space<vmem>>, vector<1x1x9x4xbf16>
    %110 = vector.shape_cast %109 : vector<1x1x9x4xbf16> to vector<9x4xbf16>
    %c0_112 = arith.constant 0 : index
    %c4_113 = arith.constant 4 : index
    %c0_114 = arith.constant 0 : index
    %c0_115 = arith.constant 0 : index
    %111 = vector.load %arg3[%c0_112, %c4_113, %c0_114, %c0_115] : memref<1x17x9x4xbf16, #tpu.memory_space<vmem>>, vector<1x1x9x4xbf16>
    %112 = vector.shape_cast %111 : vector<1x1x9x4xbf16> to vector<9x4xbf16>
    %113 = vector.extract_strided_slice %110 {offsets = [0, 0], sizes = [8, 4], strides = [1, 1]} : vector<9x4xbf16> to vector<8x4xbf16>
    %cst_116 = arith.constant dense<0.000000e+00> : vector<8x128xf32>
    %114 = tpu.matmul %113, %4, %cst_116 {dimension_numbers = #tpu.dot_dimension_numbers<[1], [0], [0], [1], [0, 0, 1, 1], [], []>} : vector<8x4xbf16>, vector<4x128xbf16>, vector<8x128xf32> -> vector<8x128xf32>
    %115 = arith.addf %2, %114 : vector<8x128xf32>
    %116 = vector.extract_strided_slice %112 {offsets = [0, 0], sizes = [8, 4], strides = [1, 1]} : vector<9x4xbf16> to vector<8x4xbf16>
    %cst_117 = arith.constant dense<0.000000e+00> : vector<8x128xf32>
    %117 = tpu.matmul %116, %6, %cst_117 {dimension_numbers = #tpu.dot_dimension_numbers<[1], [0], [0], [1], [0, 0, 1, 1], [], []>} : vector<8x4xbf16>, vector<4x128xbf16>, vector<8x128xf32> -> vector<8x128xf32>
    %118 = arith.addf %115, %117 : vector<8x128xf32>
    %119 = vector.extract_strided_slice %110 {offsets = [1, 0], sizes = [8, 4], strides = [1, 1]} : vector<9x4xbf16> to vector<8x4xbf16>
    %cst_118 = arith.constant dense<0.000000e+00> : vector<8x128xf32>
    %120 = tpu.matmul %119, %8, %cst_118 {dimension_numbers = #tpu.dot_dimension_numbers<[1], [0], [0], [1], [0, 0, 1, 1], [], []>} : vector<8x4xbf16>, vector<4x128xbf16>, vector<8x128xf32> -> vector<8x128xf32>
    %121 = arith.addf %118, %120 : vector<8x128xf32>
    %c0_119 = arith.constant 0 : index
    %c5 = arith.constant 5 : index
    %c0_120 = arith.constant 0 : index
    %c0_121 = arith.constant 0 : index
    %122 = vector.load %arg2[%c0_119, %c5, %c0_120, %c0_121] : memref<1x17x9x4xbf16, #tpu.memory_space<vmem>>, vector<1x1x9x4xbf16>
    %123 = vector.shape_cast %122 : vector<1x1x9x4xbf16> to vector<9x4xbf16>
    %c0_122 = arith.constant 0 : index
    %c5_123 = arith.constant 5 : index
    %c0_124 = arith.constant 0 : index
    %c0_125 = arith.constant 0 : index
    %124 = vector.load %arg3[%c0_122, %c5_123, %c0_124, %c0_125] : memref<1x17x9x4xbf16, #tpu.memory_space<vmem>>, vector<1x1x9x4xbf16>
    %125 = vector.shape_cast %124 : vector<1x1x9x4xbf16> to vector<9x4xbf16>
    %126 = vector.extract_strided_slice %123 {offsets = [0, 0], sizes = [8, 4], strides = [1, 1]} : vector<9x4xbf16> to vector<8x4xbf16>
    %cst_126 = arith.constant dense<0.000000e+00> : vector<8x128xf32>
    %127 = tpu.matmul %126, %10, %cst_126 {dimension_numbers = #tpu.dot_dimension_numbers<[1], [0], [0], [1], [0, 0, 1, 1], [], []>} : vector<8x4xbf16>, vector<4x128xbf16>, vector<8x128xf32> -> vector<8x128xf32>
    %128 = arith.addf %121, %127 : vector<8x128xf32>
    %129 = vector.extract_strided_slice %125 {offsets = [0, 0], sizes = [8, 4], strides = [1, 1]} : vector<9x4xbf16> to vector<8x4xbf16>
    %cst_127 = arith.constant dense<0.000000e+00> : vector<8x128xf32>
    %130 = tpu.matmul %129, %12, %cst_127 {dimension_numbers = #tpu.dot_dimension_numbers<[1], [0], [0], [1], [0, 0, 1, 1], [], []>} : vector<8x4xbf16>, vector<4x128xbf16>, vector<8x128xf32> -> vector<8x128xf32>
    %131 = arith.addf %128, %130 : vector<8x128xf32>
    %132 = vector.extract_strided_slice %123 {offsets = [1, 0], sizes = [8, 4], strides = [1, 1]} : vector<9x4xbf16> to vector<8x4xbf16>
    %cst_128 = arith.constant dense<0.000000e+00> : vector<8x128xf32>
    %133 = tpu.matmul %132, %14, %cst_128 {dimension_numbers = #tpu.dot_dimension_numbers<[1], [0], [0], [1], [0, 0, 1, 1], [], []>} : vector<8x4xbf16>, vector<4x128xbf16>, vector<8x128xf32> -> vector<8x128xf32>
    %134 = arith.addf %131, %133 : vector<8x128xf32>
    %c0_129 = arith.constant 0 : index
    %c6 = arith.constant 6 : index
    %c0_130 = arith.constant 0 : index
    %c0_131 = arith.constant 0 : index
    %135 = vector.load %arg2[%c0_129, %c6, %c0_130, %c0_131] : memref<1x17x9x4xbf16, #tpu.memory_space<vmem>>, vector<1x1x9x4xbf16>
    %136 = vector.shape_cast %135 : vector<1x1x9x4xbf16> to vector<9x4xbf16>
    %c0_132 = arith.constant 0 : index
    %c6_133 = arith.constant 6 : index
    %c0_134 = arith.constant 0 : index
    %c0_135 = arith.constant 0 : index
    %137 = vector.load %arg3[%c0_132, %c6_133, %c0_134, %c0_135] : memref<1x17x9x4xbf16, #tpu.memory_space<vmem>>, vector<1x1x9x4xbf16>
    %138 = vector.shape_cast %137 : vector<1x1x9x4xbf16> to vector<9x4xbf16>
    %139 = vector.extract_strided_slice %136 {offsets = [0, 0], sizes = [8, 4], strides = [1, 1]} : vector<9x4xbf16> to vector<8x4xbf16>
    %cst_136 = arith.constant dense<0.000000e+00> : vector<8x128xf32>
    %140 = tpu.matmul %139, %16, %cst_136 {dimension_numbers = #tpu.dot_dimension_numbers<[1], [0], [0], [1], [0, 0, 1, 1], [], []>} : vector<8x4xbf16>, vector<4x128xbf16>, vector<8x128xf32> -> vector<8x128xf32>
    %141 = arith.addf %134, %140 : vector<8x128xf32>
    %142 = vector.extract_strided_slice %138 {offsets = [0, 0], sizes = [8, 4], strides = [1, 1]} : vector<9x4xbf16> to vector<8x4xbf16>
    %cst_137 = arith.constant dense<0.000000e+00> : vector<8x128xf32>
    %143 = tpu.matmul %142, %18, %cst_137 {dimension_numbers = #tpu.dot_dimension_numbers<[1], [0], [0], [1], [0, 0, 1, 1], [], []>} : vector<8x4xbf16>, vector<4x128xbf16>, vector<8x128xf32> -> vector<8x128xf32>
    %144 = arith.addf %141, %143 : vector<8x128xf32>
    %145 = vector.extract_strided_slice %136 {offsets = [1, 0], sizes = [8, 4], strides = [1, 1]} : vector<9x4xbf16> to vector<8x4xbf16>
    %cst_138 = arith.constant dense<0.000000e+00> : vector<8x128xf32>
    %146 = tpu.matmul %145, %20, %cst_138 {dimension_numbers = #tpu.dot_dimension_numbers<[1], [0], [0], [1], [0, 0, 1, 1], [], []>} : vector<8x4xbf16>, vector<4x128xbf16>, vector<8x128xf32> -> vector<8x128xf32>
    %147 = arith.addf %144, %146 : vector<8x128xf32>
    %cst_139 = arith.constant 0.000000e+00 : f32
    %148 = vector.broadcast %cst_139 : f32 to vector<8x128xf32>
    %149 = arith.maximumf %147, %148 : vector<8x128xf32>
    %c0_140 = arith.constant 0 : index
    %c2_141 = arith.constant 2 : index
    %c0_142 = arith.constant 0 : index
    %c0_143 = arith.constant 0 : index
    %150 = vector.load %arg6[%c0_140, %c2_141, %c0_142, %c0_143] : memref<1x8x8x128xf32, #tpu.memory_space<vmem>>, vector<1x1x8x128xf32>
    %151 = vector.shape_cast %150 : vector<1x1x8x128xf32> to vector<8x128xf32>
    %152 = vector.shape_cast %149 : vector<8x128xf32> to vector<1x1x8x128xf32>
    tpu.vector_store %arg6[%c0_140, %c2_141, %c0_142, %c0_143], %152 {strides = array<i32>} : memref<1x8x8x128xf32, #tpu.memory_space<vmem>>, vector<1x1x8x128xf32>,
    %c0_144 = arith.constant 0 : index
    %c6_145 = arith.constant 6 : index
    %c0_146 = arith.constant 0 : index
    %c0_147 = arith.constant 0 : index
    %153 = vector.load %arg2[%c0_144, %c6_145, %c0_146, %c0_147] : memref<1x17x9x4xbf16, #tpu.memory_space<vmem>>, vector<1x1x9x4xbf16>
    %154 = vector.shape_cast %153 : vector<1x1x9x4xbf16> to vector<9x4xbf16>
    %c0_148 = arith.constant 0 : index
    %c6_149 = arith.constant 6 : index
    %c0_150 = arith.constant 0 : index
    %c0_151 = arith.constant 0 : index
    %155 = vector.load %arg3[%c0_148, %c6_149, %c0_150, %c0_151] : memref<1x17x9x4xbf16, #tpu.memory_space<vmem>>, vector<1x1x9x4xbf16>
    %156 = vector.shape_cast %155 : vector<1x1x9x4xbf16> to vector<9x4xbf16>
    %157 = vector.extract_strided_slice %154 {offsets = [0, 0], sizes = [8, 4], strides = [1, 1]} : vector<9x4xbf16> to vector<8x4xbf16>
    %cst_152 = arith.constant dense<0.000000e+00> : vector<8x128xf32>
    %158 = tpu.matmul %157, %4, %cst_152 {dimension_numbers = #tpu.dot_dimension_numbers<[1], [0], [0], [1], [0, 0, 1, 1], [], []>} : vector<8x4xbf16>, vector<4x128xbf16>, vector<8x128xf32> -> vector<8x128xf32>
    %159 = arith.addf %2, %158 : vector<8x128xf32>
    %160 = vector.extract_strided_slice %156 {offsets = [0, 0], sizes = [8, 4], strides = [1, 1]} : vector<9x4xbf16> to vector<8x4xbf16>
    %cst_153 = arith.constant dense<0.000000e+00> : vector<8x128xf32>
    %161 = tpu.matmul %160, %6, %cst_153 {dimension_numbers = #tpu.dot_dimension_numbers<[1], [0], [0], [1], [0, 0, 1, 1], [], []>} : vector<8x4xbf16>, vector<4x128xbf16>, vector<8x128xf32> -> vector<8x128xf32>
    %162 = arith.addf %159, %161 : vector<8x128xf32>
    %163 = vector.extract_strided_slice %154 {offsets = [1, 0], sizes = [8, 4], strides = [1, 1]} : vector<9x4xbf16> to vector<8x4xbf16>
    %cst_154 = arith.constant dense<0.000000e+00> : vector<8x128xf32>
    %164 = tpu.matmul %163, %8, %cst_154 {dimension_numbers = #tpu.dot_dimension_numbers<[1], [0], [0], [1], [0, 0, 1, 1], [], []>} : vector<8x4xbf16>, vector<4x128xbf16>, vector<8x128xf32> -> vector<8x128xf32>
    %165 = arith.addf %162, %164 : vector<8x128xf32>
    %c0_155 = arith.constant 0 : index
    %c7 = arith.constant 7 : index
    %c0_156 = arith.constant 0 : index
    %c0_157 = arith.constant 0 : index
    %166 = vector.load %arg2[%c0_155, %c7, %c0_156, %c0_157] : memref<1x17x9x4xbf16, #tpu.memory_space<vmem>>, vector<1x1x9x4xbf16>
    %167 = vector.shape_cast %166 : vector<1x1x9x4xbf16> to vector<9x4xbf16>
    %c0_158 = arith.constant 0 : index
    %c7_159 = arith.constant 7 : index
    %c0_160 = arith.constant 0 : index
    %c0_161 = arith.constant 0 : index
    %168 = vector.load %arg3[%c0_158, %c7_159, %c0_160, %c0_161] : memref<1x17x9x4xbf16, #tpu.memory_space<vmem>>, vector<1x1x9x4xbf16>
    %169 = vector.shape_cast %168 : vector<1x1x9x4xbf16> to vector<9x4xbf16>
    %170 = vector.extract_strided_slice %167 {offsets = [0, 0], sizes = [8, 4], strides = [1, 1]} : vector<9x4xbf16> to vector<8x4xbf16>
    %cst_162 = arith.constant dense<0.000000e+00> : vector<8x128xf32>
    %171 = tpu.matmul %170, %10, %cst_162 {dimension_numbers = #tpu.dot_dimension_numbers<[1], [0], [0], [1], [0, 0, 1, 1], [], []>} : vector<8x4xbf16>, vector<4x128xbf16>, vector<8x128xf32> -> vector<8x128xf32>
    %172 = arith.addf %165, %171 : vector<8x128xf32>
    %173 = vector.extract_strided_slice %169 {offsets = [0, 0], sizes = [8, 4], strides = [1, 1]} : vector<9x4xbf16> to vector<8x4xbf16>
    %cst_163 = arith.constant dense<0.000000e+00> : vector<8x128xf32>
    %174 = tpu.matmul %173, %12, %cst_163 {dimension_numbers = #tpu.dot_dimension_numbers<[1], [0], [0], [1], [0, 0, 1, 1], [], []>} : vector<8x4xbf16>, vector<4x128xbf16>, vector<8x128xf32> -> vector<8x128xf32>
    %175 = arith.addf %172, %174 : vector<8x128xf32>
    %176 = vector.extract_strided_slice %167 {offsets = [1, 0], sizes = [8, 4], strides = [1, 1]} : vector<9x4xbf16> to vector<8x4xbf16>
    %cst_164 = arith.constant dense<0.000000e+00> : vector<8x128xf32>
    %177 = tpu.matmul %176, %14, %cst_164 {dimension_numbers = #tpu.dot_dimension_numbers<[1], [0], [0], [1], [0, 0, 1, 1], [], []>} : vector<8x4xbf16>, vector<4x128xbf16>, vector<8x128xf32> -> vector<8x128xf32>
    %178 = arith.addf %175, %177 : vector<8x128xf32>
    %c0_165 = arith.constant 0 : index
    %c8 = arith.constant 8 : index
    %c0_166 = arith.constant 0 : index
    %c0_167 = arith.constant 0 : index
    %179 = vector.load %arg2[%c0_165, %c8, %c0_166, %c0_167] : memref<1x17x9x4xbf16, #tpu.memory_space<vmem>>, vector<1x1x9x4xbf16>
    %180 = vector.shape_cast %179 : vector<1x1x9x4xbf16> to vector<9x4xbf16>
    %c0_168 = arith.constant 0 : index
    %c8_169 = arith.constant 8 : index
    %c0_170 = arith.constant 0 : index
    %c0_171 = arith.constant 0 : index
    %181 = vector.load %arg3[%c0_168, %c8_169, %c0_170, %c0_171] : memref<1x17x9x4xbf16, #tpu.memory_space<vmem>>, vector<1x1x9x4xbf16>
    %182 = vector.shape_cast %181 : vector<1x1x9x4xbf16> to vector<9x4xbf16>
    %183 = vector.extract_strided_slice %180 {offsets = [0, 0], sizes = [8, 4], strides = [1, 1]} : vector<9x4xbf16> to vector<8x4xbf16>
    %cst_172 = arith.constant dense<0.000000e+00> : vector<8x128xf32>
    %184 = tpu.matmul %183, %16, %cst_172 {dimension_numbers = #tpu.dot_dimension_numbers<[1], [0], [0], [1], [0, 0, 1, 1], [], []>} : vector<8x4xbf16>, vector<4x128xbf16>, vector<8x128xf32> -> vector<8x128xf32>
    %185 = arith.addf %178, %184 : vector<8x128xf32>
    %186 = vector.extract_strided_slice %182 {offsets = [0, 0], sizes = [8, 4], strides = [1, 1]} : vector<9x4xbf16> to vector<8x4xbf16>
    %cst_173 = arith.constant dense<0.000000e+00> : vector<8x128xf32>
    %187 = tpu.matmul %186, %18, %cst_173 {dimension_numbers = #tpu.dot_dimension_numbers<[1], [0], [0], [1], [0, 0, 1, 1], [], []>} : vector<8x4xbf16>, vector<4x128xbf16>, vector<8x128xf32> -> vector<8x128xf32>
    %188 = arith.addf %185, %187 : vector<8x128xf32>
    %189 = vector.extract_strided_slice %180 {offsets = [1, 0], sizes = [8, 4], strides = [1, 1]} : vector<9x4xbf16> to vector<8x4xbf16>
    %cst_174 = arith.constant dense<0.000000e+00> : vector<8x128xf32>
    %190 = tpu.matmul %189, %20, %cst_174 {dimension_numbers = #tpu.dot_dimension_numbers<[1], [0], [0], [1], [0, 0, 1, 1], [], []>} : vector<8x4xbf16>, vector<4x128xbf16>, vector<8x128xf32> -> vector<8x128xf32>
    %191 = arith.addf %188, %190 : vector<8x128xf32>
    %cst_175 = arith.constant 0.000000e+00 : f32
    %192 = vector.broadcast %cst_175 : f32 to vector<8x128xf32>
    %193 = arith.maximumf %191, %192 : vector<8x128xf32>
    %c0_176 = arith.constant 0 : index
    %c3_177 = arith.constant 3 : index
    %c0_178 = arith.constant 0 : index
    %c0_179 = arith.constant 0 : index
    %194 = vector.load %arg6[%c0_176, %c3_177, %c0_178, %c0_179] : memref<1x8x8x128xf32, #tpu.memory_space<vmem>>, vector<1x1x8x128xf32>
    %195 = vector.shape_cast %194 : vector<1x1x8x128xf32> to vector<8x128xf32>
    %196 = vector.shape_cast %193 : vector<8x128xf32> to vector<1x1x8x128xf32>
    tpu.vector_store %arg6[%c0_176, %c3_177, %c0_178, %c0_179], %196 {strides = array<i32>} : memref<1x8x8x128xf32, #tpu.memory_space<vmem>>, vector<1x1x8x128xf32>,
    %c0_180 = arith.constant 0 : index
    %c8_181 = arith.constant 8 : index
    %c0_182 = arith.constant 0 : index
    %c0_183 = arith.constant 0 : index
    %197 = vector.load %arg2[%c0_180, %c8_181, %c0_182, %c0_183] : memref<1x17x9x4xbf16, #tpu.memory_space<vmem>>, vector<1x1x9x4xbf16>
    %198 = vector.shape_cast %197 : vector<1x1x9x4xbf16> to vector<9x4xbf16>
    %c0_184 = arith.constant 0 : index
    %c8_185 = arith.constant 8 : index
    %c0_186 = arith.constant 0 : index
    %c0_187 = arith.constant 0 : index
    %199 = vector.load %arg3[%c0_184, %c8_185, %c0_186, %c0_187] : memref<1x17x9x4xbf16, #tpu.memory_space<vmem>>, vector<1x1x9x4xbf16>
    %200 = vector.shape_cast %199 : vector<1x1x9x4xbf16> to vector<9x4xbf16>
    %201 = vector.extract_strided_slice %198 {offsets = [0, 0], sizes = [8, 4], strides = [1, 1]} : vector<9x4xbf16> to vector<8x4xbf16>
    %cst_188 = arith.constant dense<0.000000e+00> : vector<8x128xf32>
    %202 = tpu.matmul %201, %4, %cst_188 {dimension_numbers = #tpu.dot_dimension_numbers<[1], [0], [0], [1], [0, 0, 1, 1], [], []>} : vector<8x4xbf16>, vector<4x128xbf16>, vector<8x128xf32> -> vector<8x128xf32>
    %203 = arith.addf %2, %202 : vector<8x128xf32>
    %204 = vector.extract_strided_slice %200 {offsets = [0, 0], sizes = [8, 4], strides = [1, 1]} : vector<9x4xbf16> to vector<8x4xbf16>
    %cst_189 = arith.constant dense<0.000000e+00> : vector<8x128xf32>
    %205 = tpu.matmul %204, %6, %cst_189 {dimension_numbers = #tpu.dot_dimension_numbers<[1], [0], [0], [1], [0, 0, 1, 1], [], []>} : vector<8x4xbf16>, vector<4x128xbf16>, vector<8x128xf32> -> vector<8x128xf32>
    %206 = arith.addf %203, %205 : vector<8x128xf32>
    %207 = vector.extract_strided_slice %198 {offsets = [1, 0], sizes = [8, 4], strides = [1, 1]} : vector<9x4xbf16> to vector<8x4xbf16>
    %cst_190 = arith.constant dense<0.000000e+00> : vector<8x128xf32>
    %208 = tpu.matmul %207, %8, %cst_190 {dimension_numbers = #tpu.dot_dimension_numbers<[1], [0], [0], [1], [0, 0, 1, 1], [], []>} : vector<8x4xbf16>, vector<4x128xbf16>, vector<8x128xf32> -> vector<8x128xf32>
    %209 = arith.addf %206, %208 : vector<8x128xf32>
    %c0_191 = arith.constant 0 : index
    %c9 = arith.constant 9 : index
    %c0_192 = arith.constant 0 : index
    %c0_193 = arith.constant 0 : index
    %210 = vector.load %arg2[%c0_191, %c9, %c0_192, %c0_193] : memref<1x17x9x4xbf16, #tpu.memory_space<vmem>>, vector<1x1x9x4xbf16>
    %211 = vector.shape_cast %210 : vector<1x1x9x4xbf16> to vector<9x4xbf16>
    %c0_194 = arith.constant 0 : index
    %c9_195 = arith.constant 9 : index
    %c0_196 = arith.constant 0 : index
    %c0_197 = arith.constant 0 : index
    %212 = vector.load %arg3[%c0_194, %c9_195, %c0_196, %c0_197] : memref<1x17x9x4xbf16, #tpu.memory_space<vmem>>, vector<1x1x9x4xbf16>
    %213 = vector.shape_cast %212 : vector<1x1x9x4xbf16> to vector<9x4xbf16>
    %214 = vector.extract_strided_slice %211 {offsets = [0, 0], sizes = [8, 4], strides = [1, 1]} : vector<9x4xbf16> to vector<8x4xbf16>
    %cst_198 = arith.constant dense<0.000000e+00> : vector<8x128xf32>
    %215 = tpu.matmul %214, %10, %cst_198 {dimension_numbers = #tpu.dot_dimension_numbers<[1], [0], [0], [1], [0, 0, 1, 1], [], []>} : vector<8x4xbf16>, vector<4x128xbf16>, vector<8x128xf32> -> vector<8x128xf32>
    %216 = arith.addf %209, %215 : vector<8x128xf32>
    %217 = vector.extract_strided_slice %213 {offsets = [0, 0], sizes = [8, 4], strides = [1, 1]} : vector<9x4xbf16> to vector<8x4xbf16>
    %cst_199 = arith.constant dense<0.000000e+00> : vector<8x128xf32>
    %218 = tpu.matmul %217, %12, %cst_199 {dimension_numbers = #tpu.dot_dimension_numbers<[1], [0], [0], [1], [0, 0, 1, 1], [], []>} : vector<8x4xbf16>, vector<4x128xbf16>, vector<8x128xf32> -> vector<8x128xf32>
    %219 = arith.addf %216, %218 : vector<8x128xf32>
    %220 = vector.extract_strided_slice %211 {offsets = [1, 0], sizes = [8, 4], strides = [1, 1]} : vector<9x4xbf16> to vector<8x4xbf16>
    %cst_200 = arith.constant dense<0.000000e+00> : vector<8x128xf32>
    %221 = tpu.matmul %220, %14, %cst_200 {dimension_numbers = #tpu.dot_dimension_numbers<[1], [0], [0], [1], [0, 0, 1, 1], [], []>} : vector<8x4xbf16>, vector<4x128xbf16>, vector<8x128xf32> -> vector<8x128xf32>
    %222 = arith.addf %219, %221 : vector<8x128xf32>
    %c0_201 = arith.constant 0 : index
    %c10 = arith.constant 10 : index
    %c0_202 = arith.constant 0 : index
    %c0_203 = arith.constant 0 : index
    %223 = vector.load %arg2[%c0_201, %c10, %c0_202, %c0_203] : memref<1x17x9x4xbf16, #tpu.memory_space<vmem>>, vector<1x1x9x4xbf16>
    %224 = vector.shape_cast %223 : vector<1x1x9x4xbf16> to vector<9x4xbf16>
    %c0_204 = arith.constant 0 : index
    %c10_205 = arith.constant 10 : index
    %c0_206 = arith.constant 0 : index
    %c0_207 = arith.constant 0 : index
    %225 = vector.load %arg3[%c0_204, %c10_205, %c0_206, %c0_207] : memref<1x17x9x4xbf16, #tpu.memory_space<vmem>>, vector<1x1x9x4xbf16>
    %226 = vector.shape_cast %225 : vector<1x1x9x4xbf16> to vector<9x4xbf16>
    %227 = vector.extract_strided_slice %224 {offsets = [0, 0], sizes = [8, 4], strides = [1, 1]} : vector<9x4xbf16> to vector<8x4xbf16>
    %cst_208 = arith.constant dense<0.000000e+00> : vector<8x128xf32>
    %228 = tpu.matmul %227, %16, %cst_208 {dimension_numbers = #tpu.dot_dimension_numbers<[1], [0], [0], [1], [0, 0, 1, 1], [], []>} : vector<8x4xbf16>, vector<4x128xbf16>, vector<8x128xf32> -> vector<8x128xf32>
    %229 = arith.addf %222, %228 : vector<8x128xf32>
    %230 = vector.extract_strided_slice %226 {offsets = [0, 0], sizes = [8, 4], strides = [1, 1]} : vector<9x4xbf16> to vector<8x4xbf16>
    %cst_209 = arith.constant dense<0.000000e+00> : vector<8x128xf32>
    %231 = tpu.matmul %230, %18, %cst_209 {dimension_numbers = #tpu.dot_dimension_numbers<[1], [0], [0], [1], [0, 0, 1, 1], [], []>} : vector<8x4xbf16>, vector<4x128xbf16>, vector<8x128xf32> -> vector<8x128xf32>
    %232 = arith.addf %229, %231 : vector<8x128xf32>
    %233 = vector.extract_strided_slice %224 {offsets = [1, 0], sizes = [8, 4], strides = [1, 1]} : vector<9x4xbf16> to vector<8x4xbf16>
    %cst_210 = arith.constant dense<0.000000e+00> : vector<8x128xf32>
    %234 = tpu.matmul %233, %20, %cst_210 {dimension_numbers = #tpu.dot_dimension_numbers<[1], [0], [0], [1], [0, 0, 1, 1], [], []>} : vector<8x4xbf16>, vector<4x128xbf16>, vector<8x128xf32> -> vector<8x128xf32>
    %235 = arith.addf %232, %234 : vector<8x128xf32>
    %cst_211 = arith.constant 0.000000e+00 : f32
    %236 = vector.broadcast %cst_211 : f32 to vector<8x128xf32>
    %237 = arith.maximumf %235, %236 : vector<8x128xf32>
    %c0_212 = arith.constant 0 : index
    %c4_213 = arith.constant 4 : index
    %c0_214 = arith.constant 0 : index
    %c0_215 = arith.constant 0 : index
    %238 = vector.load %arg6[%c0_212, %c4_213, %c0_214, %c0_215] : memref<1x8x8x128xf32, #tpu.memory_space<vmem>>, vector<1x1x8x128xf32>
    %239 = vector.shape_cast %238 : vector<1x1x8x128xf32> to vector<8x128xf32>
    %240 = vector.shape_cast %237 : vector<8x128xf32> to vector<1x1x8x128xf32>
    tpu.vector_store %arg6[%c0_212, %c4_213, %c0_214, %c0_215], %240 {strides = array<i32>} : memref<1x8x8x128xf32, #tpu.memory_space<vmem>>, vector<1x1x8x128xf32>,
    %c0_216 = arith.constant 0 : index
    %c10_217 = arith.constant 10 : index
    %c0_218 = arith.constant 0 : index
    %c0_219 = arith.constant 0 : index
    %241 = vector.load %arg2[%c0_216, %c10_217, %c0_218, %c0_219] : memref<1x17x9x4xbf16, #tpu.memory_space<vmem>>, vector<1x1x9x4xbf16>
    %242 = vector.shape_cast %241 : vector<1x1x9x4xbf16> to vector<9x4xbf16>
    %c0_220 = arith.constant 0 : index
    %c10_221 = arith.constant 10 : index
    %c0_222 = arith.constant 0 : index
    %c0_223 = arith.constant 0 : index
    %243 = vector.load %arg3[%c0_220, %c10_221, %c0_222, %c0_223] : memref<1x17x9x4xbf16, #tpu.memory_space<vmem>>, vector<1x1x9x4xbf16>
    %244 = vector.shape_cast %243 : vector<1x1x9x4xbf16> to vector<9x4xbf16>
    %245 = vector.extract_strided_slice %242 {offsets = [0, 0], sizes = [8, 4], strides = [1, 1]} : vector<9x4xbf16> to vector<8x4xbf16>
    %cst_224 = arith.constant dense<0.000000e+00> : vector<8x128xf32>
    %246 = tpu.matmul %245, %4, %cst_224 {dimension_numbers = #tpu.dot_dimension_numbers<[1], [0], [0], [1], [0, 0, 1, 1], [], []>} : vector<8x4xbf16>, vector<4x128xbf16>, vector<8x128xf32> -> vector<8x128xf32>
    %247 = arith.addf %2, %246 : vector<8x128xf32>
    %248 = vector.extract_strided_slice %244 {offsets = [0, 0], sizes = [8, 4], strides = [1, 1]} : vector<9x4xbf16> to vector<8x4xbf16>
    %cst_225 = arith.constant dense<0.000000e+00> : vector<8x128xf32>
    %249 = tpu.matmul %248, %6, %cst_225 {dimension_numbers = #tpu.dot_dimension_numbers<[1], [0], [0], [1], [0, 0, 1, 1], [], []>} : vector<8x4xbf16>, vector<4x128xbf16>, vector<8x128xf32> -> vector<8x128xf32>
    %250 = arith.addf %247, %249 : vector<8x128xf32>
    %251 = vector.extract_strided_slice %242 {offsets = [1, 0], sizes = [8, 4], strides = [1, 1]} : vector<9x4xbf16> to vector<8x4xbf16>
    %cst_226 = arith.constant dense<0.000000e+00> : vector<8x128xf32>
    %252 = tpu.matmul %251, %8, %cst_226 {dimension_numbers = #tpu.dot_dimension_numbers<[1], [0], [0], [1], [0, 0, 1, 1], [], []>} : vector<8x4xbf16>, vector<4x128xbf16>, vector<8x128xf32> -> vector<8x128xf32>
    %253 = arith.addf %250, %252 : vector<8x128xf32>
    %c0_227 = arith.constant 0 : index
    %c11 = arith.constant 11 : index
    %c0_228 = arith.constant 0 : index
    %c0_229 = arith.constant 0 : index
    %254 = vector.load %arg2[%c0_227, %c11, %c0_228, %c0_229] : memref<1x17x9x4xbf16, #tpu.memory_space<vmem>>, vector<1x1x9x4xbf16>
    %255 = vector.shape_cast %254 : vector<1x1x9x4xbf16> to vector<9x4xbf16>
    %c0_230 = arith.constant 0 : index
    %c11_231 = arith.constant 11 : index
    %c0_232 = arith.constant 0 : index
    %c0_233 = arith.constant 0 : index
    %256 = vector.load %arg3[%c0_230, %c11_231, %c0_232, %c0_233] : memref<1x17x9x4xbf16, #tpu.memory_space<vmem>>, vector<1x1x9x4xbf16>
    %257 = vector.shape_cast %256 : vector<1x1x9x4xbf16> to vector<9x4xbf16>
    %258 = vector.extract_strided_slice %255 {offsets = [0, 0], sizes = [8, 4], strides = [1, 1]} : vector<9x4xbf16> to vector<8x4xbf16>
    %cst_234 = arith.constant dense<0.000000e+00> : vector<8x128xf32>
    %259 = tpu.matmul %258, %10, %cst_234 {dimension_numbers = #tpu.dot_dimension_numbers<[1], [0], [0], [1], [0, 0, 1, 1], [], []>} : vector<8x4xbf16>, vector<4x128xbf16>, vector<8x128xf32> -> vector<8x128xf32>
    %260 = arith.addf %253, %259 : vector<8x128xf32>
    %261 = vector.extract_strided_slice %257 {offsets = [0, 0], sizes = [8, 4], strides = [1, 1]} : vector<9x4xbf16> to vector<8x4xbf16>
    %cst_235 = arith.constant dense<0.000000e+00> : vector<8x128xf32>
    %262 = tpu.matmul %261, %12, %cst_235 {dimension_numbers = #tpu.dot_dimension_numbers<[1], [0], [0], [1], [0, 0, 1, 1], [], []>} : vector<8x4xbf16>, vector<4x128xbf16>, vector<8x128xf32> -> vector<8x128xf32>
    %263 = arith.addf %260, %262 : vector<8x128xf32>
    %264 = vector.extract_strided_slice %255 {offsets = [1, 0], sizes = [8, 4], strides = [1, 1]} : vector<9x4xbf16> to vector<8x4xbf16>
    %cst_236 = arith.constant dense<0.000000e+00> : vector<8x128xf32>
    %265 = tpu.matmul %264, %14, %cst_236 {dimension_numbers = #tpu.dot_dimension_numbers<[1], [0], [0], [1], [0, 0, 1, 1], [], []>} : vector<8x4xbf16>, vector<4x128xbf16>, vector<8x128xf32> -> vector<8x128xf32>
    %266 = arith.addf %263, %265 : vector<8x128xf32>
    %c0_237 = arith.constant 0 : index
    %c12 = arith.constant 12 : index
    %c0_238 = arith.constant 0 : index
    %c0_239 = arith.constant 0 : index
    %267 = vector.load %arg2[%c0_237, %c12, %c0_238, %c0_239] : memref<1x17x9x4xbf16, #tpu.memory_space<vmem>>, vector<1x1x9x4xbf16>
    %268 = vector.shape_cast %267 : vector<1x1x9x4xbf16> to vector<9x4xbf16>
    %c0_240 = arith.constant 0 : index
    %c12_241 = arith.constant 12 : index
    %c0_242 = arith.constant 0 : index
    %c0_243 = arith.constant 0 : index
    %269 = vector.load %arg3[%c0_240, %c12_241, %c0_242, %c0_243] : memref<1x17x9x4xbf16, #tpu.memory_space<vmem>>, vector<1x1x9x4xbf16>
    %270 = vector.shape_cast %269 : vector<1x1x9x4xbf16> to vector<9x4xbf16>
    %271 = vector.extract_strided_slice %268 {offsets = [0, 0], sizes = [8, 4], strides = [1, 1]} : vector<9x4xbf16> to vector<8x4xbf16>
    %cst_244 = arith.constant dense<0.000000e+00> : vector<8x128xf32>
    %272 = tpu.matmul %271, %16, %cst_244 {dimension_numbers = #tpu.dot_dimension_numbers<[1], [0], [0], [1], [0, 0, 1, 1], [], []>} : vector<8x4xbf16>, vector<4x128xbf16>, vector<8x128xf32> -> vector<8x128xf32>
    %273 = arith.addf %266, %272 : vector<8x128xf32>
    %274 = vector.extract_strided_slice %270 {offsets = [0, 0], sizes = [8, 4], strides = [1, 1]} : vector<9x4xbf16> to vector<8x4xbf16>
    %cst_245 = arith.constant dense<0.000000e+00> : vector<8x128xf32>
    %275 = tpu.matmul %274, %18, %cst_245 {dimension_numbers = #tpu.dot_dimension_numbers<[1], [0], [0], [1], [0, 0, 1, 1], [], []>} : vector<8x4xbf16>, vector<4x128xbf16>, vector<8x128xf32> -> vector<8x128xf32>
    %276 = arith.addf %273, %275 : vector<8x128xf32>
    %277 = vector.extract_strided_slice %268 {offsets = [1, 0], sizes = [8, 4], strides = [1, 1]} : vector<9x4xbf16> to vector<8x4xbf16>
    %cst_246 = arith.constant dense<0.000000e+00> : vector<8x128xf32>
    %278 = tpu.matmul %277, %20, %cst_246 {dimension_numbers = #tpu.dot_dimension_numbers<[1], [0], [0], [1], [0, 0, 1, 1], [], []>} : vector<8x4xbf16>, vector<4x128xbf16>, vector<8x128xf32> -> vector<8x128xf32>
    %279 = arith.addf %276, %278 : vector<8x128xf32>
    %cst_247 = arith.constant 0.000000e+00 : f32
    %280 = vector.broadcast %cst_247 : f32 to vector<8x128xf32>
    %281 = arith.maximumf %279, %280 : vector<8x128xf32>
    %c0_248 = arith.constant 0 : index
    %c5_249 = arith.constant 5 : index
    %c0_250 = arith.constant 0 : index
    %c0_251 = arith.constant 0 : index
    %282 = vector.load %arg6[%c0_248, %c5_249, %c0_250, %c0_251] : memref<1x8x8x128xf32, #tpu.memory_space<vmem>>, vector<1x1x8x128xf32>
    %283 = vector.shape_cast %282 : vector<1x1x8x128xf32> to vector<8x128xf32>
    %284 = vector.shape_cast %281 : vector<8x128xf32> to vector<1x1x8x128xf32>
    tpu.vector_store %arg6[%c0_248, %c5_249, %c0_250, %c0_251], %284 {strides = array<i32>} : memref<1x8x8x128xf32, #tpu.memory_space<vmem>>, vector<1x1x8x128xf32>,
    %c0_252 = arith.constant 0 : index
    %c12_253 = arith.constant 12 : index
    %c0_254 = arith.constant 0 : index
    %c0_255 = arith.constant 0 : index
    %285 = vector.load %arg2[%c0_252, %c12_253, %c0_254, %c0_255] : memref<1x17x9x4xbf16, #tpu.memory_space<vmem>>, vector<1x1x9x4xbf16>
    %286 = vector.shape_cast %285 : vector<1x1x9x4xbf16> to vector<9x4xbf16>
    %c0_256 = arith.constant 0 : index
    %c12_257 = arith.constant 12 : index
    %c0_258 = arith.constant 0 : index
    %c0_259 = arith.constant 0 : index
    %287 = vector.load %arg3[%c0_256, %c12_257, %c0_258, %c0_259] : memref<1x17x9x4xbf16, #tpu.memory_space<vmem>>, vector<1x1x9x4xbf16>
    %288 = vector.shape_cast %287 : vector<1x1x9x4xbf16> to vector<9x4xbf16>
    %289 = vector.extract_strided_slice %286 {offsets = [0, 0], sizes = [8, 4], strides = [1, 1]} : vector<9x4xbf16> to vector<8x4xbf16>
    %cst_260 = arith.constant dense<0.000000e+00> : vector<8x128xf32>
    %290 = tpu.matmul %289, %4, %cst_260 {dimension_numbers = #tpu.dot_dimension_numbers<[1], [0], [0], [1], [0, 0, 1, 1], [], []>} : vector<8x4xbf16>, vector<4x128xbf16>, vector<8x128xf32> -> vector<8x128xf32>
    %291 = arith.addf %2, %290 : vector<8x128xf32>
    %292 = vector.extract_strided_slice %288 {offsets = [0, 0], sizes = [8, 4], strides = [1, 1]} : vector<9x4xbf16> to vector<8x4xbf16>
    %cst_261 = arith.constant dense<0.000000e+00> : vector<8x128xf32>
    %293 = tpu.matmul %292, %6, %cst_261 {dimension_numbers = #tpu.dot_dimension_numbers<[1], [0], [0], [1], [0, 0, 1, 1], [], []>} : vector<8x4xbf16>, vector<4x128xbf16>, vector<8x128xf32> -> vector<8x128xf32>
    %294 = arith.addf %291, %293 : vector<8x128xf32>
    %295 = vector.extract_strided_slice %286 {offsets = [1, 0], sizes = [8, 4], strides = [1, 1]} : vector<9x4xbf16> to vector<8x4xbf16>
    %cst_262 = arith.constant dense<0.000000e+00> : vector<8x128xf32>
    %296 = tpu.matmul %295, %8, %cst_262 {dimension_numbers = #tpu.dot_dimension_numbers<[1], [0], [0], [1], [0, 0, 1, 1], [], []>} : vector<8x4xbf16>, vector<4x128xbf16>, vector<8x128xf32> -> vector<8x128xf32>
    %297 = arith.addf %294, %296 : vector<8x128xf32>
    %c0_263 = arith.constant 0 : index
    %c13 = arith.constant 13 : index
    %c0_264 = arith.constant 0 : index
    %c0_265 = arith.constant 0 : index
    %298 = vector.load %arg2[%c0_263, %c13, %c0_264, %c0_265] : memref<1x17x9x4xbf16, #tpu.memory_space<vmem>>, vector<1x1x9x4xbf16>
    %299 = vector.shape_cast %298 : vector<1x1x9x4xbf16> to vector<9x4xbf16>
    %c0_266 = arith.constant 0 : index
    %c13_267 = arith.constant 13 : index
    %c0_268 = arith.constant 0 : index
    %c0_269 = arith.constant 0 : index
    %300 = vector.load %arg3[%c0_266, %c13_267, %c0_268, %c0_269] : memref<1x17x9x4xbf16, #tpu.memory_space<vmem>>, vector<1x1x9x4xbf16>
    %301 = vector.shape_cast %300 : vector<1x1x9x4xbf16> to vector<9x4xbf16>
    %302 = vector.extract_strided_slice %299 {offsets = [0, 0], sizes = [8, 4], strides = [1, 1]} : vector<9x4xbf16> to vector<8x4xbf16>
    %cst_270 = arith.constant dense<0.000000e+00> : vector<8x128xf32>
    %303 = tpu.matmul %302, %10, %cst_270 {dimension_numbers = #tpu.dot_dimension_numbers<[1], [0], [0], [1], [0, 0, 1, 1], [], []>} : vector<8x4xbf16>, vector<4x128xbf16>, vector<8x128xf32> -> vector<8x128xf32>
    %304 = arith.addf %297, %303 : vector<8x128xf32>
    %305 = vector.extract_strided_slice %301 {offsets = [0, 0], sizes = [8, 4], strides = [1, 1]} : vector<9x4xbf16> to vector<8x4xbf16>
    %cst_271 = arith.constant dense<0.000000e+00> : vector<8x128xf32>
    %306 = tpu.matmul %305, %12, %cst_271 {dimension_numbers = #tpu.dot_dimension_numbers<[1], [0], [0], [1], [0, 0, 1, 1], [], []>} : vector<8x4xbf16>, vector<4x128xbf16>, vector<8x128xf32> -> vector<8x128xf32>
    %307 = arith.addf %304, %306 : vector<8x128xf32>
    %308 = vector.extract_strided_slice %299 {offsets = [1, 0], sizes = [8, 4], strides = [1, 1]} : vector<9x4xbf16> to vector<8x4xbf16>
    %cst_272 = arith.constant dense<0.000000e+00> : vector<8x128xf32>
    %309 = tpu.matmul %308, %14, %cst_272 {dimension_numbers = #tpu.dot_dimension_numbers<[1], [0], [0], [1], [0, 0, 1, 1], [], []>} : vector<8x4xbf16>, vector<4x128xbf16>, vector<8x128xf32> -> vector<8x128xf32>
    %310 = arith.addf %307, %309 : vector<8x128xf32>
    %c0_273 = arith.constant 0 : index
    %c14 = arith.constant 14 : index
    %c0_274 = arith.constant 0 : index
    %c0_275 = arith.constant 0 : index
    %311 = vector.load %arg2[%c0_273, %c14, %c0_274, %c0_275] : memref<1x17x9x4xbf16, #tpu.memory_space<vmem>>, vector<1x1x9x4xbf16>
    %312 = vector.shape_cast %311 : vector<1x1x9x4xbf16> to vector<9x4xbf16>
    %c0_276 = arith.constant 0 : index
    %c14_277 = arith.constant 14 : index
    %c0_278 = arith.constant 0 : index
    %c0_279 = arith.constant 0 : index
    %313 = vector.load %arg3[%c0_276, %c14_277, %c0_278, %c0_279] : memref<1x17x9x4xbf16, #tpu.memory_space<vmem>>, vector<1x1x9x4xbf16>
    %314 = vector.shape_cast %313 : vector<1x1x9x4xbf16> to vector<9x4xbf16>
    %315 = vector.extract_strided_slice %312 {offsets = [0, 0], sizes = [8, 4], strides = [1, 1]} : vector<9x4xbf16> to vector<8x4xbf16>
    %cst_280 = arith.constant dense<0.000000e+00> : vector<8x128xf32>
    %316 = tpu.matmul %315, %16, %cst_280 {dimension_numbers = #tpu.dot_dimension_numbers<[1], [0], [0], [1], [0, 0, 1, 1], [], []>} : vector<8x4xbf16>, vector<4x128xbf16>, vector<8x128xf32> -> vector<8x128xf32>
    %317 = arith.addf %310, %316 : vector<8x128xf32>
    %318 = vector.extract_strided_slice %314 {offsets = [0, 0], sizes = [8, 4], strides = [1, 1]} : vector<9x4xbf16> to vector<8x4xbf16>
    %cst_281 = arith.constant dense<0.000000e+00> : vector<8x128xf32>
    %319 = tpu.matmul %318, %18, %cst_281 {dimension_numbers = #tpu.dot_dimension_numbers<[1], [0], [0], [1], [0, 0, 1, 1], [], []>} : vector<8x4xbf16>, vector<4x128xbf16>, vector<8x128xf32> -> vector<8x128xf32>
    %320 = arith.addf %317, %319 : vector<8x128xf32>
    %321 = vector.extract_strided_slice %312 {offsets = [1, 0], sizes = [8, 4], strides = [1, 1]} : vector<9x4xbf16> to vector<8x4xbf16>
    %cst_282 = arith.constant dense<0.000000e+00> : vector<8x128xf32>
    %322 = tpu.matmul %321, %20, %cst_282 {dimension_numbers = #tpu.dot_dimension_numbers<[1], [0], [0], [1], [0, 0, 1, 1], [], []>} : vector<8x4xbf16>, vector<4x128xbf16>, vector<8x128xf32> -> vector<8x128xf32>
    %323 = arith.addf %320, %322 : vector<8x128xf32>
    %cst_283 = arith.constant 0.000000e+00 : f32
    %324 = vector.broadcast %cst_283 : f32 to vector<8x128xf32>
    %325 = arith.maximumf %323, %324 : vector<8x128xf32>
    %c0_284 = arith.constant 0 : index
    %c6_285 = arith.constant 6 : index
    %c0_286 = arith.constant 0 : index
    %c0_287 = arith.constant 0 : index
    %326 = vector.load %arg6[%c0_284, %c6_285, %c0_286, %c0_287] : memref<1x8x8x128xf32, #tpu.memory_space<vmem>>, vector<1x1x8x128xf32>
    %327 = vector.shape_cast %326 : vector<1x1x8x128xf32> to vector<8x128xf32>
    %328 = vector.shape_cast %325 : vector<8x128xf32> to vector<1x1x8x128xf32>
    tpu.vector_store %arg6[%c0_284, %c6_285, %c0_286, %c0_287], %328 {strides = array<i32>} : memref<1x8x8x128xf32, #tpu.memory_space<vmem>>, vector<1x1x8x128xf32>,
    %c0_288 = arith.constant 0 : index
    %c14_289 = arith.constant 14 : index
    %c0_290 = arith.constant 0 : index
    %c0_291 = arith.constant 0 : index
    %329 = vector.load %arg2[%c0_288, %c14_289, %c0_290, %c0_291] : memref<1x17x9x4xbf16, #tpu.memory_space<vmem>>, vector<1x1x9x4xbf16>
    %330 = vector.shape_cast %329 : vector<1x1x9x4xbf16> to vector<9x4xbf16>
    %c0_292 = arith.constant 0 : index
    %c14_293 = arith.constant 14 : index
    %c0_294 = arith.constant 0 : index
    %c0_295 = arith.constant 0 : index
    %331 = vector.load %arg3[%c0_292, %c14_293, %c0_294, %c0_295] : memref<1x17x9x4xbf16, #tpu.memory_space<vmem>>, vector<1x1x9x4xbf16>
    %332 = vector.shape_cast %331 : vector<1x1x9x4xbf16> to vector<9x4xbf16>
    %333 = vector.extract_strided_slice %330 {offsets = [0, 0], sizes = [8, 4], strides = [1, 1]} : vector<9x4xbf16> to vector<8x4xbf16>
    %cst_296 = arith.constant dense<0.000000e+00> : vector<8x128xf32>
    %334 = tpu.matmul %333, %4, %cst_296 {dimension_numbers = #tpu.dot_dimension_numbers<[1], [0], [0], [1], [0, 0, 1, 1], [], []>} : vector<8x4xbf16>, vector<4x128xbf16>, vector<8x128xf32> -> vector<8x128xf32>
    %335 = arith.addf %2, %334 : vector<8x128xf32>
    %336 = vector.extract_strided_slice %332 {offsets = [0, 0], sizes = [8, 4], strides = [1, 1]} : vector<9x4xbf16> to vector<8x4xbf16>
    %cst_297 = arith.constant dense<0.000000e+00> : vector<8x128xf32>
    %337 = tpu.matmul %336, %6, %cst_297 {dimension_numbers = #tpu.dot_dimension_numbers<[1], [0], [0], [1], [0, 0, 1, 1], [], []>} : vector<8x4xbf16>, vector<4x128xbf16>, vector<8x128xf32> -> vector<8x128xf32>
    %338 = arith.addf %335, %337 : vector<8x128xf32>
    %339 = vector.extract_strided_slice %330 {offsets = [1, 0], sizes = [8, 4], strides = [1, 1]} : vector<9x4xbf16> to vector<8x4xbf16>
    %cst_298 = arith.constant dense<0.000000e+00> : vector<8x128xf32>
    %340 = tpu.matmul %339, %8, %cst_298 {dimension_numbers = #tpu.dot_dimension_numbers<[1], [0], [0], [1], [0, 0, 1, 1], [], []>} : vector<8x4xbf16>, vector<4x128xbf16>, vector<8x128xf32> -> vector<8x128xf32>
    %341 = arith.addf %338, %340 : vector<8x128xf32>
    %c0_299 = arith.constant 0 : index
    %c15 = arith.constant 15 : index
    %c0_300 = arith.constant 0 : index
    %c0_301 = arith.constant 0 : index
    %342 = vector.load %arg2[%c0_299, %c15, %c0_300, %c0_301] : memref<1x17x9x4xbf16, #tpu.memory_space<vmem>>, vector<1x1x9x4xbf16>
    %343 = vector.shape_cast %342 : vector<1x1x9x4xbf16> to vector<9x4xbf16>
    %c0_302 = arith.constant 0 : index
    %c15_303 = arith.constant 15 : index
    %c0_304 = arith.constant 0 : index
    %c0_305 = arith.constant 0 : index
    %344 = vector.load %arg3[%c0_302, %c15_303, %c0_304, %c0_305] : memref<1x17x9x4xbf16, #tpu.memory_space<vmem>>, vector<1x1x9x4xbf16>
    %345 = vector.shape_cast %344 : vector<1x1x9x4xbf16> to vector<9x4xbf16>
    %346 = vector.extract_strided_slice %343 {offsets = [0, 0], sizes = [8, 4], strides = [1, 1]} : vector<9x4xbf16> to vector<8x4xbf16>
    %cst_306 = arith.constant dense<0.000000e+00> : vector<8x128xf32>
    %347 = tpu.matmul %346, %10, %cst_306 {dimension_numbers = #tpu.dot_dimension_numbers<[1], [0], [0], [1], [0, 0, 1, 1], [], []>} : vector<8x4xbf16>, vector<4x128xbf16>, vector<8x128xf32> -> vector<8x128xf32>
    %348 = arith.addf %341, %347 : vector<8x128xf32>
    %349 = vector.extract_strided_slice %345 {offsets = [0, 0], sizes = [8, 4], strides = [1, 1]} : vector<9x4xbf16> to vector<8x4xbf16>
    %cst_307 = arith.constant dense<0.000000e+00> : vector<8x128xf32>
    %350 = tpu.matmul %349, %12, %cst_307 {dimension_numbers = #tpu.dot_dimension_numbers<[1], [0], [0], [1], [0, 0, 1, 1], [], []>} : vector<8x4xbf16>, vector<4x128xbf16>, vector<8x128xf32> -> vector<8x128xf32>
    %351 = arith.addf %348, %350 : vector<8x128xf32>
    %352 = vector.extract_strided_slice %343 {offsets = [1, 0], sizes = [8, 4], strides = [1, 1]} : vector<9x4xbf16> to vector<8x4xbf16>
    %cst_308 = arith.constant dense<0.000000e+00> : vector<8x128xf32>
    %353 = tpu.matmul %352, %14, %cst_308 {dimension_numbers = #tpu.dot_dimension_numbers<[1], [0], [0], [1], [0, 0, 1, 1], [], []>} : vector<8x4xbf16>, vector<4x128xbf16>, vector<8x128xf32> -> vector<8x128xf32>
    %354 = arith.addf %351, %353 : vector<8x128xf32>
    %c0_309 = arith.constant 0 : index
    %c16 = arith.constant 16 : index
    %c0_310 = arith.constant 0 : index
    %c0_311 = arith.constant 0 : index
    %355 = vector.load %arg2[%c0_309, %c16, %c0_310, %c0_311] : memref<1x17x9x4xbf16, #tpu.memory_space<vmem>>, vector<1x1x9x4xbf16>
    %356 = vector.shape_cast %355 : vector<1x1x9x4xbf16> to vector<9x4xbf16>
    %c0_312 = arith.constant 0 : index
    %c16_313 = arith.constant 16 : index
    %c0_314 = arith.constant 0 : index
    %c0_315 = arith.constant 0 : index
    %357 = vector.load %arg3[%c0_312, %c16_313, %c0_314, %c0_315] : memref<1x17x9x4xbf16, #tpu.memory_space<vmem>>, vector<1x1x9x4xbf16>
    %358 = vector.shape_cast %357 : vector<1x1x9x4xbf16> to vector<9x4xbf16>
    %359 = vector.extract_strided_slice %356 {offsets = [0, 0], sizes = [8, 4], strides = [1, 1]} : vector<9x4xbf16> to vector<8x4xbf16>
    %cst_316 = arith.constant dense<0.000000e+00> : vector<8x128xf32>
    %360 = tpu.matmul %359, %16, %cst_316 {dimension_numbers = #tpu.dot_dimension_numbers<[1], [0], [0], [1], [0, 0, 1, 1], [], []>} : vector<8x4xbf16>, vector<4x128xbf16>, vector<8x128xf32> -> vector<8x128xf32>
    %361 = arith.addf %354, %360 : vector<8x128xf32>
    %362 = vector.extract_strided_slice %358 {offsets = [0, 0], sizes = [8, 4], strides = [1, 1]} : vector<9x4xbf16> to vector<8x4xbf16>
    %cst_317 = arith.constant dense<0.000000e+00> : vector<8x128xf32>
    %363 = tpu.matmul %362, %18, %cst_317 {dimension_numbers = #tpu.dot_dimension_numbers<[1], [0], [0], [1], [0, 0, 1, 1], [], []>} : vector<8x4xbf16>, vector<4x128xbf16>, vector<8x128xf32> -> vector<8x128xf32>
    %364 = arith.addf %361, %363 : vector<8x128xf32>
    %365 = vector.extract_strided_slice %356 {offsets = [1, 0], sizes = [8, 4], strides = [1, 1]} : vector<9x4xbf16> to vector<8x4xbf16>
    %cst_318 = arith.constant dense<0.000000e+00> : vector<8x128xf32>
    %366 = tpu.matmul %365, %20, %cst_318 {dimension_numbers = #tpu.dot_dimension_numbers<[1], [0], [0], [1], [0, 0, 1, 1], [], []>} : vector<8x4xbf16>, vector<4x128xbf16>, vector<8x128xf32> -> vector<8x128xf32>
    %367 = arith.addf %364, %366 : vector<8x128xf32>
    %cst_319 = arith.constant 0.000000e+00 : f32
    %368 = vector.broadcast %cst_319 : f32 to vector<8x128xf32>
    %369 = arith.maximumf %367, %368 : vector<8x128xf32>
    %c0_320 = arith.constant 0 : index
    %c7_321 = arith.constant 7 : index
    %c0_322 = arith.constant 0 : index
    %c0_323 = arith.constant 0 : index
    %370 = vector.load %arg6[%c0_320, %c7_321, %c0_322, %c0_323] : memref<1x8x8x128xf32, #tpu.memory_space<vmem>>, vector<1x1x8x128xf32>
    %371 = vector.shape_cast %370 : vector<1x1x8x128xf32> to vector<8x128xf32>
    %372 = vector.shape_cast %369 : vector<8x128xf32> to vector<1x1x8x128xf32>
    tpu.vector_store %arg6[%c0_320, %c7_321, %c0_322, %c0_323], %372 {strides = array<i32>} : memref<1x8x8x128xf32, #tpu.memory_space<vmem>>, vector<1x1x8x128xf32>,
    return
  }
  func.func @transform_0(%arg0: i32, %arg1: i32) -> (i32, i32, i32, i32) {
    %c0_i32 = arith.constant 0 : i32
    %c0_i32_0 = arith.constant 0 : i32
    %c0_i32_1 = arith.constant 0 : i32
    %c0_i32_2 = arith.constant 0 : i32
    return %arg0, %c0_i32, %c0_i32_0, %c0_i32_1 : i32, i32, i32, i32
  }
  func.func @transform_1(%arg0: i32, %arg1: i32) -> (i32, i32, i32, i32) {
    %c0_i32 = arith.constant 0 : i32
    %c0_i32_0 = arith.constant 0 : i32
    %c0_i32_1 = arith.constant 0 : i32
    %c0_i32_2 = arith.constant 0 : i32
    return %arg0, %c0_i32, %c0_i32_0, %c0_i32_1 : i32, i32, i32, i32
  }
  func.func @transform_2(%arg0: i32, %arg1: i32) -> (i32, i32, i32, i32) {
    %c0_i32 = arith.constant 0 : i32
    %c0_i32_0 = arith.constant 0 : i32
    %c0_i32_1 = arith.constant 0 : i32
    %c0_i32_2 = arith.constant 0 : i32
    return %c0_i32, %c0_i32_0, %c0_i32_1, %arg1 : i32, i32, i32, i32
  }
  func.func @transform_3(%arg0: i32, %arg1: i32) -> (i32, i32) {
    %c0_i32 = arith.constant 0 : i32
    %c0_i32_0 = arith.constant 0 : i32
    return %c0_i32, %arg1 : i32, i32
  }
  func.func @transform_4(%arg0: i32, %arg1: i32) -> (i32, i32, i32, i32) {
    %c0_i32 = arith.constant 0 : i32
    %c0_i32_0 = arith.constant 0 : i32
    %c0_i32_1 = arith.constant 0 : i32
    return %arg0, %c0_i32, %c0_i32_0, %arg1 : i32, i32, i32, i32
  }
}

</mosaic_0001>

<llo_original>
// kernel: _conv3x3_s2_relu_pallas.1
$region0: #{_conv3x3_s2_relu_pallas.1}
  #allocation0 [shape = 'u32[]', space=smem, size = 0x4, offset = 0x4, fixed_abs, tag = 'smem constant byte address 0x4 - core index']
  #allocation1 [shape = 'u32[144,128]{1,0:T(1,128)}', space=vmem, size = 0x12000, scoped, tag = 'internal scratch']
  %s0 = inlined_call_operand.vmem [shape: bf16[2,17,9,4], index: 0, kind: input, shape index: {}]
  %s1 = inlined_call_operand.vmem [shape: bf16[2,17,9,4], index: 1, kind: input, shape index: {}]
  %s2 = inlined_call_operand.vmem [shape: bf16[3,3,4,128], index: 2, kind: input, shape index: {}]
  %s3 = inlined_call_operand.vmem [shape: f32[1,128], index: 3, kind: input, shape index: {}]
  %s4 = inlined_call_operand.vmem [shape: f32[2,8,8,128], index: 4, kind: output, shape index: {}]
  %s5 = sld [smem:[#allocation0]]
  $region49: #{_conv3x3_s2_relu_pallas.1} parent=0
    _
  %s7 = ssub.s32 1, %s5
  %s8 = scalar_select 0, %s7, %s5
  loop: start=0, step=1, limit=4
  $region2: #{_conv3x3_s2_relu_pallas.1} parent=0 // loop_pre_header
    _
  $region3: #{_conv3x3_s2_relu_pallas.1} parent=0 // loop_header
    %s10 = sphi 0, %s14
    %p11 = scmp.ge.s32.totalorder %s10, 4
    %s17 = sphi 0, %s29
    %s18 = sphi 0, %s25
    %s19 = sphi 0, %s17
    %s20 = sphi 0, %s18
    %s21 = sphi 0, %s19
    %s22 = sphi 0, %s20
    %s32 = sphi 0, %s34
    %s35 = sphi 0, %s32
    %s36 = sphi 0, %s35
    %s52 = sphi 0, %s36
    %s58 = sphi 0, %s60
    %s61 = sphi 0, %s58
    %s62 = sphi 0, %s61
    %s78 = sphi 0, %s62
    %s84 = sphi 0, %s86
    %s87 = sphi 0, %s84
    %s88 = sphi 0, %s87
    %s104 = sphi 0, %s88
    %s110 = sphi 0, %s112
    %s113 = sphi 0, %s110
    %s114 = sphi 0, %s113
    %s130 = sphi 0, %s114
    %s138 = sphi 0, %s140
    %s141 = sphi 0, %s138
    %s142 = sphi 0, %s141
    %s158 = sphi 0, %s142
  $region4: #{_conv3x3_s2_relu_pallas.1} parent=0 // loop_header_branch
    %13 = sbr.rel (%p11) target = $region8
  $region5: #{_conv3x3_s2_relu_pallas.1} parent=0 // loop_body
    %s15 = ssub.s32 %s10, 1
    %s16 = ssub.s32 %s10, 2
    %s23 = sadd.s32 1, %s18
    %p24 = scmp.ge.s32.totalorder %s23, 1
    %s25 = scalar_select %p24, 0, %s23
    %s26 = sadd.s32 1, %s17
    %s27 = scalar_select %p24, %s26, %s17
    %p28 = scmp.ge.s32.totalorder %s27, 2
    %s29 = scalar_select %p28, 0, %s27
    %s30 = ssub.s32 %s17, %s29
    %p31 = scmp.eq.s32.totalorder %s30, 0
    %s33 = sadd.s32 %s32, 1
    %s34 = scalar_select %p31, %s32, %s33
    %p37 = pneg %p31
    %p38 = scmp.eq.s32.totalorder %s10, 1
    %p39 = por %p37, %p38
    %p40 = scmp.ne.s32.totalorder %s32, %s35
    %p41 = scmp.eq.s32.totalorder %s10, 0
    %p42 = por %p40, %p41
    %p43 = scmp.ne.s32.totalorder %s32, %s35
    %p44 = scmp.eq.s32.totalorder %s15, 1
    %p45 = por %p43, %p44
    %p46 = scmp.ne.s32.totalorder %s35, %s36
    %p47 = scmp.eq.s32.totalorder %s15, 0
    %p48 = por %p46, %p47
    %p49 = scmp.ne.s32.totalorder %s35, %s36
    %p50 = scmp.eq.s32.totalorder %s16, 1
    %p51 = por %p49, %p50
    %p53 = scmp.ne.s32.totalorder %s36, %s52
    %p54 = scmp.eq.s32.totalorder %s16, 0
    %p55 = por %p53, %p54
    %s56 = ssub.s32 %s17, %s29
    %p57 = scmp.eq.s32.totalorder %s56, 0
    %s59 = sadd.s32 %s58, 1
    %s60 = scalar_select %p57, %s58, %s59
    %p63 = pneg %p57
    %p64 = scmp.eq.s32.totalorder %s10, 1
    %p65 = por %p63, %p64
    %p66 = scmp.ne.s32.totalorder %s58, %s61
    %p67 = scmp.eq.s32.totalorder %s10, 0
    %p68 = por %p66, %p67
    %p69 = scmp.ne.s32.totalorder %s58, %s61
    %p70 = scmp.eq.s32.totalorder %s15, 1
    %p71 = por %p69, %p70
    %p72 = scmp.ne.s32.totalorder %s61, %s62
    %p73 = scmp.eq.s32.totalorder %s15, 0
    %p74 = por %p72, %p73
    %p75 = scmp.ne.s32.totalorder %s61, %s62
    %p76 = scmp.eq.s32.totalorder %s16, 1
    %p77 = por %p75, %p76
    %p79 = scmp.ne.s32.totalorder %s62, %s78
    %p80 = scmp.eq.s32.totalorder %s16, 0
    %p81 = por %p79, %p80
    %s82 = ssub.s32 %s18, %s25
    %p83 = scmp.eq.s32.totalorder %s82, 0
    %s85 = sadd.s32 %s84, 1
    %s86 = scalar_select %p83, %s84, %s85
    %p89 = pneg %p83
    %p90 = scmp.eq.s32.totalorder %s10, 1
    %p91 = por %p89, %p90
    %p92 = scmp.ne.s32.totalorder %s84, %s87
    %p93 = scmp.eq.s32.totalorder %s10, 0
    %p94 = por %p92, %p93
    %p95 = scmp.ne.s32.totalorder %s84, %s87
    %p96 = scmp.eq.s32.totalorder %s15, 1
    %p97 = por %p95, %p96
    %p98 = scmp.ne.s32.totalorder %s87, %s88
    %p99 = scmp.eq.s32.totalorder %s15, 0
    %p100 = por %p98, %p99
    %p101 = scmp.ne.s32.totalorder %s87, %s88
    %p102 = scmp.eq.s32.totalorder %s16, 1
    %p103 = por %p101, %p102
    %p105 = scmp.ne.s32.totalorder %s88, %s104
    %p106 = scmp.eq.s32.totalorder %s16, 0
    %p107 = por %p105, %p106
    %s108 = ssub.s32 %s18, %s25
    %p109 = scmp.eq.s32.totalorder %s108, 0
    %s111 = sadd.s32 %s110, 1
    %s112 = scalar_select %p109, %s110, %s111
    %p115 = pneg %p109
    %p116 = scmp.eq.s32.totalorder %s10, 1
    %p117 = por %p115, %p116
    %p118 = scmp.ne.s32.totalorder %s110, %s113
    %p119 = scmp.eq.s32.totalorder %s10, 0
    %p120 = por %p118, %p119
    %p121 = scmp.ne.s32.totalorder %s110, %s113
    %p122 = scmp.eq.s32.totalorder %s15, 1
    %p123 = por %p121, %p122
    %p124 = scmp.ne.s32.totalorder %s113, %s114
    %p125 = scmp.eq.s32.totalorder %s15, 0
    %p126 = por %p124, %p125
    %p127 = scmp.ne.s32.totalorder %s113, %s114
    %p128 = scmp.eq.s32.totalorder %s16, 1
    %p129 = por %p127, %p128
    %p131 = scmp.ne.s32.totalorder %s114, %s130
    %p132 = scmp.eq.s32.totalorder %s16, 0
    %p133 = por %p131, %p132
    %s134 = ssub.s32 %s17, %s29
    %s135 = ssub.s32 %s18, %s25
    %s136 = sor.u32 %s134, %s135
    %p137 = scmp.eq.s32.totalorder %s136, 0
    %s139 = sadd.s32 %s138, 1
    %s140 = scalar_select %p137, %s138, %s139
    %p143 = pneg %p137
    %p144 = scmp.eq.s32.totalorder %s10, 1
    %p145 = por %p143, %p144
    %p146 = scmp.ne.s32.totalorder %s138, %s141
    %p147 = scmp.eq.s32.totalorder %s10, 0
    %p148 = por %p146, %p147
    %p149 = scmp.ne.s32.totalorder %s138, %s141
    %p150 = scmp.eq.s32.totalorder %s15, 1
    %p151 = por %p149, %p150
    %p152 = scmp.ne.s32.totalorder %s141, %s142
    %p153 = scmp.eq.s32.totalorder %s15, 0
    %p154 = por %p152, %p153
    %p155 = scmp.ne.s32.totalorder %s141, %s142
    %p156 = scmp.eq.s32.totalorder %s16, 1
    %p157 = por %p155, %p156
    %p159 = scmp.ne.s32.totalorder %s142, %s158
    %p160 = scmp.eq.s32.totalorder %s16, 0
    %p161 = por %p159, %p160
    %p162 = scmp.le.s32.totalorder 1, %s10
    %p163 = scmp.lt.s32.totalorder %s10, 3
    %p164 = pnand %p162, %p163
    %p165 = pneg %p164
    // Predicated region
    $region9: #{_conv3x3_s2_relu_pallas.1} parent=5 // pred_check
      _
    $region10: #{_conv3x3_s2_relu_pallas.1} parent=5 // pred_check_branch
      %167 = sbr.rel (%p164) target = $region12
    $region11: #{_conv3x3_s2_relu_pallas.1} parent=5 // pred_region
      %s168 = ssub.s32 %s10, 1
      // Predicated region
      $region13: #{_conv3x3_s2_relu_pallas.1} parent=11 // pred_check
        %p169 = pneg %p100
      $region14: #{_conv3x3_s2_relu_pallas.1} parent=11 // pred_check_branch
        %171 = sbr.rel (%p169) target = $region16
      $region15: #{_conv3x3_s2_relu_pallas.1} parent=11 // pred_region
        %p172 = scmp.lt.s32.totalorder %s20, 0
        %s173 = scalar_select %p172, %s20, 0
        %s174 = smul.addr %s173, 2
        %s175 = scalar_lea.vmem %s2, %s174
      $region16: #{_conv3x3_s2_relu_pallas.1} parent=11 // pred_fallthru
        _
      // Predicated region
      $region17: #{_conv3x3_s2_relu_pallas.1} parent=11 // pred_check
        %p176 = pneg %p126
      $region18: #{_conv3x3_s2_relu_pallas.1} parent=11 // pred_check_branch
        %178 = sbr.rel (%p176) target = $region20
      $region19: #{_conv3x3_s2_relu_pallas.1} parent=11 // pred_region
        %p179 = scmp.lt.s32.totalorder %s20, 0
        %s180 = scalar_select %p179, %s20, 0
        %s181 = scalar_lea.vmem %s3, %s180
      $region20: #{_conv3x3_s2_relu_pallas.1} parent=11 // pred_fallthru
        _
    $region12: #{_conv3x3_s2_relu_pallas.1} parent=5 // pred_fallthru
      _
    %p182 = scmp.lt.s32.totalorder %s10, 2
    // Predicated region
    $region21: #{_conv3x3_s2_relu_pallas.1} parent=5 // pred_check
      %p183 = pneg %p182
    $region22: #{_conv3x3_s2_relu_pallas.1} parent=5 // pred_check_branch
      %185 = sbr.rel (%p183) target = $region24
    $region23: #{_conv3x3_s2_relu_pallas.1} parent=5 // pred_region
      // Predicated region
      $region25: #{_conv3x3_s2_relu_pallas.1} parent=23 // pred_check
        %p186 = pneg %p42
      $region26: #{_conv3x3_s2_relu_pallas.1} parent=23 // pred_check_branch
        %188 = sbr.rel (%p186) target = $region28
      $region27: #{_conv3x3_s2_relu_pallas.1} parent=23 // pred_region
        %p189 = scmp.lt.s32.totalorder %s17, 1
        %s190 = scalar_select %p189, %s17, 1
        %s191 = smul.addr %s190, 34
        %s192 = smul.addr %s191, 4
        %s193 = scalar_lea.vmem %s0, %s192
      $region28: #{_conv3x3_s2_relu_pallas.1} parent=23 // pred_fallthru
        _
      // Predicated region
      $region29: #{_conv3x3_s2_relu_pallas.1} parent=23 // pred_check
        %p194 = pneg %p68
      $region30: #{_conv3x3_s2_relu_pallas.1} parent=23 // pred_check_branch
        %196 = sbr.rel (%p194) target = $region32
      $region31: #{_conv3x3_s2_relu_pallas.1} parent=23 // pred_region
        %p197 = scmp.lt.s32.totalorder %s17, 1
        %s198 = scalar_select %p197, %s17, 1
        %s199 = smul.addr %s198, 34
        %s200 = smul.addr %s199, 4
        %s201 = scalar_lea.vmem %s1, %s200
      $region32: #{_conv3x3_s2_relu_pallas.1} parent=23 // pred_fallthru
        _
    $region24: #{_conv3x3_s2_relu_pallas.1} parent=5 // pred_fallthru
      _
    %p202 = scmp.le.s32.totalorder 1, %s10
    %p203 = scmp.lt.s32.totalorder %s10, 3
    %p204 = pnand %p202, %p203
    %p205 = pneg %p204
    // Predicated region
    $region33: #{_conv3x3_s2_relu_pallas.1} parent=5 // pred_check
      _
    $region34: #{_conv3x3_s2_relu_pallas.1} parent=5 // pred_check_branch
      %207 = sbr.rel (%p204) target = $region36
    $region35: #{_conv3x3_s2_relu_pallas.1} parent=5 // pred_region
      %s208 = ssub.s32 %s10, 1
      %p209 = scmp.lt.s32.totalorder %s19, 1
      %s210 = scalar_select %p209, %s19, 1
      %s211 = smul.addr %s210, 34
      %s212 = smul.addr %s211, 4
      %s213 = scalar_lea.vmem %s0, %s212
      %p214 = pneg %p48
      %p215 = pneg %p45
      %p216 = scmp.lt.s32.totalorder %s19, 1
      %s217 = scalar_select %p216, %s19, 1
      %s218 = smul.addr %s217, 34
      %s219 = smul.addr %s218, 4
      %s220 = scalar_lea.vmem %s1, %s219
      %p221 = pneg %p74
      %p222 = pneg %p71
      %p223 = scmp.lt.s32.totalorder %s20, 0
      %s224 = scalar_select %p223, %s20, 0
      %s225 = smul.addr %s224, 2
      %s226 = scalar_lea.vmem %s2, %s225
      %p227 = pneg %p100
      %p228 = pneg %p97
      %p229 = scmp.lt.s32.totalorder %s20, 0
      %s230 = scalar_select %p229, %s20, 0
      %s231 = scalar_lea.vmem %s3, %s230
      %p232 = pneg %p126
      %p233 = pneg %p123
      %p234 = pneg %p154
      %p235 = pneg %p151
      %p236 = scmp.lt.s32.totalorder %s19, 1
      %s237 = scalar_select %p236, %s19, 1
      %p238 = scmp.lt.s32.totalorder %s20, 0
      %s239 = scalar_select %p238, %s20, 0
      %s240 = smul.addr %s237, 8
      %s241 = sadd.s32 %s239, %s240
      %s242 = smul.addr %s241, 8
      %s243 = scalar_lea.vmem %s4, %s242
      %p244 = scmp.lt.s32.totalorder %s19, 1
      %s245 = scalar_select %p244, %s19, 1
      %s246 = smul.addr %s245, 34
      %s247 = smul.addr %s246, 4
      %s248 = scalar_lea.vmem %s0, %s247
      %p249 = scmp.lt.s32.totalorder %s19, 1
      %s250 = scalar_select %p249, %s19, 1
      %s251 = smul.addr %s250, 34
      %s252 = smul.addr %s251, 4
      %s253 = scalar_lea.vmem %s1, %s252
      %p254 = scmp.lt.s32.totalorder %s20, 0
      %s255 = scalar_select %p254, %s20, 0
      %s256 = smul.addr %s255, 2
      %s257 = scalar_lea.vmem %s2, %s256
      %p258 = scmp.lt.s32.totalorder %s20, 0
      %s259 = scalar_select %p258, %s20, 0
      %s260 = scalar_lea.vmem %s3, %s259
      %p261 = scmp.lt.s32.totalorder %s19, 1
      %s262 = scalar_select %p261, %s19, 1
      %p263 = scmp.lt.s32.totalorder %s20, 0
      %s264 = scalar_select %p263, %s20, 0
      %s265 = smul.addr %s262, 8
      %s266 = sadd.s32 %s264, %s265
      %s267 = smul.addr %s266, 8
      %s268 = scalar_lea.vmem %s4, %s267
      %v270 = vld [vmem:[%s260] sm:$0x1]
      %v272 = vlaneseq
      %v273 = vshrl.u32 %v272, 7
      %v274 = vsub.s32 0, %v273
      %v275 = vrot.slane %v270, %v274
      %v277 = vld [vmem:[%s257] sm:$0x3]
      %s278 = scalar_lea.vmem %s257, 2
      %v279 = vld [vmem:[%s278] sm:$0x3]
      %s280 = scalar_lea.vmem %s257, 4
      %v281 = vld [vmem:[%s280] sm:$0x3]
      %s282 = scalar_lea.vmem %s257, 6
      %v283 = vld [vmem:[%s282] sm:$0x3]
      %s284 = scalar_lea.vmem %s257, 8
      %v285 = vld [vmem:[%s284] sm:$0x3]
      %s286 = scalar_lea.vmem %s257, 10
      %v287 = vld [vmem:[%s286] sm:$0x3]
      %s288 = scalar_lea.vmem %s257, 12
      %v289 = vld [vmem:[%s288] sm:$0x3]
      %s290 = scalar_lea.vmem %s257, 14
      %v291 = vld [vmem:[%s290] sm:$0x3]
      %s292 = scalar_lea.vmem %s257, 16
      %v293 = vld [vmem:[%s292] sm:$0x3]
      %v294 = vld [vmem:[%s248] sm:$0xf]
      %v295 = vld [vmem:[%s248 + $0x4] sm:$0x1]
      %v296 = vld [vmem:[%s253] sm:$0xf]
      %vm297 = vcmask 31744
      %v299 = vsel %vm297, %v294, 0
      %vm301 = vcmask 1041408
      %v303 = vsel %vm301, %v277, 0
      %305 = vmatprep.subr.bf16.mxu0 0
      %306 = vmatpush1.bf16.msra.mxu0 %v303
      %307 = vmatprep.subr.bf16.mxu0 0
      %308 = vmatpush1.bf16.msra.mxu0 0
      %309 = vmatprep.subr.bf16.mxu0 0
      %310 = vmatpush1.bf16.msra.mxu0 0
      %311 = vmatprep.subr.bf16.mxu0 0
      %312 = vmatpush1.bf16.msra.mxu0 0
      %313 = vmatprep.subr.bf16.mxu0 0
      %314 = vmatpush1.bf16.msra.mxu0 0
      %315 = vmatprep.subr.bf16.mxu0 0
      %316 = vmatpush1.bf16.msra.mxu0 0
      %317 = vmatprep.subr.bf16.mxu0 0
      %318 = vmatpush1.bf16.msra.mxu0 0
      %319 = vmatprep.subr.bf16.mxu0 0
      %320 = vmatpush1.bf16.msra.mxu0 0
      %321 = vmatprep.subr.bf16.mxu0 0
      %322 = vmatpush1.bf16.msra.mxu0 0
      %323 = vmatprep.subr.bf16.mxu0 0
      %324 = vmatpush1.bf16.msra.mxu0 0
      %325 = vmatprep.subr.bf16.mxu0 0
      %326 = vmatpush1.bf16.msra.mxu0 0
      %327 = vmatprep.subr.bf16.mxu0 0
      %328 = vmatpush1.bf16.msra.mxu0 0
      %329 = vmatprep.subr.bf16.mxu0 0
      %330 = vmatpush1.bf16.msra.mxu0 0
      %331 = vmatprep.subr.bf16.mxu0 0
      %332 = vmatpush1.bf16.msra.mxu0 0
      %333 = vmatprep.subr.bf16.mxu0 0
      %334 = vmatpush1.bf16.msra.mxu0 0
      %335 = vmatprep.subr.bf16.mxu0 0
      %336 = vmatpush1.bf16.msra.mxu0 0
      %337 = vmatprep.mubr.bf16.mxu0 0
      %338 = vmatmul.mubr.bf16.gmra.mrb[0].mxu0 %v299
      %v339 = vpop.f32.mrb[0].mxu0
      %v340 = vadd.f32 0.0, %v339
      %v341 = vpop.f32.mrb[0].mxu0
      %v342 = vpop.f32.mrb[0].mxu0
      %v343 = vpop.f32.mrb[0].mxu0
      %344 = vdwg.mxu0
      %v345 = vadd.f32 %v275, %v340
      %v347 = vsel %vm297, %v296, 0
      %v350 = vsel %vm301, %v279, 0
      %352 = vmatprep.subr.bf16.mxu0 0
      %353 = vmatpush1.bf16.msra.mxu0 %v350
      %354 = vmatprep.subr.bf16.mxu0 0
      %355 = vmatpush1.bf16.msra.mxu0 0
      %356 = vmatprep.subr.bf16.mxu0 0
      %357 = vmatpush1.bf16.msra.mxu0 0
      %358 = vmatprep.subr.bf16.mxu0 0
      %359 = vmatpush1.bf16.msra.mxu0 0
      %360 = vmatprep.subr.bf16.mxu0 0
      %361 = vmatpush1.bf16.msra.mxu0 0
      %362 = vmatprep.subr.bf16.mxu0 0
      %363 = vmatpush1.bf16.msra.mxu0 0
      %364 = vmatprep.subr.bf16.mxu0 0
      %365 = vmatpush1.bf16.msra.mxu0 0
      %366 = vmatprep.subr.bf16.mxu0 0
      %367 = vmatpush1.bf16.msra.mxu0 0
      %368 = vmatprep.subr.bf16.mxu0 0
      %369 = vmatpush1.bf16.msra.mxu0 0
      %370 = vmatprep.subr.bf16.mxu0 0
      %371 = vmatpush1.bf16.msra.mxu0 0
      %372 = vmatprep.subr.bf16.mxu0 0
      %373 = vmatpush1.bf16.msra.mxu0 0
      %374 = vmatprep.subr.bf16.mxu0 0
      %375 = vmatpush1.bf16.msra.mxu0 0
      %376 = vmatprep.subr.bf16.mxu0 0
      %377 = vmatpush1.bf16.msra.mxu0 0
      %378 = vmatprep.subr.bf16.mxu0 0
      %379 = vmatpush1.bf16.msra.mxu0 0
      %380 = vmatprep.subr.bf16.mxu0 0
      %381 = vmatpush1.bf16.msra.mxu0 0
      %382 = vmatprep.subr.bf16.mxu0 0
      %383 = vmatpush1.bf16.msra.mxu0 0
      %384 = vmatprep.mubr.bf16.mxu0 0
      %385 = vmatmul.mubr.bf16.gmra.mrb[0].mxu0 %v347
      %v386 = vpop.f32.mrb[0].mxu0
      %v387 = vadd.f32 0.0, %v386
      %v388 = vpop.f32.mrb[0].mxu0
      %v389 = vpop.f32.mrb[0].mxu0
      %v390 = vpop.f32.mrb[0].mxu0
      %391 = vdwg.mxu0
      %v392 = vadd.f32 %v345, %v387
      %v395 = vunpack.c.l.b16 %v294
      %v396 = vunpack.c.l.b16 %v295
      %v397 = vpack.c.b16 %v396, %v395
      %v399 = vshrl.u32 %v397, 16
      %v401 = vshll.u32 %v397, 16
      %v403 = vrot.slane %v401, 1
      %v404 = vor.u32 %v399, %v403
      %v406 = vsel %vm297, %v404, 0
      %v409 = vsel %vm301, %v281, 0
      %411 = vmatprep.subr.bf16.mxu0 0
      %412 = vmatpush1.bf16.msra.mxu0 %v409
      %413 = vmatprep.subr.bf16.mxu0 0
      %414 = vmatpush1.bf16.msra.mxu0 0
      %415 = vmatprep.subr.bf16.mxu0 0
      %416 = vmatpush1.bf16.msra.mxu0 0
      %417 = vmatprep.subr.bf16.mxu0 0
      %418 = vmatpush1.bf16.msra.mxu0 0
      %419 = vmatprep.subr.bf16.mxu0 0
      %420 = vmatpush1.bf16.msra.mxu0 0
      %421 = vmatprep.subr.bf16.mxu0 0
      %422 = vmatpush1.bf16.msra.mxu0 0
      %423 = vmatprep.subr.bf16.mxu0 0
      %424 = vmatpush1.bf16.msra.mxu0 0
      %425 = vmatprep.subr.bf16.mxu0 0
      %426 = vmatpush1.bf16.msra.mxu0 0
      %427 = vmatprep.subr.bf16.mxu0 0
      %428 = vmatpush1.bf16.msra.mxu0 0
      %429 = vmatprep.subr.bf16.mxu0 0
      %430 = vmatpush1.bf16.msra.mxu0 0
      %431 = vmatprep.subr.bf16.mxu0 0
      %432 = vmatpush1.bf16.msra.mxu0 0
      %433 = vmatprep.subr.bf16.mxu0 0
      %434 = vmatpush1.bf16.msra.mxu0 0
      %435 = vmatprep.subr.bf16.mxu0 0
      %436 = vmatpush1.bf16.msra.mxu0 0
      %437 = vmatprep.subr.bf16.mxu0 0
      %438 = vmatpush1.bf16.msra.mxu0 0
      %439 = vmatprep.subr.bf16.mxu0 0
      %440 = vmatpush1.bf16.msra.mxu0 0
      %441 = vmatprep.subr.bf16.mxu0 0
      %442 = vmatpush1.bf16.msra.mxu0 0
      %443 = vmatprep.mubr.bf16.mxu0 0
      %444 = vmatmul.mubr.bf16.gmra.mrb[0].mxu0 %v406
      %v445 = vpop.f32.mrb[0].mxu0
      %v446 = vadd.f32 0.0, %v445
      %v447 = vpop.f32.mrb[0].mxu0
      %v448 = vpop.f32.mrb[0].mxu0
      %v449 = vpop.f32.mrb[0].mxu0
      %450 = vdwg.mxu0
      %v451 = vadd.f32 %v392, %v446
      %s452 = scalar_lea.vmem %s248, 8
      %v453 = vld [vmem:[%s452] sm:$0xf]
      %v454 = vld [vmem:[%s452 + $0x4] sm:$0x1]
      %s455 = scalar_lea.vmem %s253, 8
      %v456 = vld [vmem:[%s455] sm:$0xf]
      %v458 = vsel %vm297, %v453, 0
      %v461 = vsel %vm301, %v283, 0
      %463 = vmatprep.subr.bf16.mxu0 0
      %464 = vmatpush1.bf16.msra.mxu0 %v461
      %465 = vmatprep.subr.bf16.mxu0 0
      %466 = vmatpush1.bf16.msra.mxu0 0
      %467 = vmatprep.subr.bf16.mxu0 0
      %468 = vmatpush1.bf16.msra.mxu0 0
      %469 = vmatprep.subr.bf16.mxu0 0
      %470 = vmatpush1.bf16.msra.mxu0 0
      %471 = vmatprep.subr.bf16.mxu0 0
      %472 = vmatpush1.bf16.msra.mxu0 0
      %473 = vmatprep.subr.bf16.mxu0 0
      %474 = vmatpush1.bf16.msra.mxu0 0
      %475 = vmatprep.subr.bf16.mxu0 0
      %476 = vmatpush1.bf16.msra.mxu0 0
      %477 = vmatprep.subr.bf16.mxu0 0
      %478 = vmatpush1.bf16.msra.mxu0 0
      %479 = vmatprep.subr.bf16.mxu0 0
      %480 = vmatpush1.bf16.msra.mxu0 0
      %481 = vmatprep.subr.bf16.mxu0 0
      %482 = vmatpush1.bf16.msra.mxu0 0
      %483 = vmatprep.subr.bf16.mxu0 0
      %484 = vmatpush1.bf16.msra.mxu0 0
      %485 = vmatprep.subr.bf16.mxu0 0
      %486 = vmatpush1.bf16.msra.mxu0 0
      %487 = vmatprep.subr.bf16.mxu0 0
      %488 = vmatpush1.bf16.msra.mxu0 0
      %489 = vmatprep.subr.bf16.mxu0 0
      %490 = vmatpush1.bf16.msra.mxu0 0
      %491 = vmatprep.subr.bf16.mxu0 0
      %492 = vmatpush1.bf16.msra.mxu0 0
      %493 = vmatprep.subr.bf16.mxu0 0
      %494 = vmatpush1.bf16.msra.mxu0 0
      %495 = vmatprep.mubr.bf16.mxu0 0
      %496 = vmatmul.mubr.bf16.gmra.mrb[0].mxu0 %v458
      %v497 = vpop.f32.mrb[0].mxu0
      %v498 = vadd.f32 0.0, %v497
      %v499 = vpop.f32.mrb[0].mxu0
      %v500 = vpop.f32.mrb[0].mxu0
      %v501 = vpop.f32.mrb[0].mxu0
      %502 = vdwg.mxu0
      %v503 = vadd.f32 %v451, %v498
      %v505 = vsel %vm297, %v456, 0
      %v508 = vsel %vm301, %v285, 0
      %510 = vmatprep.subr.bf16.mxu0 0
      %511 = vmatpush1.bf16.msra.mxu0 %v508
      %512 = vmatprep.subr.bf16.mxu0 0
      %513 = vmatpush1.bf16.msra.mxu0 0
      %514 = vmatprep.subr.bf16.mxu0 0
      %515 = vmatpush1.bf16.msra.mxu0 0
      %516 = vmatprep.subr.bf16.mxu0 0
      %517 = vmatpush1.bf16.msra.mxu0 0
      %518 = vmatprep.subr.bf16.mxu0 0
      %519 = vmatpush1.bf16.msra.mxu0 0
      %520 = vmatprep.subr.bf16.mxu0 0
      %521 = vmatpush1.bf16.msra.mxu0 0
      %522 = vmatprep.subr.bf16.mxu0 0
      %523 = vmatpush1.bf16.msra.mxu0 0
      %524 = vmatprep.subr.bf16.mxu0 0
      %525 = vmatpush1.bf16.msra.mxu0 0
      %526 = vmatprep.subr.bf16.mxu0 0
      %527 = vmatpush1.bf16.msra.mxu0 0
      %528 = vmatprep.subr.bf16.mxu0 0
      %529 = vmatpush1.bf16.msra.mxu0 0
      %530 = vmatprep.subr.bf16.mxu0 0
      %531 = vmatpush1.bf16.msra.mxu0 0
      %532 = vmatprep.subr.bf16.mxu0 0
      %533 = vmatpush1.bf16.msra.mxu0 0
      %534 = vmatprep.subr.bf16.mxu0 0
      %535 = vmatpush1.bf16.msra.mxu0 0
      %536 = vmatprep.subr.bf16.mxu0 0
      %537 = vmatpush1.bf16.msra.mxu0 0
      %538 = vmatprep.subr.bf16.mxu0 0
      %539 = vmatpush1.bf16.msra.mxu0 0
      %540 = vmatprep.subr.bf16.mxu0 0
      %541 = vmatpush1.bf16.msra.mxu0 0
      %542 = vmatprep.mubr.bf16.mxu0 0
      %543 = vmatmul.mubr.bf16.gmra.mrb[0].mxu0 %v505
      %v544 = vpop.f32.mrb[0].mxu0
      %v545 = vadd.f32 0.0, %v544
      %v546 = vpop.f32.mrb[0].mxu0
      %v547 = vpop.f32.mrb[0].mxu0
      %v548 = vpop.f32.mrb[0].mxu0
      %549 = vdwg.mxu0
      %v550 = vadd.f32 %v503, %v545
      %v553 = vunpack.c.l.b16 %v453
      %v554 = vunpack.c.l.b16 %v454
      %v555 = vpack.c.b16 %v554, %v553
      %v557 = vshrl.u32 %v555, 16
      %v559 = vshll.u32 %v555, 16
      %v561 = vrot.slane %v559, 1
      %v562 = vor.u32 %v557, %v561
      %v564 = vsel %vm297, %v562, 0
      %v567 = vsel %vm301, %v287, 0
      %569 = vmatprep.subr.bf16.mxu0 0
      %570 = vmatpush1.bf16.msra.mxu0 %v567
      %571 = vmatprep.subr.bf16.mxu0 0
      %572 = vmatpush1.bf16.msra.mxu0 0
      %573 = vmatprep.subr.bf16.mxu0 0
      %574 = vmatpush1.bf16.msra.mxu0 0
      %575 = vmatprep.subr.bf16.mxu0 0
      %576 = vmatpush1.bf16.msra.mxu0 0
      %577 = vmatprep.subr.bf16.mxu0 0
      %578 = vmatpush1.bf16.msra.mxu0 0
      %579 = vmatprep.subr.bf16.mxu0 0
      %580 = vmatpush1.bf16.msra.mxu0 0
      %581 = vmatprep.subr.bf16.mxu0 0
      %582 = vmatpush1.bf16.msra.mxu0 0
      %583 = vmatprep.subr.bf16.mxu0 0
      %584 = vmatpush1.bf16.msra.mxu0 0
      %585 = vmatprep.subr.bf16.mxu0 0
      %586 = vmatpush1.bf16.msra.mxu0 0
      %587 = vmatprep.subr.bf16.mxu0 0
      %588 = vmatpush1.bf16.msra.mxu0 0
      %589 = vmatprep.subr.bf16.mxu0 0
      %590 = vmatpush1.bf16.msra.mxu0 0
      %591 = vmatprep.subr.bf16.mxu0 0
      %592 = vmatpush1.bf16.msra.mxu0 0
      %593 = vmatprep.subr.bf16.mxu0 0
      %594 = vmatpush1.bf16.msra.mxu0 0
      %595 = vmatprep.subr.bf16.mxu0 0
      %596 = vmatpush1.bf16.msra.mxu0 0
      %597 = vmatprep.subr.bf16.mxu0 0
      %598 = vmatpush1.bf16.msra.mxu0 0
      %599 = vmatprep.subr.bf16.mxu0 0
      %600 = vmatpush1.bf16.msra.mxu0 0
      %601 = vmatprep.mubr.bf16.mxu0 0
      %602 = vmatmul.mubr.bf16.gmra.mrb[0].mxu0 %v564
      %v603 = vpop.f32.mrb[0].mxu0
      %v604 = vadd.f32 0.0, %v603
      %v605 = vpop.f32.mrb[0].mxu0
      %v606 = vpop.f32.mrb[0].mxu0
      %v607 = vpop.f32.mrb[0].mxu0
      %608 = vdwg.mxu0
      %v609 = vadd.f32 %v550, %v604
      %s610 = scalar_lea.vmem %s248, 16
      %v611 = vld [vmem:[%s610] sm:$0xf]
      %v612 = vld [vmem:[%s610 + $0x4] sm:$0x1]
      %s613 = scalar_lea.vmem %s253, 16
      %v614 = vld [vmem:[%s613] sm:$0xf]
      %v616 = vsel %vm297, %v611, 0
      %v619 = vsel %vm301, %v289, 0
      %621 = vmatprep.subr.bf16.mxu0 0
      %622 = vmatpush1.bf16.msra.mxu0 %v619
      %623 = vmatprep.subr.bf16.mxu0 0
      %624 = vmatpush1.bf16.msra.mxu0 0
      %625 = vmatprep.subr.bf16.mxu0 0
      %626 = vmatpush1.bf16.msra.mxu0 0
      %627 = vmatprep.subr.bf16.mxu0 0
      %628 = vmatpush1.bf16.msra.mxu0 0
      %629 = vmatprep.subr.bf16.mxu0 0
      %630 = vmatpush1.bf16.msra.mxu0 0
      %631 = vmatprep.subr.bf16.mxu0 0
      %632 = vmatpush1.bf16.msra.mxu0 0
      %633 = vmatprep.subr.bf16.mxu0 0
      %634 = vmatpush1.bf16.msra.mxu0 0
      %635 = vmatprep.subr.bf16.mxu0 0
      %636 = vmatpush1.bf16.msra.mxu0 0
      %637 = vmatprep.subr.bf16.mxu0 0
      %638 = vmatpush1.bf16.msra.mxu0 0
      %639 = vmatprep.subr.bf16.mxu0 0
      %640 = vmatpush1.bf16.msra.mxu0 0
      %641 = vmatprep.subr.bf16.mxu0 0
      %642 = vmatpush1.bf16.msra.mxu0 0
      %643 = vmatprep.subr.bf16.mxu0 0
      %644 = vmatpush1.bf16.msra.mxu0 0
      %645 = vmatprep.subr.bf16.mxu0 0
      %646 = vmatpush1.bf16.msra.mxu0 0
      %647 = vmatprep.subr.bf16.mxu0 0
      %648 = vmatpush1.bf16.msra.mxu0 0
      %649 = vmatprep.subr.bf16.mxu0 0
      %650 = vmatpush1.bf16.msra.mxu0 0
      %651 = vmatprep.subr.bf16.mxu0 0
      %652 = vmatpush1.bf16.msra.mxu0 0
      %653 = vmatprep.mubr.bf16.mxu0 0
      %654 = vmatmul.mubr.bf16.gmra.mrb[0].mxu0 %v616
      %v655 = vpop.f32.mrb[0].mxu0
      %v656 = vadd.f32 0.0, %v655
      %v657 = vpop.f32.mrb[0].mxu0
      %v658 = vpop.f32.mrb[0].mxu0
      %v659 = vpop.f32.mrb[0].mxu0
      %660 = vdwg.mxu0
      %v661 = vadd.f32 %v609, %v656
      %v663 = vsel %vm297, %v614, 0
      %v666 = vsel %vm301, %v291, 0
      %668 = vmatprep.subr.bf16.mxu0 0
      %669 = vmatpush1.bf16.msra.mxu0 %v666
      %670 = vmatprep.subr.bf16.mxu0 0
      %671 = vmatpush1.bf16.msra.mxu0 0
      %672 = vmatprep.subr.bf16.mxu0 0
      %673 = vmatpush1.bf16.msra.mxu0 0
      %674 = vmatprep.subr.bf16.mxu0 0
      %675 = vmatpush1.bf16.msra.mxu0 0
      %676 = vmatprep.subr.bf16.mxu0 0
      %677 = vmatpush1.bf16.msra.mxu0 0
      %678 = vmatprep.subr.bf16.mxu0 0
      %679 = vmatpush1.bf16.msra.mxu0 0
      %680 = vmatprep.subr.bf16.mxu0 0
      %681 = vmatpush1.bf16.msra.mxu0 0
      %682 = vmatprep.subr.bf16.mxu0 0
      %683 = vmatpush1.bf16.msra.mxu0 0
      %684 = vmatprep.subr.bf16.mxu0 0
      %685 = vmatpush1.bf16.msra.mxu0 0
      %686 = vmatprep.subr.bf16.mxu0 0
      %687 = vmatpush1.bf16.msra.mxu0 0
      %688 = vmatprep.subr.bf16.mxu0 0
      %689 = vmatpush1.bf16.msra.mxu0 0
      %690 = vmatprep.subr.bf16.mxu0 0
      %691 = vmatpush1.bf16.msra.mxu0 0
      %692 = vmatprep.subr.bf16.mxu0 0
      %693 = vmatpush1.bf16.msra.mxu0 0
      %694 = vmatprep.subr.bf16.mxu0 0
      %695 = vmatpush1.bf16.msra.mxu0 0
      %696 = vmatprep.subr.bf16.mxu0 0
      %697 = vmatpush1.bf16.msra.mxu0 0
      %698 = vmatprep.subr.bf16.mxu0 0
      %699 = vmatpush1.bf16.msra.mxu0 0
      %700 = vmatprep.mubr.bf16.mxu0 0
      %701 = vmatmul.mubr.bf16.gmra.mrb[0].mxu0 %v663
      %v702 = vpop.f32.mrb[0].mxu0
      %v703 = vadd.f32 0.0, %v702
      %v704 = vpop.f32.mrb[0].mxu0
      %v705 = vpop.f32.mrb[0].mxu0
      %v706 = vpop.f32.mrb[0].mxu0
      %707 = vdwg.mxu0
      %v708 = vadd.f32 %v661, %v703
      %v711 = vunpack.c.l.b16 %v611
      %v712 = vunpack.c.l.b16 %v612
      %v713 = vpack.c.b16 %v712, %v711
      %v715 = vshrl.u32 %v713, 16
      %v717 = vshll.u32 %v713, 16
      %v719 = vrot.slane %v717, 1
      %v720 = vor.u32 %v715, %v719
      %v722 = vsel %vm297, %v720, 0
      %v725 = vsel %vm301, %v293, 0
      %727 = vmatprep.subr.bf16.mxu0 0
      %728 = vmatpush1.bf16.msra.mxu0 %v725
      %729 = vmatprep.subr.bf16.mxu0 0
      %730 = vmatpush1.bf16.msra.mxu0 0
      %731 = vmatprep.subr.bf16.mxu0 0
      %732 = vmatpush1.bf16.msra.mxu0 0
      %733 = vmatprep.subr.bf16.mxu0 0
      %734 = vmatpush1.bf16.msra.mxu0 0
      %735 = vmatprep.subr.bf16.mxu0 0
      %736 = vmatpush1.bf16.msra.mxu0 0
      %737 = vmatprep.subr.bf16.mxu0 0
      %738 = vmatpush1.bf16.msra.mxu0 0
      %739 = vmatprep.subr.bf16.mxu0 0
      %740 = vmatpush1.bf16.msra.mxu0 0
      %741 = vmatprep.subr.bf16.mxu0 0
      %742 = vmatpush1.bf16.msra.mxu0 0
      %743 = vmatprep.subr.bf16.mxu0 0
      %744 = vmatpush1.bf16.msra.mxu0 0
      %745 = vmatprep.subr.bf16.mxu0 0
      %746 = vmatpush1.bf16.msra.mxu0 0
      %747 = vmatprep.subr.bf16.mxu0 0
      %748 = vmatpush1.bf16.msra.mxu0 0
      %749 = vmatprep.subr.bf16.mxu0 0
      %750 = vmatpush1.bf16.msra.mxu0 0
      %751 = vmatprep.subr.bf16.mxu0 0
      %752 = vmatpush1.bf16.msra.mxu0 0
      %753 = vmatprep.subr.bf16.mxu0 0
      %754 = vmatpush1.bf16.msra.mxu0 0
      %755 = vmatprep.subr.bf16.mxu0 0
      %756 = vmatpush1.bf16.msra.mxu0 0
      %757 = vmatprep.subr.bf16.mxu0 0
      %758 = vmatpush1.bf16.msra.mxu0 0
      %759 = vmatprep.mubr.bf16.mxu0 0
      %760 = vmatmul.mubr.bf16.gmra.mrb[0].mxu0 %v722
      %v761 = vpop.f32.mrb[0].mxu0
      %v762 = vadd.f32 0.0, %v761
      %v763 = vpop.f32.mrb[0].mxu0
      %v764 = vpop.f32.mrb[0].mxu0
      %v765 = vpop.f32.mrb[0].mxu0
      %766 = vdwg.mxu0
      %v767 = vadd.f32 %v708, %v762
      %v768 = vmax.f32 %v767, 0.0
      %769 = vst [vmem:[%s268] sm:$0xff] %v768
      %v770 = vld [vmem:[%s610] sm:$0xf]
      %v771 = vld [vmem:[%s610 + $0x4] sm:$0x1]
      %v772 = vld [vmem:[%s613] sm:$0xf]
      %v774 = vsel %vm297, %v770, 0
      %776 = vmatprep.subr.bf16.mxu0 0
      %777 = vmatpush1.bf16.msra.mxu0 %v303
      %778 = vmatprep.subr.bf16.mxu0 0
      %779 = vmatpush1.bf16.msra.mxu0 0
      %780 = vmatprep.subr.bf16.mxu0 0
      %781 = vmatpush1.bf16.msra.mxu0 0
      %782 = vmatprep.subr.bf16.mxu0 0
      %783 = vmatpush1.bf16.msra.mxu0 0
      %784 = vmatprep.subr.bf16.mxu0 0
      %785 = vmatpush1.bf16.msra.mxu0 0
      %786 = vmatprep.subr.bf16.mxu0 0
      %787 = vmatpush1.bf16.msra.mxu0 0
      %788 = vmatprep.subr.bf16.mxu0 0
      %789 = vmatpush1.bf16.msra.mxu0 0
      %790 = vmatprep.subr.bf16.mxu0 0
      %791 = vmatpush1.bf16.msra.mxu0 0
      %792 = vmatprep.subr.bf16.mxu0 0
      %793 = vmatpush1.bf16.msra.mxu0 0
      %794 = vmatprep.subr.bf16.mxu0 0
      %795 = vmatpush1.bf16.msra.mxu0 0
      %796 = vmatprep.subr.bf16.mxu0 0
      %797 = vmatpush1.bf16.msra.mxu0 0
      %798 = vmatprep.subr.bf16.mxu0 0
      %799 = vmatpush1.bf16.msra.mxu0 0
      %800 = vmatprep.subr.bf16.mxu0 0
      %801 = vmatpush1.bf16.msra.mxu0 0
      %802 = vmatprep.subr.bf16.mxu0 0
      %803 = vmatpush1.bf16.msra.mxu0 0
      %804 = vmatprep.subr.bf16.mxu0 0
      %805 = vmatpush1.bf16.msra.mxu0 0
      %806 = vmatprep.subr.bf16.mxu0 0
      %807 = vmatpush1.bf16.msra.mxu0 0
      %808 = vmatprep.mubr.bf16.mxu0 0
      %809 = vmatmul.mubr.bf16.gmra.mrb[0].mxu0 %v774
      %v810 = vpop.f32.mrb[0].mxu0
      %v811 = vadd.f32 0.0, %v810
      %v812 = vpop.f32.mrb[0].mxu0
      %v813 = vpop.f32.mrb[0].mxu0
      %v814 = vpop.f32.mrb[0].mxu0
      %815 = vdwg.mxu0
      %v816 = vadd.f32 %v275, %v811
      %v818 = vsel %vm297, %v772, 0
      %820 = vmatprep.subr.bf16.mxu0 0
      %821 = vmatpush1.bf16.msra.mxu0 %v350
      %822 = vmatprep.subr.bf16.mxu0 0
      %823 = vmatpush1.bf16.msra.mxu0 0
      %824 = vmatprep.subr.bf16.mxu0 0
      %825 = vmatpush1.bf16.msra.mxu0 0
      %826 = vmatprep.subr.bf16.mxu0 0
      %827 = vmatpush1.bf16.msra.mxu0 0
      %828 = vmatprep.subr.bf16.mxu0 0
      %829 = vmatpush1.bf16.msra.mxu0 0
      %830 = vmatprep.subr.bf16.mxu0 0
      %831 = vmatpush1.bf16.msra.mxu0 0
      %832 = vmatprep.subr.bf16.mxu0 0
      %833 = vmatpush1.bf16.msra.mxu0 0
      %834 = vmatprep.subr.bf16.mxu0 0
      %835 = vmatpush1.bf16.msra.mxu0 0
      %836 = vmatprep.subr.bf16.mxu0 0
      %837 = vmatpush1.bf16.msra.mxu0 0
      %838 = vmatprep.subr.bf16.mxu0 0
      %839 = vmatpush1.bf16.msra.mxu0 0
      %840 = vmatprep.subr.bf16.mxu0 0
      %841 = vmatpush1.bf16.msra.mxu0 0
      %842 = vmatprep.subr.bf16.mxu0 0
      %843 = vmatpush1.bf16.msra.mxu0 0
      %844 = vmatprep.subr.bf16.mxu0 0
      %845 = vmatpush1.bf16.msra.mxu0 0
      %846 = vmatprep.subr.bf16.mxu0 0
      %847 = vmatpush1.bf16.msra.mxu0 0
      %848 = vmatprep.subr.bf16.mxu0 0
      %849 = vmatpush1.bf16.msra.mxu0 0
      %850 = vmatprep.subr.bf16.mxu0 0
      %851 = vmatpush1.bf16.msra.mxu0 0
      %852 = vmatprep.mubr.bf16.mxu0 0
      %853 = vmatmul.mubr.bf16.gmra.mrb[0].mxu0 %v818
      %v854 = vpop.f32.mrb[0].mxu0
      %v855 = vadd.f32 0.0, %v854
      %v856 = vpop.f32.mrb[0].mxu0
      %v857 = vpop.f32.mrb[0].mxu0
      %v858 = vpop.f32.mrb[0].mxu0
      %859 = vdwg.mxu0
      %v860 = vadd.f32 %v816, %v855
      %v863 = vunpack.c.l.b16 %v770
      %v864 = vunpack.c.l.b16 %v771
      %v865 = vpack.c.b16 %v864, %v863
      %v867 = vshrl.u32 %v865, 16
      %v869 = vshll.u32 %v865, 16
      %v871 = vrot.slane %v869, 1
      %v872 = vor.u32 %v867, %v871
      %v874 = vsel %vm297, %v872, 0
      %876 = vmatprep.subr.bf16.mxu0 0
      %877 = vmatpush1.bf16.msra.mxu0 %v409
      %878 = vmatprep.subr.bf16.mxu0 0
      %879 = vmatpush1.bf16.msra.mxu0 0
      %880 = vmatprep.subr.bf16.mxu0 0
      %881 = vmatpush1.bf16.msra.mxu0 0
      %882 = vmatprep.subr.bf16.mxu0 0
      %883 = vmatpush1.bf16.msra.mxu0 0
      %884 = vmatprep.subr.bf16.mxu0 0
      %885 = vmatpush1.bf16.msra.mxu0 0
      %886 = vmatprep.subr.bf16.mxu0 0
      %887 = vmatpush1.bf16.msra.mxu0 0
      %888 = vmatprep.subr.bf16.mxu0 0
      %889 = vmatpush1.bf16.msra.mxu0 0
      %890 = vmatprep.subr.bf16.mxu0 0
      %891 = vmatpush1.bf16.msra.mxu0 0
      %892 = vmatprep.subr.bf16.mxu0 0
      %893 = vmatpush1.bf16.msra.mxu0 0
      %894 = vmatprep.subr.bf16.mxu0 0
      %895 = vmatpush1.bf16.msra.mxu0 0
      %896 = vmatprep.subr.bf16.mxu0 0
      %897 = vmatpush1.bf16.msra.mxu0 0
      %898 = vmatprep.subr.bf16.mxu0 0
      %899 = vmatpush1.bf16.msra.mxu0 0
      %900 = vmatprep.subr.bf16.mxu0 0
      %901 = vmatpush1.bf16.msra.mxu0 0
      %902 = vmatprep.subr.bf16.mxu0 0
      %903 = vmatpush1.bf16.msra.mxu0 0
      %904 = vmatprep.subr.bf16.mxu0 0
      %905 = vmatpush1.bf16.msra.mxu0 0
      %906 = vmatprep.subr.bf16.mxu0 0
      %907 = vmatpush1.bf16.msra.mxu0 0
      %908 = vmatprep.mubr.bf16.mxu0 0
      %909 = vmatmul.mubr.bf16.gmra.mrb[0].mxu0 %v874
      %v910 = vpop.f32.mrb[0].mxu0
      %v911 = vadd.f32 0.0, %v910
      %v912 = vpop.f32.mrb[0].mxu0
      %v913 = vpop.f32.mrb[0].mxu0
      %v914 = vpop.f32.mrb[0].mxu0
      %915 = vdwg.mxu0
      %v916 = vadd.f32 %v860, %v911
      %s917 = scalar_lea.vmem %s248, 24
      %v918 = vld [vmem:[%s917] sm:$0xf]
      %v919 = vld [vmem:[%s917 + $0x4] sm:$0x1]
      %s920 = scalar_lea.vmem %s253, 24
      %v921 = vld [vmem:[%s920] sm:$0xf]
      %v923 = vsel %vm297, %v918, 0
      %925 = vmatprep.subr.bf16.mxu0 0
      %926 = vmatpush1.bf16.msra.mxu0 %v461
      %927 = vmatprep.subr.bf16.mxu0 0
      %928 = vmatpush1.bf16.msra.mxu0 0
      %929 = vmatprep.subr.bf16.mxu0 0
      %930 = vmatpush1.bf16.msra.mxu0 0
      %931 = vmatprep.subr.bf16.mxu0 0
      %932 = vmatpush1.bf16.msra.mxu0 0
      %933 = vmatprep.subr.bf16.mxu0 0
      %934 = vmatpush1.bf16.msra.mxu0 0
      %935 = vmatprep.subr.bf16.mxu0 0
      %936 = vmatpush1.bf16.msra.mxu0 0
      %937 = vmatprep.subr.bf16.mxu0 0
      %938 = vmatpush1.bf16.msra.mxu0 0
      %939 = vmatprep.subr.bf16.mxu0 0
      %940 = vmatpush1.bf16.msra.mxu0 0
      %941 = vmatprep.subr.bf16.mxu0 0
      %942 = vmatpush1.bf16.msra.mxu0 0
      %943 = vmatprep.subr.bf16.mxu0 0
      %944 = vmatpush1.bf16.msra.mxu0 0
      %945 = vmatprep.subr.bf16.mxu0 0
      %946 = vmatpush1.bf16.msra.mxu0 0
      %947 = vmatprep.subr.bf16.mxu0 0
      %948 = vmatpush1.bf16.msra.mxu0 0
      %949 = vmatprep.subr.bf16.mxu0 0
      %950 = vmatpush1.bf16.msra.mxu0 0
      %951 = vmatprep.subr.bf16.mxu0 0
      %952 = vmatpush1.bf16.msra.mxu0 0
      %953 = vmatprep.subr.bf16.mxu0 0
      %954 = vmatpush1.bf16.msra.mxu0 0
      %955 = vmatprep.subr.bf16.mxu0 0
      %956 = vmatpush1.bf16.msra.mxu0 0
      %957 = vmatprep.mubr.bf16.mxu0 0
      %958 = vmatmul.mubr.bf16.gmra.mrb[0].mxu0 %v923
      %v959 = vpop.f32.mrb[0].mxu0
      %v960 = vadd.f32 0.0, %v959
      %v961 = vpop.f32.mrb[0].mxu0
      %v962 = vpop.f32.mrb[0].mxu0
      %v963 = vpop.f32.mrb[0].mxu0
      %964 = vdwg.mxu0
      %v965 = vadd.f32 %v916, %v960
      %v967 = vsel %vm297, %v921, 0
      %969 = vmatprep.subr.bf16.mxu0 0
      %970 = vmatpush1.bf16.msra.mxu0 %v508
      %971 = vmatprep.subr.bf16.mxu0 0
      %972 = vmatpush1.bf16.msra.mxu0 0
      %973 = vmatprep.subr.bf16.mxu0 0
      %974 = vmatpush1.bf16.msra.mxu0 0
      %975 = vmatprep.subr.bf16.mxu0 0
      %976 = vmatpush1.bf16.msra.mxu0 0
      %977 = vmatprep.subr.bf16.mxu0 0
      %978 = vmatpush1.bf16.msra.mxu0 0
      %979 = vmatprep.subr.bf16.mxu0 0
      %980 = vmatpush1.bf16.msra.mxu0 0
      %981 = vmatprep.subr.bf16.mxu0 0
      %982 = vmatpush1.bf16.msra.mxu0 0
      %983 = vmatprep.subr.bf16.mxu0 0
      %984 = vmatpush1.bf16.msra.mxu0 0
      %985 = vmatprep.subr.bf16.mxu0 0
      %986 = vmatpush1.bf16.msra.mxu0 0
      %987 = vmatprep.subr.bf16.mxu0 0
      %988 = vmatpush1.bf16.msra.mxu0 0
      %989 = vmatprep.subr.bf16.mxu0 0
      %990 = vmatpush1.bf16.msra.mxu0 0
      %991 = vmatprep.subr.bf16.mxu0 0
      %992 = vmatpush1.bf16.msra.mxu0 0
      %993 = vmatprep.subr.bf16.mxu0 0
      %994 = vmatpush1.bf16.msra.mxu0 0
      %995 = vmatprep.subr.bf16.mxu0 0
      %996 = vmatpush1.bf16.msra.mxu0 0
      %997 = vmatprep.subr.bf16.mxu0 0
      %998 = vmatpush1.bf16.msra.mxu0 0
      %999 = vmatprep.subr.bf16.mxu0 0
      %1000 = vmatpush1.bf16.msra.mxu0 0
      %1001 = vmatprep.mubr.bf16.mxu0 0
      %1002 = vmatmul.mubr.bf16.gmra.mrb[0].mxu0 %v967
      %v1003 = vpop.f32.mrb[0].mxu0
      %v1004 = vadd.f32 0.0, %v1003
      %v1005 = vpop.f32.mrb[0].mxu0
      %v1006 = vpop.f32.mrb[0].mxu0
      %v1007 = vpop.f32.mrb[0].mxu0
      %1008 = vdwg.mxu0
      %v1009 = vadd.f32 %v965, %v1004
      %v1012 = vunpack.c.l.b16 %v918
      %v1013 = vunpack.c.l.b16 %v919
      %v1014 = vpack.c.b16 %v1013, %v1012
      %v1016 = vshrl.u32 %v1014, 16
      %v1018 = vshll.u32 %v1014, 16
      %v1020 = vrot.slane %v1018, 1
      %v1021 = vor.u32 %v1016, %v1020
      %v1023 = vsel %vm297, %v1021, 0
      %1025 = vmatprep.subr.bf16.mxu0 0
      %1026 = vmatpush1.bf16.msra.mxu0 %v567
      %1027 = vmatprep.subr.bf16.mxu0 0
      %1028 = vmatpush1.bf16.msra.mxu0 0
      %1029 = vmatprep.subr.bf16.mxu0 0
      %1030 = vmatpush1.bf16.msra.mxu0 0
      %1031 = vmatprep.subr.bf16.mxu0 0
      %1032 = vmatpush1.bf16.msra.mxu0 0
      %1033 = vmatprep.subr.bf16.mxu0 0
      %1034 = vmatpush1.bf16.msra.mxu0 0
      %1035 = vmatprep.subr.bf16.mxu0 0
      %1036 = vmatpush1.bf16.msra.mxu0 0
      %1037 = vmatprep.subr.bf16.mxu0 0
      %1038 = vmatpush1.bf16.msra.mxu0 0
      %1039 = vmatprep.subr.bf16.mxu0 0
      %1040 = vmatpush1.bf16.msra.mxu0 0
      %1041 = vmatprep.subr.bf16.mxu0 0
      %1042 = vmatpush1.bf16.msra.mxu0 0
      %1043 = vmatprep.subr.bf16.mxu0 0
      %1044 = vmatpush1.bf16.msra.mxu0 0
      %1045 = vmatprep.subr.bf16.mxu0 0
      %1046 = vmatpush1.bf16.msra.mxu0 0
      %1047 = vmatprep.subr.bf16.mxu0 0
      %1048 = vmatpush1.bf16.msra.mxu0 0
      %1049 = vmatprep.subr.bf16.mxu0 0
      %1050 = vmatpush1.bf16.msra.mxu0 0
      %1051 = vmatprep.subr.bf16.mxu0 0
      %1052 = vmatpush1.bf16.msra.mxu0 0
      %1053 = vmatprep.subr.bf16.mxu0 0
      %1054 = vmatpush1.bf16.msra.mxu0 0
      %1055 = vmatprep.subr.bf16.mxu0 0
      %1056 = vmatpush1.bf16.msra.mxu0 0
      %1057 = vmatprep.mubr.bf16.mxu0 0
      %1058 = vmatmul.mubr.bf16.gmra.mrb[0].mxu0 %v1023
      %v1059 = vpop.f32.mrb[0].mxu0
      %v1060 = vadd.f32 0.0, %v1059
      %v1061 = vpop.f32.mrb[0].mxu0
      %v1062 = vpop.f32.mrb[0].mxu0
      %v1063 = vpop.f32.mrb[0].mxu0
      %1064 = vdwg.mxu0
      %v1065 = vadd.f32 %v1009, %v1060
      %s1066 = scalar_lea.vmem %s248, 32
      %v1067 = vld [vmem:[%s1066] sm:$0xf]
      %v1068 = vld [vmem:[%s1066 + $0x4] sm:$0x1]
      %s1069 = scalar_lea.vmem %s253, 32
      %v1070 = vld [vmem:[%s1069] sm:$0xf]
      %v1072 = vsel %vm297, %v1067, 0
      %1074 = vmatprep.subr.bf16.mxu0 0
      %1075 = vmatpush1.bf16.msra.mxu0 %v619
      %1076 = vmatprep.subr.bf16.mxu0 0
      %1077 = vmatpush1.bf16.msra.mxu0 0
      %1078 = vmatprep.subr.bf16.mxu0 0
      %1079 = vmatpush1.bf16.msra.mxu0 0
      %1080 = vmatprep.subr.bf16.mxu0 0
      %1081 = vmatpush1.bf16.msra.mxu0 0
      %1082 = vmatprep.subr.bf16.mxu0 0
      %1083 = vmatpush1.bf16.msra.mxu0 0
      %1084 = vmatprep.subr.bf16.mxu0 0
      %1085 = vmatpush1.bf16.msra.mxu0 0
      %1086 = vmatprep.subr.bf16.mxu0 0
      %1087 = vmatpush1.bf16.msra.mxu0 0
      %1088 = vmatprep.subr.bf16.mxu0 0
      %1089 = vmatpush1.bf16.msra.mxu0 0
      %1090 = vmatprep.subr.bf16.mxu0 0
      %1091 = vmatpush1.bf16.msra.mxu0 0
      %1092 = vmatprep.subr.bf16.mxu0 0
      %1093 = vmatpush1.bf16.msra.mxu0 0
      %1094 = vmatprep.subr.bf16.mxu0 0
      %1095 = vmatpush1.bf16.msra.mxu0 0
      %1096 = vmatprep.subr.bf16.mxu0 0
      %1097 = vmatpush1.bf16.msra.mxu0 0
      %1098 = vmatprep.subr.bf16.mxu0 0
      %1099 = vmatpush1.bf16.msra.mxu0 0
      %1100 = vmatprep.subr.bf16.mxu0 0
      %1101 = vmatpush1.bf16.msra.mxu0 0
      %1102 = vmatprep.subr.bf16.mxu0 0
      %1103 = vmatpush1.bf16.msra.mxu0 0
      %1104 = vmatprep.subr.bf16.mxu0 0
      %1105 = vmatpush1.bf16.msra.mxu0 0
      %1106 = vmatprep.mubr.bf16.mxu0 0
      %1107 = vmatmul.mubr.bf16.gmra.mrb[0].mxu0 %v1072
      %v1108 = vpop.f32.mrb[0].mxu0
      %v1109 = vadd.f32 0.0, %v1108
      %v1110 = vpop.f32.mrb[0].mxu0
      %v1111 = vpop.f32.mrb[0].mxu0
      %v1112 = vpop.f32.mrb[0].mxu0
      %1113 = vdwg.mxu0
      %v1114 = vadd.f32 %v1065, %v1109
      %v1116 = vsel %vm297, %v1070, 0
      %1118 = vmatprep.subr.bf16.mxu0 0
      %1119 = vmatpush1.bf16.msra.mxu0 %v666
      %1120 = vmatprep.subr.bf16.mxu0 0
      %1121 = vmatpush1.bf16.msra.mxu0 0
      %1122 = vmatprep.subr.bf16.mxu0 0
      %1123 = vmatpush1.bf16.msra.mxu0 0
      %1124 = vmatprep.subr.bf16.mxu0 0
      %1125 = vmatpush1.bf16.msra.mxu0 0
      %1126 = vmatprep.subr.bf16.mxu0 0
      %1127 = vmatpush1.bf16.msra.mxu0 0
      %1128 = vmatprep.subr.bf16.mxu0 0
      %1129 = vmatpush1.bf16.msra.mxu0 0
      %1130 = vmatprep.subr.bf16.mxu0 0
      %1131 = vmatpush1.bf16.msra.mxu0 0
      %1132 = vmatprep.subr.bf16.mxu0 0
      %1133 = vmatpush1.bf16.msra.mxu0 0
      %1134 = vmatprep.subr.bf16.mxu0 0
      %1135 = vmatpush1.bf16.msra.mxu0 0
      %1136 = vmatprep.subr.bf16.mxu0 0
      %1137 = vmatpush1.bf16.msra.mxu0 0
      %1138 = vmatprep.subr.bf16.mxu0 0
      %1139 = vmatpush1.bf16.msra.mxu0 0
      %1140 = vmatprep.subr.bf16.mxu0 0
      %1141 = vmatpush1.bf16.msra.mxu0 0
      %1142 = vmatprep.subr.bf16.mxu0 0
      %1143 = vmatpush1.bf16.msra.mxu0 0
      %1144 = vmatprep.subr.bf16.mxu0 0
      %1145 = vmatpush1.bf16.msra.mxu0 0
      %1146 = vmatprep.subr.bf16.mxu0 0
      %1147 = vmatpush1.bf16.msra.mxu0 0
      %1148 = vmatprep.subr.bf16.mxu0 0
      %1149 = vmatpush1.bf16.msra.mxu0 0
      %1150 = vmatprep.mubr.bf16.mxu0 0
      %1151 = vmatmul.mubr.bf16.gmra.mrb[0].mxu0 %v1116
      %v1152 = vpop.f32.mrb[0].mxu0
      %v1153 = vadd.f32 0.0, %v1152
      %v1154 = vpop.f32.mrb[0].mxu0
      %v1155 = vpop.f32.mrb[0].mxu0
      %v1156 = vpop.f32.mrb[0].mxu0
      %1157 = vdwg.mxu0
      %v1158 = vadd.f32 %v1114, %v1153
      %v1161 = vunpack.c.l.b16 %v1067
      %v1162 = vunpack.c.l.b16 %v1068
      %v1163 = vpack.c.b16 %v1162, %v1161
      %v1165 = vshrl.u32 %v1163, 16
      %v1167 = vshll.u32 %v1163, 16
      %v1169 = vrot.slane %v1167, 1
      %v1170 = vor.u32 %v1165, %v1169
      %v1172 = vsel %vm297, %v1170, 0
      %1174 = vmatprep.subr.bf16.mxu0 0
      %1175 = vmatpush1.bf16.msra.mxu0 %v725
      %1176 = vmatprep.subr.bf16.mxu0 0
      %1177 = vmatpush1.bf16.msra.mxu0 0
      %1178 = vmatprep.subr.bf16.mxu0 0
      %1179 = vmatpush1.bf16.msra.mxu0 0
      %1180 = vmatprep.subr.bf16.mxu0 0
      %1181 = vmatpush1.bf16.msra.mxu0 0
      %1182 = vmatprep.subr.bf16.mxu0 0
      %1183 = vmatpush1.bf16.msra.mxu0 0
      %1184 = vmatprep.subr.bf16.mxu0 0
      %1185 = vmatpush1.bf16.msra.mxu0 0
      %1186 = vmatprep.subr.bf16.mxu0 0
      %1187 = vmatpush1.bf16.msra.mxu0 0
      %1188 = vmatprep.subr.bf16.mxu0 0
      %1189 = vmatpush1.bf16.msra.mxu0 0
      %1190 = vmatprep.subr.bf16.mxu0 0
      %1191 = vmatpush1.bf16.msra.mxu0 0
      %1192 = vmatprep.subr.bf16.mxu0 0
      %1193 = vmatpush1.bf16.msra.mxu0 0
      %1194 = vmatprep.subr.bf16.mxu0 0
      %1195 = vmatpush1.bf16.msra.mxu0 0
      %1196 = vmatprep.subr.bf16.mxu0 0
      %1197 = vmatpush1.bf16.msra.mxu0 0
      %1198 = vmatprep.subr.bf16.mxu0 0
      %1199 = vmatpush1.bf16.msra.mxu0 0
      %1200 = vmatprep.subr.bf16.mxu0 0
      %1201 = vmatpush1.bf16.msra.mxu0 0
      %1202 = vmatprep.subr.bf16.mxu0 0
      %1203 = vmatpush1.bf16.msra.mxu0 0
      %1204 = vmatprep.subr.bf16.mxu0 0
      %1205 = vmatpush1.bf16.msra.mxu0 0
      %1206 = vmatprep.mubr.bf16.mxu0 0
      %1207 = vmatmul.mubr.bf16.gmra.mrb[0].mxu0 %v1172
      %v1208 = vpop.f32.mrb[0].mxu0
      %v1209 = vadd.f32 0.0, %v1208
      %v1210 = vpop.f32.mrb[0].mxu0
      %v1211 = vpop.f32.mrb[0].mxu0
      %v1212 = vpop.f32.mrb[0].mxu0
      %1213 = vdwg.mxu0
      %v1214 = vadd.f32 %v1158, %v1209
      %v1215 = vmax.f32 %v1214, 0.0
      %s1216 = scalar_lea.vmem %s268, 8
      %1217 = vst [vmem:[%s1216] sm:$0xff] %v1215
      %v1218 = vld [vmem:[%s1066] sm:$0xf]
      %v1219 = vld [vmem:[%s1066 + $0x4] sm:$0x1]
      %v1220 = vld [vmem:[%s1069] sm:$0xf]
      %v1222 = vsel %vm297, %v1218, 0
      %1224 = vmatprep.subr.bf16.mxu0 0
      %1225 = vmatpush1.bf16.msra.mxu0 %v303
      %1226 = vmatprep.subr.bf16.mxu0 0
      %1227 = vmatpush1.bf16.msra.mxu0 0
      %1228 = vmatprep.subr.bf16.mxu0 0
      %1229 = vmatpush1.bf16.msra.mxu0 0
      %1230 = vmatprep.subr.bf16.mxu0 0
      %1231 = vmatpush1.bf16.msra.mxu0 0
      %1232 = vmatprep.subr.bf16.mxu0 0
      %1233 = vmatpush1.bf16.msra.mxu0 0
      %1234 = vmatprep.subr.bf16.mxu0 0
      %1235 = vmatpush1.bf16.msra.mxu0 0
      %1236 = vmatprep.subr.bf16.mxu0 0
      %1237 = vmatpush1.bf16.msra.mxu0 0
      %1238 = vmatprep.subr.bf16.mxu0 0
      %1239 = vmatpush1.bf16.msra.mxu0 0
      %1240 = vmatprep.subr.bf16.mxu0 0
      %1241 = vmatpush1.bf16.msra.mxu0 0
      %1242 = vmatprep.subr.bf16.mxu0 0
      %1243 = vmatpush1.bf16.msra.mxu0 0
      %1244 = vmatprep.subr.bf16.mxu0 0
      %1245 = vmatpush1.bf16.msra.mxu0 0
      %1246 = vmatprep.subr.bf16.mxu0 0
      %1247 = vmatpush1.bf16.msra.mxu0 0
      %1248 = vmatprep.subr.bf16.mxu0 0
      %1249 = vmatpush1.bf16.msra.mxu0 0
      %1250 = vmatprep.subr.bf16.mxu0 0
      %1251 = vmatpush1.bf16.msra.mxu0 0
      %1252 = vmatprep.subr.bf16.mxu0 0
      %1253 = vmatpush1.bf16.msra.mxu0 0
      %1254 = vmatprep.subr.bf16.mxu0 0
      %1255 = vmatpush1.bf16.msra.mxu0 0
      %1256 = vmatprep.mubr.bf16.mxu0 0
      %1257 = vmatmul.mubr.bf16.gmra.mrb[0].mxu0 %v1222
      %v1258 = vpop.f32.mrb[0].mxu0
      %v1259 = vadd.f32 0.0, %v1258
      %v1260 = vpop.f32.mrb[0].mxu0
      %v1261 = vpop.f32.mrb[0].mxu0
      %v1262 = vpop.f32.mrb[0].mxu0
      %1263 = vdwg.mxu0
      %v1264 = vadd.f32 %v275, %v1259
      %v1266 = vsel %vm297, %v1220, 0
      %1268 = vmatprep.subr.bf16.mxu0 0
      %1269 = vmatpush1.bf16.msra.mxu0 %v350
      %1270 = vmatprep.subr.bf16.mxu0 0
      %1271 = vmatpush1.bf16.msra.mxu0 0
      %1272 = vmatprep.subr.bf16.mxu0 0
      %1273 = vmatpush1.bf16.msra.mxu0 0
      %1274 = vmatprep.subr.bf16.mxu0 0
      %1275 = vmatpush1.bf16.msra.mxu0 0
      %1276 = vmatprep.subr.bf16.mxu0 0
      %1277 = vmatpush1.bf16.msra.mxu0 0
      %1278 = vmatprep.subr.bf16.mxu0 0
      %1279 = vmatpush1.bf16.msra.mxu0 0
      %1280 = vmatprep.subr.bf16.mxu0 0
      %1281 = vmatpush1.bf16.msra.mxu0 0
      %1282 = vmatprep.subr.bf16.mxu0 0
      %1283 = vmatpush1.bf16.msra.mxu0 0
      %1284 = vmatprep.subr.bf16.mxu0 0
      %1285 = vmatpush1.bf16.msra.mxu0 0
      %1286 = vmatprep.subr.bf16.mxu0 0
      %1287 = vmatpush1.bf16.msra.mxu0 0
      %1288 = vmatprep.subr.bf16.mxu0 0
      %1289 = vmatpush1.bf16.msra.mxu0 0
      %1290 = vmatprep.subr.bf16.mxu0 0
      %1291 = vmatpush1.bf16.msra.mxu0 0
      %1292 = vmatprep.subr.bf16.mxu0 0
      %1293 = vmatpush1.bf16.msra.mxu0 0
      %1294 = vmatprep.subr.bf16.mxu0 0
      %1295 = vmatpush1.bf16.msra.mxu0 0
      %1296 = vmatprep.subr.bf16.mxu0 0
      %1297 = vmatpush1.bf16.msra.mxu0 0
      %1298 = vmatprep.subr.bf16.mxu0 0
      %1299 = vmatpush1.bf16.msra.mxu0 0
      %1300 = vmatprep.mubr.bf16.mxu0 0
      %1301 = vmatmul.mubr.bf16.gmra.mrb[0].mxu0 %v1266
      %v1302 = vpop.f32.mrb[0].mxu0
      %v1303 = vadd.f32 0.0, %v1302
      %v1304 = vpop.f32.mrb[0].mxu0
      %v1305 = vpop.f32.mrb[0].mxu0
      %v1306 = vpop.f32.mrb[0].mxu0
      %1307 = vdwg.mxu0
      %v1308 = vadd.f32 %v1264, %v1303
      %v1311 = vunpack.c.l.b16 %v1218
      %v1312 = vunpack.c.l.b16 %v1219
      %v1313 = vpack.c.b16 %v1312, %v1311
      %v1315 = vshrl.u32 %v1313, 16
      %v1317 = vshll.u32 %v1313, 16
      %v1319 = vrot.slane %v1317, 1
      %v1320 = vor.u32 %v1315, %v1319
      %v1322 = vsel %vm297, %v1320, 0
      %1324 = vmatprep.subr.bf16.mxu0 0
      %1325 = vmatpush1.bf16.msra.mxu0 %v409
      %1326 = vmatprep.subr.bf16.mxu0 0
      %1327 = vmatpush1.bf16.msra.mxu0 0
      %1328 = vmatprep.subr.bf16.mxu0 0
      %1329 = vmatpush1.bf16.msra.mxu0 0
      %1330 = vmatprep.subr.bf16.mxu0 0
      %1331 = vmatpush1.bf16.msra.mxu0 0
      %1332 = vmatprep.subr.bf16.mxu0 0
      %1333 = vmatpush1.bf16.msra.mxu0 0
      %1334 = vmatprep.subr.bf16.mxu0 0
      %1335 = vmatpush1.bf16.msra.mxu0 0
      %1336 = vmatprep.subr.bf16.mxu0 0
      %1337 = vmatpush1.bf16.msra.mxu0 0
      %1338 = vmatprep.subr.bf16.mxu0 0
      %1339 = vmatpush1.bf16.msra.mxu0 0
      %1340 = vmatprep.subr.bf16.mxu0 0
      %1341 = vmatpush1.bf16.msra.mxu0 0
      %1342 = vmatprep.subr.bf16.mxu0 0
      %1343 = vmatpush1.bf16.msra.mxu0 0
      %1344 = vmatprep.subr.bf16.mxu0 0
      %1345 = vmatpush1.bf16.msra.mxu0 0
      %1346 = vmatprep.subr.bf16.mxu0 0
      %1347 = vmatpush1.bf16.msra.mxu0 0
      %1348 = vmatprep.subr.bf16.mxu0 0
      %1349 = vmatpush1.bf16.msra.mxu0 0
      %1350 = vmatprep.subr.bf16.mxu0 0
      %1351 = vmatpush1.bf16.msra.mxu0 0
      %1352 = vmatprep.subr.bf16.mxu0 0
      %1353 = vmatpush1.bf16.msra.mxu0 0
      %1354 = vmatprep.subr.bf16.mxu0 0
      %1355 = vmatpush1.bf16.msra.mxu0 0
      %1356 = vmatprep.mubr.bf16.mxu0 0
      %1357 = vmatmul.mubr.bf16.gmra.mrb[0].mxu0 %v1322
      %v1358 = vpop.f32.mrb[0].mxu0
      %v1359 = vadd.f32 0.0, %v1358
      %v1360 = vpop.f32.mrb[0].mxu0
      %v1361 = vpop.f32.mrb[0].mxu0
      %v1362 = vpop.f32.mrb[0].mxu0
      %1363 = vdwg.mxu0
      %v1364 = vadd.f32 %v1308, %v1359
      %s1365 = scalar_lea.vmem %s248, 40
      %v1366 = vld [vmem:[%s1365] sm:$0xf]
      %v1367 = vld [vmem:[%s1365 + $0x4] sm:$0x1]
      %s1368 = scalar_lea.vmem %s253, 40
      %v1369 = vld [vmem:[%s1368] sm:$0xf]
      %v1371 = vsel %vm297, %v1366, 0
      %1373 = vmatprep.subr.bf16.mxu0 0
      %1374 = vmatpush1.bf16.msra.mxu0 %v461
      %1375 = vmatprep.subr.bf16.mxu0 0
      %1376 = vmatpush1.bf16.msra.mxu0 0
      %1377 = vmatprep.subr.bf16.mxu0 0
      %1378 = vmatpush1.bf16.msra.mxu0 0
      %1379 = vmatprep.subr.bf16.mxu0 0
      %1380 = vmatpush1.bf16.msra.mxu0 0
      %1381 = vmatprep.subr.bf16.mxu0 0
      %1382 = vmatpush1.bf16.msra.mxu0 0
      %1383 = vmatprep.subr.bf16.mxu0 0
      %1384 = vmatpush1.bf16.msra.mxu0 0
      %1385 = vmatprep.subr.bf16.mxu0 0
      %1386 = vmatpush1.bf16.msra.mxu0 0
      %1387 = vmatprep.subr.bf16.mxu0 0
      %1388 = vmatpush1.bf16.msra.mxu0 0
      %1389 = vmatprep.subr.bf16.mxu0 0
      %1390 = vmatpush1.bf16.msra.mxu0 0
      %1391 = vmatprep.subr.bf16.mxu0 0
      %1392 = vmatpush1.bf16.msra.mxu0 0
      %1393 = vmatprep.subr.bf16.mxu0 0
      %1394 = vmatpush1.bf16.msra.mxu0 0
      %1395 = vmatprep.subr.bf16.mxu0 0
      %1396 = vmatpush1.bf16.msra.mxu0 0
      %1397 = vmatprep.subr.bf16.mxu0 0
      %1398 = vmatpush1.bf16.msra.mxu0 0
      %1399 = vmatprep.subr.bf16.mxu0 0
      %1400 = vmatpush1.bf16.msra.mxu0 0
      %1401 = vmatprep.subr.bf16.mxu0 0
      %1402 = vmatpush1.bf16.msra.mxu0 0
      %1403 = vmatprep.subr.bf16.mxu0 0
      %1404 = vmatpush1.bf16.msra.mxu0 0
      %1405 = vmatprep.mubr.bf16.mxu0 0
      %1406 = vmatmul.mubr.bf16.gmra.mrb[0].mxu0 %v1371
      %v1407 = vpop.f32.mrb[0].mxu0
      %v1408 = vadd.f32 0.0, %v1407
      %v1409 = vpop.f32.mrb[0].mxu0
      %v1410 = vpop.f32.mrb[0].mxu0
      %v1411 = vpop.f32.mrb[0].mxu0
      %1412 = vdwg.mxu0
      %v1413 = vadd.f32 %v1364, %v1408
      %v1415 = vsel %vm297, %v1369, 0
      %1417 = vmatprep.subr.bf16.mxu0 0
      %1418 = vmatpush1.bf16.msra.mxu0 %v508
      %1419 = vmatprep.subr.bf16.mxu0 0
      %1420 = vmatpush1.bf16.msra.mxu0 0
      %1421 = vmatprep.subr.bf16.mxu0 0
      %1422 = vmatpush1.bf16.msra.mxu0 0
      %1423 = vmatprep.subr.bf16.mxu0 0
      %1424 = vmatpush1.bf16.msra.mxu0 0
      %1425 = vmatprep.subr.bf16.mxu0 0
      %1426 = vmatpush1.bf16.msra.mxu0 0
      %1427 = vmatprep.subr.bf16.mxu0 0
      %1428 = vmatpush1.bf16.msra.mxu0 0
      %1429 = vmatprep.subr.bf16.mxu0 0
      %1430 = vmatpush1.bf16.msra.mxu0 0
      %1431 = vmatprep.subr.bf16.mxu0 0
      %1432 = vmatpush1.bf16.msra.mxu0 0
      %1433 = vmatprep.subr.bf16.mxu0 0
      %1434 = vmatpush1.bf16.msra.mxu0 0
      %1435 = vmatprep.subr.bf16.mxu0 0
      %1436 = vmatpush1.bf16.msra.mxu0 0
      %1437 = vmatprep.subr.bf16.mxu0 0
      %1438 = vmatpush1.bf16.msra.mxu0 0
      %1439 = vmatprep.subr.bf16.mxu0 0
      %1440 = vmatpush1.bf16.msra.mxu0 0
      %1441 = vmatprep.subr.bf16.mxu0 0
      %1442 = vmatpush1.bf16.msra.mxu0 0
      %1443 = vmatprep.subr.bf16.mxu0 0
      %1444 = vmatpush1.bf16.msra.mxu0 0
      %1445 = vmatprep.subr.bf16.mxu0 0
      %1446 = vmatpush1.bf16.msra.mxu0 0
      %1447 = vmatprep.subr.bf16.mxu0 0
      %1448 = vmatpush1.bf16.msra.mxu0 0
      %1449 = vmatprep.mubr.bf16.mxu0 0
      %1450 = vmatmul.mubr.bf16.gmra.mrb[0].mxu0 %v1415
      %v1451 = vpop.f32.mrb[0].mxu0
      %v1452 = vadd.f32 0.0, %v1451
      %v1453 = vpop.f32.mrb[0].mxu0
      %v1454 = vpop.f32.mrb[0].mxu0
      %v1455 = vpop.f32.mrb[0].mxu0
      %1456 = vdwg.mxu0
      %v1457 = vadd.f32 %v1413, %v1452
      %v1460 = vunpack.c.l.b16 %v1366
      %v1461 = vunpack.c.l.b16 %v1367
      %v1462 = vpack.c.b16 %v1461, %v1460
      %v1464 = vshrl.u32 %v1462, 16
      %v1466 = vshll.u32 %v1462, 16
      %v1468 = vrot.slane %v1466, 1
      %v1469 = vor.u32 %v1464, %v1468
      %v1471 = vsel %vm297, %v1469, 0
      %1473 = vmatprep.subr.bf16.mxu0 0
      %1474 = vmatpush1.bf16.msra.mxu0 %v567
      %1475 = vmatprep.subr.bf16.mxu0 0
      %1476 = vmatpush1.bf16.msra.mxu0 0
      %1477 = vmatprep.subr.bf16.mxu0 0
      %1478 = vmatpush1.bf16.msra.mxu0 0
      %1479 = vmatprep.subr.bf16.mxu0 0
      %1480 = vmatpush1.bf16.msra.mxu0 0
      %1481 = vmatprep.subr.bf16.mxu0 0
      %1482 = vmatpush1.bf16.msra.mxu0 0
      %1483 = vmatprep.subr.bf16.mxu0 0
      %1484 = vmatpush1.bf16.msra.mxu0 0
      %1485 = vmatprep.subr.bf16.mxu0 0
      %1486 = vmatpush1.bf16.msra.mxu0 0
      %1487 = vmatprep.subr.bf16.mxu0 0
      %1488 = vmatpush1.bf16.msra.mxu0 0
      %1489 = vmatprep.subr.bf16.mxu0 0
      %1490 = vmatpush1.bf16.msra.mxu0 0
      %1491 = vmatprep.subr.bf16.mxu0 0
      %1492 = vmatpush1.bf16.msra.mxu0 0
      %1493 = vmatprep.subr.bf16.mxu0 0
      %1494 = vmatpush1.bf16.msra.mxu0 0
      %1495 = vmatprep.subr.bf16.mxu0 0
      %1496 = vmatpush1.bf16.msra.mxu0 0
      %1497 = vmatprep.subr.bf16.mxu0 0
      %1498 = vmatpush1.bf16.msra.mxu0 0
      %1499 = vmatprep.subr.bf16.mxu0 0
      %1500 = vmatpush1.bf16.msra.mxu0 0
      %1501 = vmatprep.subr.bf16.mxu0 0
      %1502 = vmatpush1.bf16.msra.mxu0 0
      %1503 = vmatprep.subr.bf16.mxu0 0
      %1504 = vmatpush1.bf16.msra.mxu0 0
      %1505 = vmatprep.mubr.bf16.mxu0 0
      %1506 = vmatmul.mubr.bf16.gmra.mrb[0].mxu0 %v1471
      %v1507 = vpop.f32.mrb[0].mxu0
      %v1508 = vadd.f32 0.0, %v1507
      %v1509 = vpop.f32.mrb[0].mxu0
      %v1510 = vpop.f32.mrb[0].mxu0
      %v1511 = vpop.f32.mrb[0].mxu0
      %1512 = vdwg.mxu0
      %v1513 = vadd.f32 %v1457, %v1508
      %s1514 = scalar_lea.vmem %s248, 48
      %v1515 = vld [vmem:[%s1514] sm:$0xf]
      %v1516 = vld [vmem:[%s1514 + $0x4] sm:$0x1]
      %s1517 = scalar_lea.vmem %s253, 48
      %v1518 = vld [vmem:[%s1517] sm:$0xf]
      %v1520 = vsel %vm297, %v1515, 0
      %1522 = vmatprep.subr.bf16.mxu0 0
      %1523 = vmatpush1.bf16.msra.mxu0 %v619
      %1524 = vmatprep.subr.bf16.mxu0 0
      %1525 = vmatpush1.bf16.msra.mxu0 0
      %1526 = vmatprep.subr.bf16.mxu0 0
      %1527 = vmatpush1.bf16.msra.mxu0 0
      %1528 = vmatprep.subr.bf16.mxu0 0
      %1529 = vmatpush1.bf16.msra.mxu0 0
      %1530 = vmatprep.subr.bf16.mxu0 0
      %1531 = vmatpush1.bf16.msra.mxu0 0
      %1532 = vmatprep.subr.bf16.mxu0 0
      %1533 = vmatpush1.bf16.msra.mxu0 0
      %1534 = vmatprep.subr.bf16.mxu0 0
      %1535 = vmatpush1.bf16.msra.mxu0 0
      %1536 = vmatprep.subr.bf16.mxu0 0
      %1537 = vmatpush1.bf16.msra.mxu0 0
      %1538 = vmatprep.subr.bf16.mxu0 0
      %1539 = vmatpush1.bf16.msra.mxu0 0
      %1540 = vmatprep.subr.bf16.mxu0 0
      %1541 = vmatpush1.bf16.msra.mxu0 0
      %1542 = vmatprep.subr.bf16.mxu0 0
      %1543 = vmatpush1.bf16.msra.mxu0 0
      %1544 = vmatprep.subr.bf16.mxu0 0
      %1545 = vmatpush1.bf16.msra.mxu0 0
      %1546 = vmatprep.subr.bf16.mxu0 0
      %1547 = vmatpush1.bf16.msra.mxu0 0
      %1548 = vmatprep.subr.bf16.mxu0 0
      %1549 = vmatpush1.bf16.msra.mxu0 0
      %1550 = vmatprep.subr.bf16.mxu0 0
      %1551 = vmatpush1.bf16.msra.mxu0 0
      %1552 = vmatprep.subr.bf16.mxu0 0
      %1553 = vmatpush1.bf16.msra.mxu0 0
      %1554 = vmatprep.mubr.bf16.mxu0 0
      %1555 = vmatmul.mubr.bf16.gmra.mrb[0].mxu0 %v1520
      %v1556 = vpop.f32.mrb[0].mxu0
      %v1557 = vadd.f32 0.0, %v1556
      %v1558 = vpop.f32.mrb[0].mxu0
      %v1559 = vpop.f32.mrb[0].mxu0
      %v1560 = vpop.f32.mrb[0].mxu0
      %1561 = vdwg.mxu0
      %v1562 = vadd.f32 %v1513, %v1557
      %v1564 = vsel %vm297, %v1518, 0
      %1566 = vmatprep.subr.bf16.mxu0 0
      %1567 = vmatpush1.bf16.msra.mxu0 %v666
      %1568 = vmatprep.subr.bf16.mxu0 0
      %1569 = vmatpush1.bf16.msra.mxu0 0
      %1570 = vmatprep.subr.bf16.mxu0 0
      %1571 = vmatpush1.bf16.msra.mxu0 0
      %1572 = vmatprep.subr.bf16.mxu0 0
      %1573 = vmatpush1.bf16.msra.mxu0 0
      %1574 = vmatprep.subr.bf16.mxu0 0
      %1575 = vmatpush1.bf16.msra.mxu0 0
      %1576 = vmatprep.subr.bf16.mxu0 0
      %1577 = vmatpush1.bf16.msra.mxu0 0
      %1578 = vmatprep.subr.bf16.mxu0 0
      %1579 = vmatpush1.bf16.msra.mxu0 0
      %1580 = vmatprep.subr.bf16.mxu0 0
      %1581 = vmatpush1.bf16.msra.mxu0 0
      %1582 = vmatprep.subr.bf16.mxu0 0
      %1583 = vmatpush1.bf16.msra.mxu0 0
      %1584 = vmatprep.subr.bf16.mxu0 0
      %1585 = vmatpush1.bf16.msra.mxu0 0
      %1586 = vmatprep.subr.bf16.mxu0 0
      %1587 = vmatpush1.bf16.msra.mxu0 0
      %1588 = vmatprep.subr.bf16.mxu0 0
      %1589 = vmatpush1.bf16.msra.mxu0 0
      %1590 = vmatprep.subr.bf16.mxu0 0
      %1591 = vmatpush1.bf16.msra.mxu0 0
      %1592 = vmatprep.subr.bf16.mxu0 0
      %1593 = vmatpush1.bf16.msra.mxu0 0
      %1594 = vmatprep.subr.bf16.mxu0 0
      %1595 = vmatpush1.bf16.msra.mxu0 0
      %1596 = vmatprep.subr.bf16.mxu0 0
      %1597 = vmatpush1.bf16.msra.mxu0 0
      %1598 = vmatprep.mubr.bf16.mxu0 0
      %1599 = vmatmul.mubr.bf16.gmra.mrb[0].mxu0 %v1564
      %v1600 = vpop.f32.mrb[0].mxu0
      %v1601 = vadd.f32 0.0, %v1600
      %v1602 = vpop.f32.mrb[0].mxu0
      %v1603 = vpop.f32.mrb[0].mxu0
      %v1604 = vpop.f32.mrb[0].mxu0
      %1605 = vdwg.mxu0
      %v1606 = vadd.f32 %v1562, %v1601
      %v1609 = vunpack.c.l.b16 %v1515
      %v1610 = vunpack.c.l.b16 %v1516
      %v1611 = vpack.c.b16 %v1610, %v1609
      %v1613 = vshrl.u32 %v1611, 16
      %v1615 = vshll.u32 %v1611, 16
      %v1617 = vrot.slane %v1615, 1
      %v1618 = vor.u32 %v1613, %v1617
      %v1620 = vsel %vm297, %v1618, 0
      %1622 = vmatprep.subr.bf16.mxu0 0
      %1623 = vmatpush1.bf16.msra.mxu0 %v725
      %1624 = vmatprep.subr.bf16.mxu0 0
      %1625 = vmatpush1.bf16.msra.mxu0 0
      %1626 = vmatprep.subr.bf16.mxu0 0
      %1627 = vmatpush1.bf16.msra.mxu0 0
      %1628 = vmatprep.subr.bf16.mxu0 0
      %1629 = vmatpush1.bf16.msra.mxu0 0
      %1630 = vmatprep.subr.bf16.mxu0 0
      %1631 = vmatpush1.bf16.msra.mxu0 0
      %1632 = vmatprep.subr.bf16.mxu0 0
      %1633 = vmatpush1.bf16.msra.mxu0 0
      %1634 = vmatprep.subr.bf16.mxu0 0
      %1635 = vmatpush1.bf16.msra.mxu0 0
      %1636 = vmatprep.subr.bf16.mxu0 0
      %1637 = vmatpush1.bf16.msra.mxu0 0
      %1638 = vmatprep.subr.bf16.mxu0 0
      %1639 = vmatpush1.bf16.msra.mxu0 0
      %1640 = vmatprep.subr.bf16.mxu0 0
      %1641 = vmatpush1.bf16.msra.mxu0 0
      %1642 = vmatprep.subr.bf16.mxu0 0
      %1643 = vmatpush1.bf16.msra.mxu0 0
      %1644 = vmatprep.subr.bf16.mxu0 0
      %1645 = vmatpush1.bf16.msra.mxu0 0
      %1646 = vmatprep.subr.bf16.mxu0 0
      %1647 = vmatpush1.bf16.msra.mxu0 0
      %1648 = vmatprep.subr.bf16.mxu0 0
      %1649 = vmatpush1.bf16.msra.mxu0 0
      %1650 = vmatprep.subr.bf16.mxu0 0
      %1651 = vmatpush1.bf16.msra.mxu0 0
      %1652 = vmatprep.subr.bf16.mxu0 0
      %1653 = vmatpush1.bf16.msra.mxu0 0
      %1654 = vmatprep.mubr.bf16.mxu0 0
      %1655 = vmatmul.mubr.bf16.gmra.mrb[0].mxu0 %v1620
      %v1656 = vpop.f32.mrb[0].mxu0
      %v1657 = vadd.f32 0.0, %v1656
      %v1658 = vpop.f32.mrb[0].mxu0
      %v1659 = vpop.f32.mrb[0].mxu0
      %v1660 = vpop.f32.mrb[0].mxu0
      %1661 = vdwg.mxu0
      %v1662 = vadd.f32 %v1606, %v1657
      %v1663 = vmax.f32 %v1662, 0.0
      %s1664 = scalar_lea.vmem %s268, 16
      %1665 = vst [vmem:[%s1664] sm:$0xff] %v1663
      %v1666 = vld [vmem:[%s1514] sm:$0xf]
      %v1667 = vld [vmem:[%s1514 + $0x4] sm:$0x1]
      %v1668 = vld [vmem:[%s1517] sm:$0xf]
      %v1670 = vsel %vm297, %v1666, 0
      %1672 = vmatprep.subr.bf16.mxu0 0
      %1673 = vmatpush1.bf16.msra.mxu0 %v303
      %1674 = vmatprep.subr.bf16.mxu0 0
      %1675 = vmatpush1.bf16.msra.mxu0 0
      %1676 = vmatprep.subr.bf16.mxu0 0
      %1677 = vmatpush1.bf16.msra.mxu0 0
      %1678 = vmatprep.subr.bf16.mxu0 0
      %1679 = vmatpush1.bf16.msra.mxu0 0
      %1680 = vmatprep.subr.bf16.mxu0 0
      %1681 = vmatpush1.bf16.msra.mxu0 0
      %1682 = vmatprep.subr.bf16.mxu0 0
      %1683 = vmatpush1.bf16.msra.mxu0 0
      %1684 = vmatprep.subr.bf16.mxu0 0
      %1685 = vmatpush1.bf16.msra.mxu0 0
      %1686 = vmatprep.subr.bf16.mxu0 0
      %1687 = vmatpush1.bf16.msra.mxu0 0
      %1688 = vmatprep.subr.bf16.mxu0 0
      %1689 = vmatpush1.bf16.msra.mxu0 0
      %1690 = vmatprep.subr.bf16.mxu0 0
      %1691 = vmatpush1.bf16.msra.mxu0 0
      %1692 = vmatprep.subr.bf16.mxu0 0
      %1693 = vmatpush1.bf16.msra.mxu0 0
      %1694 = vmatprep.subr.bf16.mxu0 0
      %1695 = vmatpush1.bf16.msra.mxu0 0
      %1696 = vmatprep.subr.bf16.mxu0 0
      %1697 = vmatpush1.bf16.msra.mxu0 0
      %1698 = vmatprep.subr.bf16.mxu0 0
      %1699 = vmatpush1.bf16.msra.mxu0 0
      %1700 = vmatprep.subr.bf16.mxu0 0
      %1701 = vmatpush1.bf16.msra.mxu0 0
      %1702 = vmatprep.subr.bf16.mxu0 0
      %1703 = vmatpush1.bf16.msra.mxu0 0
      %1704 = vmatprep.mubr.bf16.mxu0 0
      %1705 = vmatmul.mubr.bf16.gmra.mrb[0].mxu0 %v1670
      %v1706 = vpop.f32.mrb[0].mxu0
      %v1707 = vadd.f32 0.0, %v1706
      %v1708 = vpop.f32.mrb[0].mxu0
      %v1709 = vpop.f32.mrb[0].mxu0
      %v1710 = vpop.f32.mrb[0].mxu0
      %1711 = vdwg.mxu0
      %v1712 = vadd.f32 %v275, %v1707
      %v1714 = vsel %vm297, %v1668, 0
      %1716 = vmatprep.subr.bf16.mxu0 0
      %1717 = vmatpush1.bf16.msra.mxu0 %v350
      %1718 = vmatprep.subr.bf16.mxu0 0
      %1719 = vmatpush1.bf16.msra.mxu0 0
      %1720 = vmatprep.subr.bf16.mxu0 0
      %1721 = vmatpush1.bf16.msra.mxu0 0
      %1722 = vmatprep.subr.bf16.mxu0 0
      %1723 = vmatpush1.bf16.msra.mxu0 0
      %1724 = vmatprep.subr.bf16.mxu0 0
      %1725 = vmatpush1.bf16.msra.mxu0 0
      %1726 = vmatprep.subr.bf16.mxu0 0
      %1727 = vmatpush1.bf16.msra.mxu0 0
      %1728 = vmatprep.subr.bf16.mxu0 0
      %1729 = vmatpush1.bf16.msra.mxu0 0
      %1730 = vmatprep.subr.bf16.mxu0 0
      %1731 = vmatpush1.bf16.msra.mxu0 0
      %1732 = vmatprep.subr.bf16.mxu0 0
      %1733 = vmatpush1.bf16.msra.mxu0 0
      %1734 = vmatprep.subr.bf16.mxu0 0
      %1735 = vmatpush1.bf16.msra.mxu0 0
      %1736 = vmatprep.subr.bf16.mxu0 0
      %1737 = vmatpush1.bf16.msra.mxu0 0
      %1738 = vmatprep.subr.bf16.mxu0 0
      %1739 = vmatpush1.bf16.msra.mxu0 0
      %1740 = vmatprep.subr.bf16.mxu0 0
      %1741 = vmatpush1.bf16.msra.mxu0 0
      %1742 = vmatprep.subr.bf16.mxu0 0
      %1743 = vmatpush1.bf16.msra.mxu0 0
      %1744 = vmatprep.subr.bf16.mxu0 0
      %1745 = vmatpush1.bf16.msra.mxu0 0
      %1746 = vmatprep.subr.bf16.mxu0 0
      %1747 = vmatpush1.bf16.msra.mxu0 0
      %1748 = vmatprep.mubr.bf16.mxu0 0
      %1749 = vmatmul.mubr.bf16.gmra.mrb[0].mxu0 %v1714
      %v1750 = vpop.f32.mrb[0].mxu0
      %v1751 = vadd.f32 0.0, %v1750
      %v1752 = vpop.f32.mrb[0].mxu0
      %v1753 = vpop.f32.mrb[0].mxu0
      %v1754 = vpop.f32.mrb[0].mxu0
      %1755 = vdwg.mxu0
      %v1756 = vadd.f32 %v1712, %v1751
      %v1759 = vunpack.c.l.b16 %v1666
      %v1760 = vunpack.c.l.b16 %v1667
      %v1761 = vpack.c.b16 %v1760, %v1759
      %v1763 = vshrl.u32 %v1761, 16
      %v1765 = vshll.u32 %v1761, 16
      %v1767 = vrot.slane %v1765, 1
      %v1768 = vor.u32 %v1763, %v1767
      %v1770 = vsel %vm297, %v1768, 0
      %1772 = vmatprep.subr.bf16.mxu0 0
      %1773 = vmatpush1.bf16.msra.mxu0 %v409
      %1774 = vmatprep.subr.bf16.mxu0 0
      %1775 = vmatpush1.bf16.msra.mxu0 0
      %1776 = vmatprep.subr.bf16.mxu0 0
      %1777 = vmatpush1.bf16.msra.mxu0 0
      %1778 = vmatprep.subr.bf16.mxu0 0
      %1779 = vmatpush1.bf16.msra.mxu0 0
      %1780 = vmatprep.subr.bf16.mxu0 0
      %1781 = vmatpush1.bf16.msra.mxu0 0
      %1782 = vmatprep.subr.bf16.mxu0 0
      %1783 = vmatpush1.bf16.msra.mxu0 0
      %1784 = vmatprep.subr.bf16.mxu0 0
      %1785 = vmatpush1.bf16.msra.mxu0 0
      %1786 = vmatprep.subr.bf16.mxu0 0
      %1787 = vmatpush1.bf16.msra.mxu0 0
      %1788 = vmatprep.subr.bf16.mxu0 0
      %1789 = vmatpush1.bf16.msra.mxu0 0
      %1790 = vmatprep.subr.bf16.mxu0 0
      %1791 = vmatpush1.bf16.msra.mxu0 0
      %1792 = vmatprep.subr.bf16.mxu0 0
      %1793 = vmatpush1.bf16.msra.mxu0 0
      %1794 = vmatprep.subr.bf16.mxu0 0
      %1795 = vmatpush1.bf16.msra.mxu0 0
      %1796 = vmatprep.subr.bf16.mxu0 0
      %1797 = vmatpush1.bf16.msra.mxu0 0
      %1798 = vmatprep.subr.bf16.mxu0 0
      %1799 = vmatpush1.bf16.msra.mxu0 0
      %1800 = vmatprep.subr.bf16.mxu0 0
      %1801 = vmatpush1.bf16.msra.mxu0 0
      %1802 = vmatprep.subr.bf16.mxu0 0
      %1803 = vmatpush1.bf16.msra.mxu0 0
      %1804 = vmatprep.mubr.bf16.mxu0 0
      %1805 = vmatmul.mubr.bf16.gmra.mrb[0].mxu0 %v1770
      %v1806 = vpop.f32.mrb[0].mxu0
      %v1807 = vadd.f32 0.0, %v1806
      %v1808 = vpop.f32.mrb[0].mxu0
      %v1809 = vpop.f32.mrb[0].mxu0
      %v1810 = vpop.f32.mrb[0].mxu0
      %1811 = vdwg.mxu0
      %v1812 = vadd.f32 %v1756, %v1807
      %s1813 = scalar_lea.vmem %s248, 56
      %v1814 = vld [vmem:[%s1813] sm:$0xf]
      %v1815 = vld [vmem:[%s1813 + $0x4] sm:$0x1]
      %s1816 = scalar_lea.vmem %s253, 56
      %v1817 = vld [vmem:[%s1816] sm:$0xf]
      %v1819 = vsel %vm297, %v1814, 0
      %1821 = vmatprep.subr.bf16.mxu0 0
      %1822 = vmatpush1.bf16.msra.mxu0 %v461
      %1823 = vmatprep.subr.bf16.mxu0 0
      %1824 = vmatpush1.bf16.msra.mxu0 0
      %1825 = vmatprep.subr.bf16.mxu0 0
      %1826 = vmatpush1.bf16.msra.mxu0 0
      %1827 = vmatprep.subr.bf16.mxu0 0
      %1828 = vmatpush1.bf16.msra.mxu0 0
      %1829 = vmatprep.subr.bf16.mxu0 0
      %1830 = vmatpush1.bf16.msra.mxu0 0
      %1831 = vmatprep.subr.bf16.mxu0 0
      %1832 = vmatpush1.bf16.msra.mxu0 0
      %1833 = vmatprep.subr.bf16.mxu0 0
      %1834 = vmatpush1.bf16.msra.mxu0 0
      %1835 = vmatprep.subr.bf16.mxu0 0
      %1836 = vmatpush1.bf16.msra.mxu0 0
      %1837 = vmatprep.subr.bf16.mxu0 0
      %1838 = vmatpush1.bf16.msra.mxu0 0
      %1839 = vmatprep.subr.bf16.mxu0 0
      %1840 = vmatpush1.bf16.msra.mxu0 0
      %1841 = vmatprep.subr.bf16.mxu0 0
      %1842 = vmatpush1.bf16.msra.mxu0 0
      %1843 = vmatprep.subr.bf16.mxu0 0
      %1844 = vmatpush1.bf16.msra.mxu0 0
      %1845 = vmatprep.subr.bf16.mxu0 0
      %1846 = vmatpush1.bf16.msra.mxu0 0
      %1847 = vmatprep.subr.bf16.mxu0 0
      %1848 = vmatpush1.bf16.msra.mxu0 0
      %1849 = vmatprep.subr.bf16.mxu0 0
      %1850 = vmatpush1.bf16.msra.mxu0 0
      %1851 = vmatprep.subr.bf16.mxu0 0
      %1852 = vmatpush1.bf16.msra.mxu0 0
      %1853 = vmatprep.mubr.bf16.mxu0 0
      %1854 = vmatmul.mubr.bf16.gmra.mrb[0].mxu0 %v1819
      %v1855 = vpop.f32.mrb[0].mxu0
      %v1856 = vadd.f32 0.0, %v1855
      %v1857 = vpop.f32.mrb[0].mxu0
      %v1858 = vpop.f32.mrb[0].mxu0
      %v1859 = vpop.f32.mrb[0].mxu0
      %1860 = vdwg.mxu0
      %v1861 = vadd.f32 %v1812, %v1856
      %v1863 = vsel %vm297, %v1817, 0
      %1865 = vmatprep.subr.bf16.mxu0 0
      %1866 = vmatpush1.bf16.msra.mxu0 %v508
      %1867 = vmatprep.subr.bf16.mxu0 0
      %1868 = vmatpush1.bf16.msra.mxu0 0
      %1869 = vmatprep.subr.bf16.mxu0 0
      %1870 = vmatpush1.bf16.msra.mxu0 0
      %1871 = vmatprep.subr.bf16.mxu0 0
      %1872 = vmatpush1.bf16.msra.mxu0 0
      %1873 = vmatprep.subr.bf16.mxu0 0
      %1874 = vmatpush1.bf16.msra.mxu0 0
      %1875 = vmatprep.subr.bf16.mxu0 0
      %1876 = vmatpush1.bf16.msra.mxu0 0
      %1877 = vmatprep.subr.bf16.mxu0 0
      %1878 = vmatpush1.bf16.msra.mxu0 0
      %1879 = vmatprep.subr.bf16.mxu0 0
      %1880 = vmatpush1.bf16.msra.mxu0 0
      %1881 = vmatprep.subr.bf16.mxu0 0
      %1882 = vmatpush1.bf16.msra.mxu0 0
      %1883 = vmatprep.subr.bf16.mxu0 0
      %1884 = vmatpush1.bf16.msra.mxu0 0
      %1885 = vmatprep.subr.bf16.mxu0 0
      %1886 = vmatpush1.bf16.msra.mxu0 0
      %1887 = vmatprep.subr.bf16.mxu0 0
      %1888 = vmatpush1.bf16.msra.mxu0 0
      %1889 = vmatprep.subr.bf16.mxu0 0
      %1890 = vmatpush1.bf16.msra.mxu0 0
      %1891 = vmatprep.subr.bf16.mxu0 0
      %1892 = vmatpush1.bf16.msra.mxu0 0
      %1893 = vmatprep.subr.bf16.mxu0 0
      %1894 = vmatpush1.bf16.msra.mxu0 0
      %1895 = vmatprep.subr.bf16.mxu0 0
      %1896 = vmatpush1.bf16.msra.mxu0 0
      %1897 = vmatprep.mubr.bf16.mxu0 0
      %1898 = vmatmul.mubr.bf16.gmra.mrb[0].mxu0 %v1863
      %v1899 = vpop.f32.mrb[0].mxu0
      %v1900 = vadd.f32 0.0, %v1899
      %v1901 = vpop.f32.mrb[0].mxu0
      %v1902 = vpop.f32.mrb[0].mxu0
      %v1903 = vpop.f32.mrb[0].mxu0
      %1904 = vdwg.mxu0
      %v1905 = vadd.f32 %v1861, %v1900
      %v1908 = vunpack.c.l.b16 %v1814
      %v1909 = vunpack.c.l.b16 %v1815
      %v1910 = vpack.c.b16 %v1909, %v1908
      %v1912 = vshrl.u32 %v1910, 16
      %v1914 = vshll.u32 %v1910, 16
      %v1916 = vrot.slane %v1914, 1
      %v1917 = vor.u32 %v1912, %v1916
      %v1919 = vsel %vm297, %v1917, 0
      %1921 = vmatprep.subr.bf16.mxu0 0
      %1922 = vmatpush1.bf16.msra.mxu0 %v567
      %1923 = vmatprep.subr.bf16.mxu0 0
      %1924 = vmatpush1.bf16.msra.mxu0 0
      %1925 = vmatprep.subr.bf16.mxu0 0
      %1926 = vmatpush1.bf16.msra.mxu0 0
      %1927 = vmatprep.subr.bf16.mxu0 0
      %1928 = vmatpush1.bf16.msra.mxu0 0
      %1929 = vmatprep.subr.bf16.mxu0 0
      %1930 = vmatpush1.bf16.msra.mxu0 0
      %1931 = vmatprep.subr.bf16.mxu0 0
      %1932 = vmatpush1.bf16.msra.mxu0 0
      %1933 = vmatprep.subr.bf16.mxu0 0
      %1934 = vmatpush1.bf16.msra.mxu0 0
      %1935 = vmatprep.subr.bf16.mxu0 0
      %1936 = vmatpush1.bf16.msra.mxu0 0
      %1937 = vmatprep.subr.bf16.mxu0 0
      %1938 = vmatpush1.bf16.msra.mxu0 0
      %1939 = vmatprep.subr.bf16.mxu0 0
      %1940 = vmatpush1.bf16.msra.mxu0 0
      %1941 = vmatprep.subr.bf16.mxu0 0
      %1942 = vmatpush1.bf16.msra.mxu0 0
      %1943 = vmatprep.subr.bf16.mxu0 0
      %1944 = vmatpush1.bf16.msra.mxu0 0
      %1945 = vmatprep.subr.bf16.mxu0 0
      %1946 = vmatpush1.bf16.msra.mxu0 0
      %1947 = vmatprep.subr.bf16.mxu0 0
      %1948 = vmatpush1.bf16.msra.mxu0 0
      %1949 = vmatprep.subr.bf16.mxu0 0
      %1950 = vmatpush1.bf16.msra.mxu0 0
      %1951 = vmatprep.subr.bf16.mxu0 0
      %1952 = vmatpush1.bf16.msra.mxu0 0
      %1953 = vmatprep.mubr.bf16.mxu0 0
      %1954 = vmatmul.mubr.bf16.gmra.mrb[0].mxu0 %v1919
      %v1955 = vpop.f32.mrb[0].mxu0
      %v1956 = vadd.f32 0.0, %v1955
      %v1957 = vpop.f32.mrb[0].mxu0
      %v1958 = vpop.f32.mrb[0].mxu0
      %v1959 = vpop.f32.mrb[0].mxu0
      %1960 = vdwg.mxu0
      %v1961 = vadd.f32 %v1905, %v1956
      %s1962 = scalar_lea.vmem %s248, 64
      %v1963 = vld [vmem:[%s1962] sm:$0xf]
      %v1964 = vld [vmem:[%s1962 + $0x4] sm:$0x1]
      %s1965 = scalar_lea.vmem %s253, 64
      %v1966 = vld [vmem:[%s1965] sm:$0xf]
      %v1968 = vsel %vm297, %v1963, 0
      %1970 = vmatprep.subr.bf16.mxu0 0
      %1971 = vmatpush1.bf16.msra.mxu0 %v619
      %1972 = vmatprep.subr.bf16.mxu0 0
      %1973 = vmatpush1.bf16.msra.mxu0 0
      %1974 = vmatprep.subr.bf16.mxu0 0
      %1975 = vmatpush1.bf16.msra.mxu0 0
      %1976 = vmatprep.subr.bf16.mxu0 0
      %1977 = vmatpush1.bf16.msra.mxu0 0
      %1978 = vmatprep.subr.bf16.mxu0 0
      %1979 = vmatpush1.bf16.msra.mxu0 0
      %1980 = vmatprep.subr.bf16.mxu0 0
      %1981 = vmatpush1.bf16.msra.mxu0 0
      %1982 = vmatprep.subr.bf16.mxu0 0
      %1983 = vmatpush1.bf16.msra.mxu0 0
      %1984 = vmatprep.subr.bf16.mxu0 0
      %1985 = vmatpush1.bf16.msra.mxu0 0
      %1986 = vmatprep.subr.bf16.mxu0 0
      %1987 = vmatpush1.bf16.msra.mxu0 0
      %1988 = vmatprep.subr.bf16.mxu0 0
      %1989 = vmatpush1.bf16.msra.mxu0 0
      %1990 = vmatprep.subr.bf16.mxu0 0
      %1991 = vmatpush1.bf16.msra.mxu0 0
      %1992 = vmatprep.subr.bf16.mxu0 0
      %1993 = vmatpush1.bf16.msra.mxu0 0
      %1994 = vmatprep.subr.bf16.mxu0 0
      %1995 = vmatpush1.bf16.msra.mxu0 0
      %1996 = vmatprep.subr.bf16.mxu0 0
      %1997 = vmatpush1.bf16.msra.mxu0 0
      %1998 = vmatprep.subr.bf16.mxu0 0
      %1999 = vmatpush1.bf16.msra.mxu0 0
      %2000 = vmatprep.subr.bf16.mxu0 0
      %2001 = vmatpush1.bf16.msra.mxu0 0
      %2002 = vmatprep.mubr.bf16.mxu0 0
      %2003 = vmatmul.mubr.bf16.gmra.mrb[0].mxu0 %v1968
      %v2004 = vpop.f32.mrb[0].mxu0
      %v2005 = vadd.f32 0.0, %v2004
      %v2006 = vpop.f32.mrb[0].mxu0
      %v2007 = vpop.f32.mrb[0].mxu0
      %v2008 = vpop.f32.mrb[0].mxu0
      %2009 = vdwg.mxu0
      %v2010 = vadd.f32 %v1961, %v2005
      %v2012 = vsel %vm297, %v1966, 0
      %2014 = vmatprep.subr.bf16.mxu0 0
      %2015 = vmatpush1.bf16.msra.mxu0 %v666
      %2016 = vmatprep.subr.bf16.mxu0 0
      %2017 = vmatpush1.bf16.msra.mxu0 0
      %2018 = vmatprep.subr.bf16.mxu0 0
      %2019 = vmatpush1.bf16.msra.mxu0 0
      %2020 = vmatprep.subr.bf16.mxu0 0
      %2021 = vmatpush1.bf16.msra.mxu0 0
      %2022 = vmatprep.subr.bf16.mxu0 0
      %2023 = vmatpush1.bf16.msra.mxu0 0
      %2024 = vmatprep.subr.bf16.mxu0 0
      %2025 = vmatpush1.bf16.msra.mxu0 0
      %2026 = vmatprep.subr.bf16.mxu0 0
      %2027 = vmatpush1.bf16.msra.mxu0 0
      %2028 = vmatprep.subr.bf16.mxu0 0
      %2029 = vmatpush1.bf16.msra.mxu0 0
      %2030 = vmatprep.subr.bf16.mxu0 0
      %2031 = vmatpush1.bf16.msra.mxu0 0
      %2032 = vmatprep.subr.bf16.mxu0 0
      %2033 = vmatpush1.bf16.msra.mxu0 0
      %2034 = vmatprep.subr.bf16.mxu0 0
      %2035 = vmatpush1.bf16.msra.mxu0 0
      %2036 = vmatprep.subr.bf16.mxu0 0
      %2037 = vmatpush1.bf16.msra.mxu0 0
      %2038 = vmatprep.subr.bf16.mxu0 0
      %2039 = vmatpush1.bf16.msra.mxu0 0
      %2040 = vmatprep.subr.bf16.mxu0 0
      %2041 = vmatpush1.bf16.msra.mxu0 0
      %2042 = vmatprep.subr.bf16.mxu0 0
      %2043 = vmatpush1.bf16.msra.mxu0 0
      %2044 = vmatprep.subr.bf16.mxu0 0
      %2045 = vmatpush1.bf16.msra.mxu0 0
      %2046 = vmatprep.mubr.bf16.mxu0 0
      %2047 = vmatmul.mubr.bf16.gmra.mrb[0].mxu0 %v2012
      %v2048 = vpop.f32.mrb[0].mxu0
      %v2049 = vadd.f32 0.0, %v2048
      %v2050 = vpop.f32.mrb[0].mxu0
      %v2051 = vpop.f32.mrb[0].mxu0
      %v2052 = vpop.f32.mrb[0].mxu0
      %2053 = vdwg.mxu0
      %v2054 = vadd.f32 %v2010, %v2049
      %v2057 = vunpack.c.l.b16 %v1963
      %v2058 = vunpack.c.l.b16 %v1964
      %v2059 = vpack.c.b16 %v2058, %v2057
      %v2061 = vshrl.u32 %v2059, 16
      %v2063 = vshll.u32 %v2059, 16
      %v2065 = vrot.slane %v2063, 1
      %v2066 = vor.u32 %v2061, %v2065
      %v2068 = vsel %vm297, %v2066, 0
      %2070 = vmatprep.subr.bf16.mxu0 0
      %2071 = vmatpush1.bf16.msra.mxu0 %v725
      %2072 = vmatprep.subr.bf16.mxu0 0
      %2073 = vmatpush1.bf16.msra.mxu0 0
      %2074 = vmatprep.subr.bf16.mxu0 0
      %2075 = vmatpush1.bf16.msra.mxu0 0
      %2076 = vmatprep.subr.bf16.mxu0 0
      %2077 = vmatpush1.bf16.msra.mxu0 0
      %2078 = vmatprep.subr.bf16.mxu0 0
      %2079 = vmatpush1.bf16.msra.mxu0 0
      %2080 = vmatprep.subr.bf16.mxu0 0
      %2081 = vmatpush1.bf16.msra.mxu0 0
      %2082 = vmatprep.subr.bf16.mxu0 0
      %2083 = vmatpush1.bf16.msra.mxu0 0
      %2084 = vmatprep.subr.bf16.mxu0 0
      %2085 = vmatpush1.bf16.msra.mxu0 0
      %2086 = vmatprep.subr.bf16.mxu0 0
      %2087 = vmatpush1.bf16.msra.mxu0 0
      %2088 = vmatprep.subr.bf16.mxu0 0
      %2089 = vmatpush1.bf16.msra.mxu0 0
      %2090 = vmatprep.subr.bf16.mxu0 0
      %2091 = vmatpush1.bf16.msra.mxu0 0
      %2092 = vmatprep.subr.bf16.mxu0 0
      %2093 = vmatpush1.bf16.msra.mxu0 0
      %2094 = vmatprep.subr.bf16.mxu0 0
      %2095 = vmatpush1.bf16.msra.mxu0 0
      %2096 = vmatprep.subr.bf16.mxu0 0
      %2097 = vmatpush1.bf16.msra.mxu0 0
      %2098 = vmatprep.subr.bf16.mxu0 0
      %2099 = vmatpush1.bf16.msra.mxu0 0
      %2100 = vmatprep.subr.bf16.mxu0 0
      %2101 = vmatpush1.bf16.msra.mxu0 0
      %2102 = vmatprep.mubr.bf16.mxu0 0
      %2103 = vmatmul.mubr.bf16.gmra.mrb[0].mxu0 %v2068
      %v2104 = vpop.f32.mrb[0].mxu0
      %v2105 = vadd.f32 0.0, %v2104
      %v2106 = vpop.f32.mrb[0].mxu0
      %v2107 = vpop.f32.mrb[0].mxu0
      %v2108 = vpop.f32.mrb[0].mxu0
      %2109 = vdwg.mxu0
      %v2110 = vadd.f32 %v2054, %v2105
      %v2111 = vmax.f32 %v2110, 0.0
      %s2112 = scalar_lea.vmem %s268, 24
      %2113 = vst [vmem:[%s2112] sm:$0xff] %v2111
      %v2114 = vld [vmem:[%s1962] sm:$0xf]
      %v2115 = vld [vmem:[%s1962 + $0x4] sm:$0x1]
      %v2116 = vld [vmem:[%s1965] sm:$0xf]
      %v2118 = vsel %vm297, %v2114, 0
      %2120 = vmatprep.subr.bf16.mxu0 0
      %2121 = vmatpush1.bf16.msra.mxu0 %v303
      %2122 = vmatprep.subr.bf16.mxu0 0
      %2123 = vmatpush1.bf16.msra.mxu0 0
      %2124 = vmatprep.subr.bf16.mxu0 0
      %2125 = vmatpush1.bf16.msra.mxu0 0
      %2126 = vmatprep.subr.bf16.mxu0 0
      %2127 = vmatpush1.bf16.msra.mxu0 0
      %2128 = vmatprep.subr.bf16.mxu0 0
      %2129 = vmatpush1.bf16.msra.mxu0 0
      %2130 = vmatprep.subr.bf16.mxu0 0
      %2131 = vmatpush1.bf16.msra.mxu0 0
      %2132 = vmatprep.subr.bf16.mxu0 0
      %2133 = vmatpush1.bf16.msra.mxu0 0
      %2134 = vmatprep.subr.bf16.mxu0 0
      %2135 = vmatpush1.bf16.msra.mxu0 0
      %2136 = vmatprep.subr.bf16.mxu0 0
      %2137 = vmatpush1.bf16.msra.mxu0 0
      %2138 = vmatprep.subr.bf16.mxu0 0
      %2139 = vmatpush1.bf16.msra.mxu0 0
      %2140 = vmatprep.subr.bf16.mxu0 0
      %2141 = vmatpush1.bf16.msra.mxu0 0
      %2142 = vmatprep.subr.bf16.mxu0 0
      %2143 = vmatpush1.bf16.msra.mxu0 0
      %2144 = vmatprep.subr.bf16.mxu0 0
      %2145 = vmatpush1.bf16.msra.mxu0 0
      %2146 = vmatprep.subr.bf16.mxu0 0
      %2147 = vmatpush1.bf16.msra.mxu0 0
      %2148 = vmatprep.subr.bf16.mxu0 0
      %2149 = vmatpush1.bf16.msra.mxu0 0
      %2150 = vmatprep.subr.bf16.mxu0 0
      %2151 = vmatpush1.bf16.msra.mxu0 0
      %2152 = vmatprep.mubr.bf16.mxu0 0
      %2153 = vmatmul.mubr.bf16.gmra.mrb[0].mxu0 %v2118
      %v2154 = vpop.f32.mrb[0].mxu0
      %v2155 = vadd.f32 0.0, %v2154
      %v2156 = vpop.f32.mrb[0].mxu0
      %v2157 = vpop.f32.mrb[0].mxu0
      %v2158 = vpop.f32.mrb[0].mxu0
      %2159 = vdwg.mxu0
      %v2160 = vadd.f32 %v275, %v2155
      %v2162 = vsel %vm297, %v2116, 0
      %2164 = vmatprep.subr.bf16.mxu0 0
      %2165 = vmatpush1.bf16.msra.mxu0 %v350
      %2166 = vmatprep.subr.bf16.mxu0 0
      %2167 = vmatpush1.bf16.msra.mxu0 0
      %2168 = vmatprep.subr.bf16.mxu0 0
      %2169 = vmatpush1.bf16.msra.mxu0 0
      %2170 = vmatprep.subr.bf16.mxu0 0
      %2171 = vmatpush1.bf16.msra.mxu0 0
      %2172 = vmatprep.subr.bf16.mxu0 0
      %2173 = vmatpush1.bf16.msra.mxu0 0
      %2174 = vmatprep.subr.bf16.mxu0 0
      %2175 = vmatpush1.bf16.msra.mxu0 0
      %2176 = vmatprep.subr.bf16.mxu0 0
      %2177 = vmatpush1.bf16.msra.mxu0 0
      %2178 = vmatprep.subr.bf16.mxu0 0
      %2179 = vmatpush1.bf16.msra.mxu0 0
      %2180 = vmatprep.subr.bf16.mxu0 0
      %2181 = vmatpush1.bf16.msra.mxu0 0
      %2182 = vmatprep.subr.bf16.mxu0 0
      %2183 = vmatpush1.bf16.msra.mxu0 0
      %2184 = vmatprep.subr.bf16.mxu0 0
      %2185 = vmatpush1.bf16.msra.mxu0 0
      %2186 = vmatprep.subr.bf16.mxu0 0
      %2187 = vmatpush1.bf16.msra.mxu0 0
      %2188 = vmatprep.subr.bf16.mxu0 0
      %2189 = vmatpush1.bf16.msra.mxu0 0
      %2190 = vmatprep.subr.bf16.mxu0 0
      %2191 = vmatpush1.bf16.msra.mxu0 0
      %2192 = vmatprep.subr.bf16.mxu0 0
      %2193 = vmatpush1.bf16.msra.mxu0 0
      %2194 = vmatprep.subr.bf16.mxu0 0
      %2195 = vmatpush1.bf16.msra.mxu0 0
      %2196 = vmatprep.mubr.bf16.mxu0 0
      %2197 = vmatmul.mubr.bf16.gmra.mrb[0].mxu0 %v2162
      %v2198 = vpop.f32.mrb[0].mxu0
      %v2199 = vadd.f32 0.0, %v2198
      %v2200 = vpop.f32.mrb[0].mxu0
      %v2201 = vpop.f32.mrb[0].mxu0
      %v2202 = vpop.f32.mrb[0].mxu0
      %2203 = vdwg.mxu0
      %v2204 = vadd.f32 %v2160, %v2199
      %v2207 = vunpack.c.l.b16 %v2114
      %v2208 = vunpack.c.l.b16 %v2115
      %v2209 = vpack.c.b16 %v2208, %v2207
      %v2211 = vshrl.u32 %v2209, 16
      %v2213 = vshll.u32 %v2209, 16
      %v2215 = vrot.slane %v2213, 1
      %v2216 = vor.u32 %v2211, %v2215
      %v2218 = vsel %vm297, %v2216, 0
      %2220 = vmatprep.subr.bf16.mxu0 0
      %2221 = vmatpush1.bf16.msra.mxu0 %v409
      %2222 = vmatprep.subr.bf16.mxu0 0
      %2223 = vmatpush1.bf16.msra.mxu0 0
      %2224 = vmatprep.subr.bf16.mxu0 0
      %2225 = vmatpush1.bf16.msra.mxu0 0
      %2226 = vmatprep.subr.bf16.mxu0 0
      %2227 = vmatpush1.bf16.msra.mxu0 0
      %2228 = vmatprep.subr.bf16.mxu0 0
      %2229 = vmatpush1.bf16.msra.mxu0 0
      %2230 = vmatprep.subr.bf16.mxu0 0
      %2231 = vmatpush1.bf16.msra.mxu0 0
      %2232 = vmatprep.subr.bf16.mxu0 0
      %2233 = vmatpush1.bf16.msra.mxu0 0
      %2234 = vmatprep.subr.bf16.mxu0 0
      %2235 = vmatpush1.bf16.msra.mxu0 0
      %2236 = vmatprep.subr.bf16.mxu0 0
      %2237 = vmatpush1.bf16.msra.mxu0 0
      %2238 = vmatprep.subr.bf16.mxu0 0
      %2239 = vmatpush1.bf16.msra.mxu0 0
      %2240 = vmatprep.subr.bf16.mxu0 0
      %2241 = vmatpush1.bf16.msra.mxu0 0
      %2242 = vmatprep.subr.bf16.mxu0 0
      %2243 = vmatpush1.bf16.msra.mxu0 0
      %2244 = vmatprep.subr.bf16.mxu0 0
      %2245 = vmatpush1.bf16.msra.mxu0 0
      %2246 = vmatprep.subr.bf16.mxu0 0
      %2247 = vmatpush1.bf16.msra.mxu0 0
      %2248 = vmatprep.subr.bf16.mxu0 0
      %2249 = vmatpush1.bf16.msra.mxu0 0
      %2250 = vmatprep.subr.bf16.mxu0 0
      %2251 = vmatpush1.bf16.msra.mxu0 0
      %2252 = vmatprep.mubr.bf16.mxu0 0
      %2253 = vmatmul.mubr.bf16.gmra.mrb[0].mxu0 %v2218
      %v2254 = vpop.f32.mrb[0].mxu0
      %v2255 = vadd.f32 0.0, %v2254
      %v2256 = vpop.f32.mrb[0].mxu0
      %v2257 = vpop.f32.mrb[0].mxu0
      %v2258 = vpop.f32.mrb[0].mxu0
      %2259 = vdwg.mxu0
      %v2260 = vadd.f32 %v2204, %v2255
      %s2261 = scalar_lea.vmem %s248, 72
      %v2262 = vld [vmem:[%s2261] sm:$0xf]
      %v2263 = vld [vmem:[%s2261 + $0x4] sm:$0x1]
      %s2264 = scalar_lea.vmem %s253, 72
      %v2265 = vld [vmem:[%s2264] sm:$0xf]
      %v2267 = vsel %vm297, %v2262, 0
      %2269 = vmatprep.subr.bf16.mxu0 0
      %2270 = vmatpush1.bf16.msra.mxu0 %v461
      %2271 = vmatprep.subr.bf16.mxu0 0
      %2272 = vmatpush1.bf16.msra.mxu0 0
      %2273 = vmatprep.subr.bf16.mxu0 0
      %2274 = vmatpush1.bf16.msra.mxu0 0
      %2275 = vmatprep.subr.bf16.mxu0 0
      %2276 = vmatpush1.bf16.msra.mxu0 0
      %2277 = vmatprep.subr.bf16.mxu0 0
      %2278 = vmatpush1.bf16.msra.mxu0 0
      %2279 = vmatprep.subr.bf16.mxu0 0
      %2280 = vmatpush1.bf16.msra.mxu0 0
      %2281 = vmatprep.subr.bf16.mxu0 0
      %2282 = vmatpush1.bf16.msra.mxu0 0
      %2283 = vmatprep.subr.bf16.mxu0 0
      %2284 = vmatpush1.bf16.msra.mxu0 0
      %2285 = vmatprep.subr.bf16.mxu0 0
      %2286 = vmatpush1.bf16.msra.mxu0 0
      %2287 = vmatprep.subr.bf16.mxu0 0
      %2288 = vmatpush1.bf16.msra.mxu0 0
      %2289 = vmatprep.subr.bf16.mxu0 0
      %2290 = vmatpush1.bf16.msra.mxu0 0
      %2291 = vmatprep.subr.bf16.mxu0 0
      %2292 = vmatpush1.bf16.msra.mxu0 0
      %2293 = vmatprep.subr.bf16.mxu0 0
      %2294 = vmatpush1.bf16.msra.mxu0 0
      %2295 = vmatprep.subr.bf16.mxu0 0
      %2296 = vmatpush1.bf16.msra.mxu0 0
      %2297 = vmatprep.subr.bf16.mxu0 0
      %2298 = vmatpush1.bf16.msra.mxu0 0
      %2299 = vmatprep.subr.bf16.mxu0 0
      %2300 = vmatpush1.bf16.msra.mxu0 0
      %2301 = vmatprep.mubr.bf16.mxu0 0
      %2302 = vmatmul.mubr.bf16.gmra.mrb[0].mxu0 %v2267
      %v2303 = vpop.f32.mrb[0].mxu0
      %v2304 = vadd.f32 0.0, %v2303
      %v2305 = vpop.f32.mrb[0].mxu0
      %v2306 = vpop.f32.mrb[0].mxu0
      %v2307 = vpop.f32.mrb[0].mxu0
      %2308 = vdwg.mxu0
      %v2309 = vadd.f32 %v2260, %v2304
      %v2311 = vsel %vm297, %v2265, 0
      %2313 = vmatprep.subr.bf16.mxu0 0
      %2314 = vmatpush1.bf16.msra.mxu0 %v508
      %2315 = vmatprep.subr.bf16.mxu0 0
      %2316 = vmatpush1.bf16.msra.mxu0 0
      %2317 = vmatprep.subr.bf16.mxu0 0
      %2318 = vmatpush1.bf16.msra.mxu0 0
      %2319 = vmatprep.subr.bf16.mxu0 0
      %2320 = vmatpush1.bf16.msra.mxu0 0
      %2321 = vmatprep.subr.bf16.mxu0 0
      %2322 = vmatpush1.bf16.msra.mxu0 0
      %2323 = vmatprep.subr.bf16.mxu0 0
      %2324 = vmatpush1.bf16.msra.mxu0 0
      %2325 = vmatprep.subr.bf16.mxu0 0
      %2326 = vmatpush1.bf16.msra.mxu0 0
      %2327 = vmatprep.subr.bf16.mxu0 0
      %2328 = vmatpush1.bf16.msra.mxu0 0
      %2329 = vmatprep.subr.bf16.mxu0 0
      %2330 = vmatpush1.bf16.msra.mxu0 0
      %2331 = vmatprep.subr.bf16.mxu0 0
      %2332 = vmatpush1.bf16.msra.mxu0 0
      %2333 = vmatprep.subr.bf16.mxu0 0
      %2334 = vmatpush1.bf16.msra.mxu0 0
      %2335 = vmatprep.subr.bf16.mxu0 0
      %2336 = vmatpush1.bf16.msra.mxu0 0
      %2337 = vmatprep.subr.bf16.mxu0 0
      %2338 = vmatpush1.bf16.msra.mxu0 0
      %2339 = vmatprep.subr.bf16.mxu0 0
      %2340 = vmatpush1.bf16.msra.mxu0 0
      %2341 = vmatprep.subr.bf16.mxu0 0
      %2342 = vmatpush1.bf16.msra.mxu0 0
      %2343 = vmatprep.subr.bf16.mxu0 0
      %2344 = vmatpush1.bf16.msra.mxu0 0
      %2345 = vmatprep.mubr.bf16.mxu0 0
      %2346 = vmatmul.mubr.bf16.gmra.mrb[0].mxu0 %v2311
      %v2347 = vpop.f32.mrb[0].mxu0
      %v2348 = vadd.f32 0.0, %v2347
      %v2349 = vpop.f32.mrb[0].mxu0
      %v2350 = vpop.f32.mrb[0].mxu0
      %v2351 = vpop.f32.mrb[0].mxu0
      %2352 = vdwg.mxu0
      %v2353 = vadd.f32 %v2309, %v2348
      %v2356 = vunpack.c.l.b16 %v2262
      %v2357 = vunpack.c.l.b16 %v2263
      %v2358 = vpack.c.b16 %v2357, %v2356
      %v2360 = vshrl.u32 %v2358, 16
      %v2362 = vshll.u32 %v2358, 16
      %v2364 = vrot.slane %v2362, 1
      %v2365 = vor.u32 %v2360, %v2364
      %v2367 = vsel %vm297, %v2365, 0
      %2369 = vmatprep.subr.bf16.mxu0 0
      %2370 = vmatpush1.bf16.msra.mxu0 %v567
      %2371 = vmatprep.subr.bf16.mxu0 0
      %2372 = vmatpush1.bf16.msra.mxu0 0
      %2373 = vmatprep.subr.bf16.mxu0 0
      %2374 = vmatpush1.bf16.msra.mxu0 0
      %2375 = vmatprep.subr.bf16.mxu0 0
      %2376 = vmatpush1.bf16.msra.mxu0 0
      %2377 = vmatprep.subr.bf16.mxu0 0
      %2378 = vmatpush1.bf16.msra.mxu0 0
      %2379 = vmatprep.subr.bf16.mxu0 0
      %2380 = vmatpush1.bf16.msra.mxu0 0
      %2381 = vmatprep.subr.bf16.mxu0 0
      %2382 = vmatpush1.bf16.msra.mxu0 0
      %2383 = vmatprep.subr.bf16.mxu0 0
      %2384 = vmatpush1.bf16.msra.mxu0 0
      %2385 = vmatprep.subr.bf16.mxu0 0
      %2386 = vmatpush1.bf16.msra.mxu0 0
      %2387 = vmatprep.subr.bf16.mxu0 0
      %2388 = vmatpush1.bf16.msra.mxu0 0
      %2389 = vmatprep.subr.bf16.mxu0 0
      %2390 = vmatpush1.bf16.msra.mxu0 0
      %2391 = vmatprep.subr.bf16.mxu0 0
      %2392 = vmatpush1.bf16.msra.mxu0 0
      %2393 = vmatprep.subr.bf16.mxu0 0
      %2394 = vmatpush1.bf16.msra.mxu0 0
      %2395 = vmatprep.subr.bf16.mxu0 0
      %2396 = vmatpush1.bf16.msra.mxu0 0
      %2397 = vmatprep.subr.bf16.mxu0 0
      %2398 = vmatpush1.bf16.msra.mxu0 0
      %2399 = vmatprep.subr.bf16.mxu0 0
      %2400 = vmatpush1.bf16.msra.mxu0 0
      %2401 = vmatprep.mubr.bf16.mxu0 0
      %2402 = vmatmul.mubr.bf16.gmra.mrb[0].mxu0 %v2367
      %v2403 = vpop.f32.mrb[0].mxu0
      %v2404 = vadd.f32 0.0, %v2403
      %v2405 = vpop.f32.mrb[0].mxu0
      %v2406 = vpop.f32.mrb[0].mxu0
      %v2407 = vpop.f32.mrb[0].mxu0
      %2408 = vdwg.mxu0
      %v2409 = vadd.f32 %v2353, %v2404
      %s2410 = scalar_lea.vmem %s248, 80
      %v2411 = vld [vmem:[%s2410] sm:$0xf]
      %v2412 = vld [vmem:[%s2410 + $0x4] sm:$0x1]
      %s2413 = scalar_lea.vmem %s253, 80
      %v2414 = vld [vmem:[%s2413] sm:$0xf]
      %v2416 = vsel %vm297, %v2411, 0
      %2418 = vmatprep.subr.bf16.mxu0 0
      %2419 = vmatpush1.bf16.msra.mxu0 %v619
      %2420 = vmatprep.subr.bf16.mxu0 0
      %2421 = vmatpush1.bf16.msra.mxu0 0
      %2422 = vmatprep.subr.bf16.mxu0 0
      %2423 = vmatpush1.bf16.msra.mxu0 0
      %2424 = vmatprep.subr.bf16.mxu0 0
      %2425 = vmatpush1.bf16.msra.mxu0 0
      %2426 = vmatprep.subr.bf16.mxu0 0
      %2427 = vmatpush1.bf16.msra.mxu0 0
      %2428 = vmatprep.subr.bf16.mxu0 0
      %2429 = vmatpush1.bf16.msra.mxu0 0
      %2430 = vmatprep.subr.bf16.mxu0 0
      %2431 = vmatpush1.bf16.msra.mxu0 0
      %2432 = vmatprep.subr.bf16.mxu0 0
      %2433 = vmatpush1.bf16.msra.mxu0 0
      %2434 = vmatprep.subr.bf16.mxu0 0
      %2435 = vmatpush1.bf16.msra.mxu0 0
      %2436 = vmatprep.subr.bf16.mxu0 0
      %2437 = vmatpush1.bf16.msra.mxu0 0
      %2438 = vmatprep.subr.bf16.mxu0 0
      %2439 = vmatpush1.bf16.msra.mxu0 0
      %2440 = vmatprep.subr.bf16.mxu0 0
      %2441 = vmatpush1.bf16.msra.mxu0 0
      %2442 = vmatprep.subr.bf16.mxu0 0
      %2443 = vmatpush1.bf16.msra.mxu0 0
      %2444 = vmatprep.subr.bf16.mxu0 0
      %2445 = vmatpush1.bf16.msra.mxu0 0
      %2446 = vmatprep.subr.bf16.mxu0 0
      %2447 = vmatpush1.bf16.msra.mxu0 0
      %2448 = vmatprep.subr.bf16.mxu0 0
      %2449 = vmatpush1.bf16.msra.mxu0 0
      %2450 = vmatprep.mubr.bf16.mxu0 0
      %2451 = vmatmul.mubr.bf16.gmra.mrb[0].mxu0 %v2416
      %v2452 = vpop.f32.mrb[0].mxu0
      %v2453 = vadd.f32 0.0, %v2452
      %v2454 = vpop.f32.mrb[0].mxu0
      %v2455 = vpop.f32.mrb[0].mxu0
      %v2456 = vpop.f32.mrb[0].mxu0
      %2457 = vdwg.mxu0
      %v2458 = vadd.f32 %v2409, %v2453
      %v2460 = vsel %vm297, %v2414, 0
      %2462 = vmatprep.subr.bf16.mxu0 0
      %2463 = vmatpush1.bf16.msra.mxu0 %v666
      %2464 = vmatprep.subr.bf16.mxu0 0
      %2465 = vmatpush1.bf16.msra.mxu0 0
      %2466 = vmatprep.subr.bf16.mxu0 0
      %2467 = vmatpush1.bf16.msra.mxu0 0
      %2468 = vmatprep.subr.bf16.mxu0 0
      %2469 = vmatpush1.bf16.msra.mxu0 0
      %2470 = vmatprep.subr.bf16.mxu0 0
      %2471 = vmatpush1.bf16.msra.mxu0 0
      %2472 = vmatprep.subr.bf16.mxu0 0
      %2473 = vmatpush1.bf16.msra.mxu0 0
      %2474 = vmatprep.subr.bf16.mxu0 0
      %2475 = vmatpush1.bf16.msra.mxu0 0
      %2476 = vmatprep.subr.bf16.mxu0 0
      %2477 = vmatpush1.bf16.msra.mxu0 0
      %2478 = vmatprep.subr.bf16.mxu0 0
      %2479 = vmatpush1.bf16.msra.mxu0 0
      %2480 = vmatprep.subr.bf16.mxu0 0
      %2481 = vmatpush1.bf16.msra.mxu0 0
      %2482 = vmatprep.subr.bf16.mxu0 0
      %2483 = vmatpush1.bf16.msra.mxu0 0
      %2484 = vmatprep.subr.bf16.mxu0 0
      %2485 = vmatpush1.bf16.msra.mxu0 0
      %2486 = vmatprep.subr.bf16.mxu0 0
      %2487 = vmatpush1.bf16.msra.mxu0 0
      %2488 = vmatprep.subr.bf16.mxu0 0
      %2489 = vmatpush1.bf16.msra.mxu0 0
      %2490 = vmatprep.subr.bf16.mxu0 0
      %2491 = vmatpush1.bf16.msra.mxu0 0
      %2492 = vmatprep.subr.bf16.mxu0 0
      %2493 = vmatpush1.bf16.msra.mxu0 0
      %2494 = vmatprep.mubr.bf16.mxu0 0
      %2495 = vmatmul.mubr.bf16.gmra.mrb[0].mxu0 %v2460
      %v2496 = vpop.f32.mrb[0].mxu0
      %v2497 = vadd.f32 0.0, %v2496
      %v2498 = vpop.f32.mrb[0].mxu0
      %v2499 = vpop.f32.mrb[0].mxu0
      %v2500 = vpop.f32.mrb[0].mxu0
      %2501 = vdwg.mxu0
      %v2502 = vadd.f32 %v2458, %v2497
      %v2505 = vunpack.c.l.b16 %v2411
      %v2506 = vunpack.c.l.b16 %v2412
      %v2507 = vpack.c.b16 %v2506, %v2505
      %v2509 = vshrl.u32 %v2507, 16
      %v2511 = vshll.u32 %v2507, 16
      %v2513 = vrot.slane %v2511, 1
      %v2514 = vor.u32 %v2509, %v2513
      %v2516 = vsel %vm297, %v2514, 0
      %2518 = vmatprep.subr.bf16.mxu0 0
      %2519 = vmatpush1.bf16.msra.mxu0 %v725
      %2520 = vmatprep.subr.bf16.mxu0 0
      %2521 = vmatpush1.bf16.msra.mxu0 0
      %2522 = vmatprep.subr.bf16.mxu0 0
      %2523 = vmatpush1.bf16.msra.mxu0 0
      %2524 = vmatprep.subr.bf16.mxu0 0
      %2525 = vmatpush1.bf16.msra.mxu0 0
      %2526 = vmatprep.subr.bf16.mxu0 0
      %2527 = vmatpush1.bf16.msra.mxu0 0
      %2528 = vmatprep.subr.bf16.mxu0 0
      %2529 = vmatpush1.bf16.msra.mxu0 0
      %2530 = vmatprep.subr.bf16.mxu0 0
      %2531 = vmatpush1.bf16.msra.mxu0 0
      %2532 = vmatprep.subr.bf16.mxu0 0
      %2533 = vmatpush1.bf16.msra.mxu0 0
      %2534 = vmatprep.subr.bf16.mxu0 0
      %2535 = vmatpush1.bf16.msra.mxu0 0
      %2536 = vmatprep.subr.bf16.mxu0 0
      %2537 = vmatpush1.bf16.msra.mxu0 0
      %2538 = vmatprep.subr.bf16.mxu0 0
      %2539 = vmatpush1.bf16.msra.mxu0 0
      %2540 = vmatprep.subr.bf16.mxu0 0
      %2541 = vmatpush1.bf16.msra.mxu0 0
      %2542 = vmatprep.subr.bf16.mxu0 0
      %2543 = vmatpush1.bf16.msra.mxu0 0
      %2544 = vmatprep.subr.bf16.mxu0 0
      %2545 = vmatpush1.bf16.msra.mxu0 0
      %2546 = vmatprep.subr.bf16.mxu0 0
      %2547 = vmatpush1.bf16.msra.mxu0 0
      %2548 = vmatprep.subr.bf16.mxu0 0
      %2549 = vmatpush1.bf16.msra.mxu0 0
      %2550 = vmatprep.mubr.bf16.mxu0 0
      %2551 = vmatmul.mubr.bf16.gmra.mrb[0].mxu0 %v2516
      %v2552 = vpop.f32.mrb[0].mxu0
      %v2553 = vadd.f32 0.0, %v2552
      %v2554 = vpop.f32.mrb[0].mxu0
      %v2555 = vpop.f32.mrb[0].mxu0
      %v2556 = vpop.f32.mrb[0].mxu0
      %2557 = vdwg.mxu0
      %v2558 = vadd.f32 %v2502, %v2553
      %v2559 = vmax.f32 %v2558, 0.0
      %s2560 = scalar_lea.vmem %s268, 32
      %2561 = vst [vmem:[%s2560] sm:$0xff] %v2559
      %v2562 = vld [vmem:[%s2410] sm:$0xf]
      %v2563 = vld [vmem:[%s2410 + $0x4] sm:$0x1]
      %v2564 = vld [vmem:[%s2413] sm:$0xf]
      %v2566 = vsel %vm297, %v2562, 0
      %2568 = vmatprep.subr.bf16.mxu0 0
      %2569 = vmatpush1.bf16.msra.mxu0 %v303
      %2570 = vmatprep.subr.bf16.mxu0 0
      %2571 = vmatpush1.bf16.msra.mxu0 0
      %2572 = vmatprep.subr.bf16.mxu0 0
      %2573 = vmatpush1.bf16.msra.mxu0 0
      %2574 = vmatprep.subr.bf16.mxu0 0
      %2575 = vmatpush1.bf16.msra.mxu0 0
      %2576 = vmatprep.subr.bf16.mxu0 0
      %2577 = vmatpush1.bf16.msra.mxu0 0
      %2578 = vmatprep.subr.bf16.mxu0 0
      %2579 = vmatpush1.bf16.msra.mxu0 0
      %2580 = vmatprep.subr.bf16.mxu0 0
      %2581 = vmatpush1.bf16.msra.mxu0 0
      %2582 = vmatprep.subr.bf16.mxu0 0
      %2583 = vmatpush1.bf16.msra.mxu0 0
      %2584 = vmatprep.subr.bf16.mxu0 0
      %2585 = vmatpush1.bf16.msra.mxu0 0
      %2586 = vmatprep.subr.bf16.mxu0 0
      %2587 = vmatpush1.bf16.msra.mxu0 0
      %2588 = vmatprep.subr.bf16.mxu0 0
      %2589 = vmatpush1.bf16.msra.mxu0 0
      %2590 = vmatprep.subr.bf16.mxu0 0
      %2591 = vmatpush1.bf16.msra.mxu0 0
      %2592 = vmatprep.subr.bf16.mxu0 0
      %2593 = vmatpush1.bf16.msra.mxu0 0
      %2594 = vmatprep.subr.bf16.mxu0 0
      %2595 = vmatpush1.bf16.msra.mxu0 0
      %2596 = vmatprep.subr.bf16.mxu0 0
      %2597 = vmatpush1.bf16.msra.mxu0 0
      %2598 = vmatprep.subr.bf16.mxu0 0
      %2599 = vmatpush1.bf16.msra.mxu0 0
      %2600 = vmatprep.mubr.bf16.mxu0 0
      %2601 = vmatmul.mubr.bf16.gmra.mrb[0].mxu0 %v2566
      %v2602 = vpop.f32.mrb[0].mxu0
      %v2603 = vadd.f32 0.0, %v2602
      %v2604 = vpop.f32.mrb[0].mxu0
      %v2605 = vpop.f32.mrb[0].mxu0
      %v2606 = vpop.f32.mrb[0].mxu0
      %2607 = vdwg.mxu0
      %v2608 = vadd.f32 %v275, %v2603
      %v2610 = vsel %vm297, %v2564, 0
      %2612 = vmatprep.subr.bf16.mxu0 0
      %2613 = vmatpush1.bf16.msra.mxu0 %v350
      %2614 = vmatprep.subr.bf16.mxu0 0
      %2615 = vmatpush1.bf16.msra.mxu0 0
      %2616 = vmatprep.subr.bf16.mxu0 0
      %2617 = vmatpush1.bf16.msra.mxu0 0
      %2618 = vmatprep.subr.bf16.mxu0 0
      %2619 = vmatpush1.bf16.msra.mxu0 0
      %2620 = vmatprep.subr.bf16.mxu0 0
      %2621 = vmatpush1.bf16.msra.mxu0 0
      %2622 = vmatprep.subr.bf16.mxu0 0
      %2623 = vmatpush1.bf16.msra.mxu0 0
      %2624 = vmatprep.subr.bf16.mxu0 0
      %2625 = vmatpush1.bf16.msra.mxu0 0
      %2626 = vmatprep.subr.bf16.mxu0 0
      %2627 = vmatpush1.bf16.msra.mxu0 0
      %2628 = vmatprep.subr.bf16.mxu0 0
      %2629 = vmatpush1.bf16.msra.mxu0 0
      %2630 = vmatprep.subr.bf16.mxu0 0
      %2631 = vmatpush1.bf16.msra.mxu0 0
      %2632 = vmatprep.subr.bf16.mxu0 0
      %2633 = vmatpush1.bf16.msra.mxu0 0
      %2634 = vmatprep.subr.bf16.mxu0 0
      %2635 = vmatpush1.bf16.msra.mxu0 0
      %2636 = vmatprep.subr.bf16.mxu0 0
      %2637 = vmatpush1.bf16.msra.mxu0 0
      %2638 = vmatprep.subr.bf16.mxu0 0
      %2639 = vmatpush1.bf16.msra.mxu0 0
      %2640 = vmatprep.subr.bf16.mxu0 0
      %2641 = vmatpush1.bf16.msra.mxu0 0
      %2642 = vmatprep.subr.bf16.mxu0 0
      %2643 = vmatpush1.bf16.msra.mxu0 0
      %2644 = vmatprep.mubr.bf16.mxu0 0
      %2645 = vmatmul.mubr.bf16.gmra.mrb[0].mxu0 %v2610
      %v2646 = vpop.f32.mrb[0].mxu0
      %v2647 = vadd.f32 0.0, %v2646
      %v2648 = vpop.f32.mrb[0].mxu0
      %v2649 = vpop.f32.mrb[0].mxu0
      %v2650 = vpop.f32.mrb[0].mxu0
      %2651 = vdwg.mxu0
      %v2652 = vadd.f32 %v2608, %v2647
      %v2655 = vunpack.c.l.b16 %v2562
      %v2656 = vunpack.c.l.b16 %v2563
      %v2657 = vpack.c.b16 %v2656, %v2655
      %v2659 = vshrl.u32 %v2657, 16
      %v2661 = vshll.u32 %v2657, 16
      %v2663 = vrot.slane %v2661, 1
      %v2664 = vor.u32 %v2659, %v2663
      %v2666 = vsel %vm297, %v2664, 0
      %2668 = vmatprep.subr.bf16.mxu0 0
      %2669 = vmatpush1.bf16.msra.mxu0 %v409
      %2670 = vmatprep.subr.bf16.mxu0 0
      %2671 = vmatpush1.bf16.msra.mxu0 0
      %2672 = vmatprep.subr.bf16.mxu0 0
      %2673 = vmatpush1.bf16.msra.mxu0 0
      %2674 = vmatprep.subr.bf16.mxu0 0
      %2675 = vmatpush1.bf16.msra.mxu0 0
      %2676 = vmatprep.subr.bf16.mxu0 0
      %2677 = vmatpush1.bf16.msra.mxu0 0
      %2678 = vmatprep.subr.bf16.mxu0 0
      %2679 = vmatpush1.bf16.msra.mxu0 0
      %2680 = vmatprep.subr.bf16.mxu0 0
      %2681 = vmatpush1.bf16.msra.mxu0 0
      %2682 = vmatprep.subr.bf16.mxu0 0
      %2683 = vmatpush1.bf16.msra.mxu0 0
      %2684 = vmatprep.subr.bf16.mxu0 0
      %2685 = vmatpush1.bf16.msra.mxu0 0
      %2686 = vmatprep.subr.bf16.mxu0 0
      %2687 = vmatpush1.bf16.msra.mxu0 0
      %2688 = vmatprep.subr.bf16.mxu0 0
      %2689 = vmatpush1.bf16.msra.mxu0 0
      %2690 = vmatprep.subr.bf16.mxu0 0
      %2691 = vmatpush1.bf16.msra.mxu0 0
      %2692 = vmatprep.subr.bf16.mxu0 0
      %2693 = vmatpush1.bf16.msra.mxu0 0
      %2694 = vmatprep.subr.bf16.mxu0 0
      %2695 = vmatpush1.bf16.msra.mxu0 0
      %2696 = vmatprep.subr.bf16.mxu0 0
      %2697 = vmatpush1.bf16.msra.mxu0 0
      %2698 = vmatprep.subr.bf16.mxu0 0
      %2699 = vmatpush1.bf16.msra.mxu0 0
      %2700 = vmatprep.mubr.bf16.mxu0 0
      %2701 = vmatmul.mubr.bf16.gmra.mrb[0].mxu0 %v2666
      %v2702 = vpop.f32.mrb[0].mxu0
      %v2703 = vadd.f32 0.0, %v2702
      %v2704 = vpop.f32.mrb[0].mxu0
      %v2705 = vpop.f32.mrb[0].mxu0
      %v2706 = vpop.f32.mrb[0].mxu0
      %2707 = vdwg.mxu0
      %v2708 = vadd.f32 %v2652, %v2703
      %s2709 = scalar_lea.vmem %s248, 88
      %v2710 = vld [vmem:[%s2709] sm:$0xf]
      %v2711 = vld [vmem:[%s2709 + $0x4] sm:$0x1]
      %s2712 = scalar_lea.vmem %s253, 88
      %v2713 = vld [vmem:[%s2712] sm:$0xf]
      %v2715 = vsel %vm297, %v2710, 0
      %2717 = vmatprep.subr.bf16.mxu0 0
      %2718 = vmatpush1.bf16.msra.mxu0 %v461
      %2719 = vmatprep.subr.bf16.mxu0 0
      %2720 = vmatpush1.bf16.msra.mxu0 0
      %2721 = vmatprep.subr.bf16.mxu0 0
      %2722 = vmatpush1.bf16.msra.mxu0 0
      %2723 = vmatprep.subr.bf16.mxu0 0
      %2724 = vmatpush1.bf16.msra.mxu0 0
      %2725 = vmatprep.subr.bf16.mxu0 0
      %2726 = vmatpush1.bf16.msra.mxu0 0
      %2727 = vmatprep.subr.bf16.mxu0 0
      %2728 = vmatpush1.bf16.msra.mxu0 0
      %2729 = vmatprep.subr.bf16.mxu0 0
      %2730 = vmatpush1.bf16.msra.mxu0 0
      %2731 = vmatprep.subr.bf16.mxu0 0
      %2732 = vmatpush1.bf16.msra.mxu0 0
      %2733 = vmatprep.subr.bf16.mxu0 0
      %2734 = vmatpush1.bf16.msra.mxu0 0
      %2735 = vmatprep.subr.bf16.mxu0 0
      %2736 = vmatpush1.bf16.msra.mxu0 0
      %2737 = vmatprep.subr.bf16.mxu0 0
      %2738 = vmatpush1.bf16.msra.mxu0 0
      %2739 = vmatprep.subr.bf16.mxu0 0
      %2740 = vmatpush1.bf16.msra.mxu0 0
      %2741 = vmatprep.subr.bf16.mxu0 0
      %2742 = vmatpush1.bf16.msra.mxu0 0
      %2743 = vmatprep.subr.bf16.mxu0 0
      %2744 = vmatpush1.bf16.msra.mxu0 0
      %2745 = vmatprep.subr.bf16.mxu0 0
      %2746 = vmatpush1.bf16.msra.mxu0 0
      %2747 = vmatprep.subr.bf16.mxu0 0
      %2748 = vmatpush1.bf16.msra.mxu0 0
      %2749 = vmatprep.mubr.bf16.mxu0 0
      %2750 = vmatmul.mubr.bf16.gmra.mrb[0].mxu0 %v2715
      %v2751 = vpop.f32.mrb[0].mxu0
      %v2752 = vadd.f32 0.0, %v2751
      %v2753 = vpop.f32.mrb[0].mxu0
      %v2754 = vpop.f32.mrb[0].mxu0
      %v2755 = vpop.f32.mrb[0].mxu0
      %2756 = vdwg.mxu0
      %v2757 = vadd.f32 %v2708, %v2752
      %v2759 = vsel %vm297, %v2713, 0
      %2761 = vmatprep.subr.bf16.mxu0 0
      %2762 = vmatpush1.bf16.msra.mxu0 %v508
      %2763 = vmatprep.subr.bf16.mxu0 0
      %2764 = vmatpush1.bf16.msra.mxu0 0
      %2765 = vmatprep.subr.bf16.mxu0 0
      %2766 = vmatpush1.bf16.msra.mxu0 0
      %2767 = vmatprep.subr.bf16.mxu0 0
      %2768 = vmatpush1.bf16.msra.mxu0 0
      %2769 = vmatprep.subr.bf16.mxu0 0
      %2770 = vmatpush1.bf16.msra.mxu0 0
      %2771 = vmatprep.subr.bf16.mxu0 0
      %2772 = vmatpush1.bf16.msra.mxu0 0
      %2773 = vmatprep.subr.bf16.mxu0 0
      %2774 = vmatpush1.bf16.msra.mxu0 0
      %2775 = vmatprep.subr.bf16.mxu0 0
      %2776 = vmatpush1.bf16.msra.mxu0 0
      %2777 = vmatprep.subr.bf16.mxu0 0
      %2778 = vmatpush1.bf16.msra.mxu0 0
      %2779 = vmatprep.subr.bf16.mxu0 0
      %2780 = vmatpush1.bf16.msra.mxu0 0
      %2781 = vmatprep.subr.bf16.mxu0 0
      %2782 = vmatpush1.bf16.msra.mxu0 0
      %2783 = vmatprep.subr.bf16.mxu0 0
      %2784 = vmatpush1.bf16.msra.mxu0 0
      %2785 = vmatprep.subr.bf16.mxu0 0
      %2786 = vmatpush1.bf16.msra.mxu0 0
      %2787 = vmatprep.subr.bf16.mxu0 0
      %2788 = vmatpush1.bf16.msra.mxu0 0
      %2789 = vmatprep.subr.bf16.mxu0 0
      %2790 = vmatpush1.bf16.msra.mxu0 0
      %2791 = vmatprep.subr.bf16.mxu0 0
      %2792 = vmatpush1.bf16.msra.mxu0 0
      %2793 = vmatprep.mubr.bf16.mxu0 0
      %2794 = vmatmul.mubr.bf16.gmra.mrb[0].mxu0 %v2759
      %v2795 = vpop.f32.mrb[0].mxu0
      %v2796 = vadd.f32 0.0, %v2795
      %v2797 = vpop.f32.mrb[0].mxu0
      %v2798 = vpop.f32.mrb[0].mxu0
      %v2799 = vpop.f32.mrb[0].mxu0
      %2800 = vdwg.mxu0
      %v2801 = vadd.f32 %v2757, %v2796
      %v2804 = vunpack.c.l.b16 %v2710
      %v2805 = vunpack.c.l.b16 %v2711
      %v2806 = vpack.c.b16 %v2805, %v2804
      %v2808 = vshrl.u32 %v2806, 16
      %v2810 = vshll.u32 %v2806, 16
      %v2812 = vrot.slane %v2810, 1
      %v2813 = vor.u32 %v2808, %v2812
      %v2815 = vsel %vm297, %v2813, 0
      %2817 = vmatprep.subr.bf16.mxu0 0
      %2818 = vmatpush1.bf16.msra.mxu0 %v567
      %2819 = vmatprep.subr.bf16.mxu0 0
      %2820 = vmatpush1.bf16.msra.mxu0 0
      %2821 = vmatprep.subr.bf16.mxu0 0
      %2822 = vmatpush1.bf16.msra.mxu0 0
      %2823 = vmatprep.subr.bf16.mxu0 0
      %2824 = vmatpush1.bf16.msra.mxu0 0
      %2825 = vmatprep.subr.bf16.mxu0 0
      %2826 = vmatpush1.bf16.msra.mxu0 0
      %2827 = vmatprep.subr.bf16.mxu0 0
      %2828 = vmatpush1.bf16.msra.mxu0 0
      %2829 = vmatprep.subr.bf16.mxu0 0
      %2830 = vmatpush1.bf16.msra.mxu0 0
      %2831 = vmatprep.subr.bf16.mxu0 0
      %2832 = vmatpush1.bf16.msra.mxu0 0
      %2833 = vmatprep.subr.bf16.mxu0 0
      %2834 = vmatpush1.bf16.msra.mxu0 0
      %2835 = vmatprep.subr.bf16.mxu0 0
      %2836 = vmatpush1.bf16.msra.mxu0 0
      %2837 = vmatprep.subr.bf16.mxu0 0
      %2838 = vmatpush1.bf16.msra.mxu0 0
      %2839 = vmatprep.subr.bf16.mxu0 0
      %2840 = vmatpush1.bf16.msra.mxu0 0
      %2841 = vmatprep.subr.bf16.mxu0 0
      %2842 = vmatpush1.bf16.msra.mxu0 0
      %2843 = vmatprep.subr.bf16.mxu0 0
      %2844 = vmatpush1.bf16.msra.mxu0 0
      %2845 = vmatprep.subr.bf16.mxu0 0
      %2846 = vmatpush1.bf16.msra.mxu0 0
      %2847 = vmatprep.subr.bf16.mxu0 0
      %2848 = vmatpush1.bf16.msra.mxu0 0
      %2849 = vmatprep.mubr.bf16.mxu0 0
      %2850 = vmatmul.mubr.bf16.gmra.mrb[0].mxu0 %v2815
      %v2851 = vpop.f32.mrb[0].mxu0
      %v2852 = vadd.f32 0.0, %v2851
      %v2853 = vpop.f32.mrb[0].mxu0
      %v2854 = vpop.f32.mrb[0].mxu0
      %v2855 = vpop.f32.mrb[0].mxu0
      %2856 = vdwg.mxu0
      %v2857 = vadd.f32 %v2801, %v2852
      %s2858 = scalar_lea.vmem %s248, 96
      %v2859 = vld [vmem:[%s2858] sm:$0xf]
      %v2860 = vld [vmem:[%s2858 + $0x4] sm:$0x1]
      %s2861 = scalar_lea.vmem %s253, 96
      %v2862 = vld [vmem:[%s2861] sm:$0xf]
      %v2864 = vsel %vm297, %v2859, 0
      %2866 = vmatprep.subr.bf16.mxu0 0
      %2867 = vmatpush1.bf16.msra.mxu0 %v619
      %2868 = vmatprep.subr.bf16.mxu0 0
      %2869 = vmatpush1.bf16.msra.mxu0 0
      %2870 = vmatprep.subr.bf16.mxu0 0
      %2871 = vmatpush1.bf16.msra.mxu0 0
      %2872 = vmatprep.subr.bf16.mxu0 0
      %2873 = vmatpush1.bf16.msra.mxu0 0
      %2874 = vmatprep.subr.bf16.mxu0 0
      %2875 = vmatpush1.bf16.msra.mxu0 0
      %2876 = vmatprep.subr.bf16.mxu0 0
      %2877 = vmatpush1.bf16.msra.mxu0 0
      %2878 = vmatprep.subr.bf16.mxu0 0
      %2879 = vmatpush1.bf16.msra.mxu0 0
      %2880 = vmatprep.subr.bf16.mxu0 0
      %2881 = vmatpush1.bf16.msra.mxu0 0
      %2882 = vmatprep.subr.bf16.mxu0 0
      %2883 = vmatpush1.bf16.msra.mxu0 0
      %2884 = vmatprep.subr.bf16.mxu0 0
      %2885 = vmatpush1.bf16.msra.mxu0 0
      %2886 = vmatprep.subr.bf16.mxu0 0
      %2887 = vmatpush1.bf16.msra.mxu0 0
      %2888 = vmatprep.subr.bf16.mxu0 0
      %2889 = vmatpush1.bf16.msra.mxu0 0
      %2890 = vmatprep.subr.bf16.mxu0 0
      %2891 = vmatpush1.bf16.msra.mxu0 0
      %2892 = vmatprep.subr.bf16.mxu0 0
      %2893 = vmatpush1.bf16.msra.mxu0 0
      %2894 = vmatprep.subr.bf16.mxu0 0
      %2895 = vmatpush1.bf16.msra.mxu0 0
      %2896 = vmatprep.subr.bf16.mxu0 0
      %2897 = vmatpush1.bf16.msra.mxu0 0
      %2898 = vmatprep.mubr.bf16.mxu0 0
      %2899 = vmatmul.mubr.bf16.gmra.mrb[0].mxu0 %v2864
      %v2900 = vpop.f32.mrb[0].mxu0
      %v2901 = vadd.f32 0.0, %v2900
      %v2902 = vpop.f32.mrb[0].mxu0
      %v2903 = vpop.f32.mrb[0].mxu0
      %v2904 = vpop.f32.mrb[0].mxu0
      %2905 = vdwg.mxu0
      %v2906 = vadd.f32 %v2857, %v2901
      %v2908 = vsel %vm297, %v2862, 0
      %2910 = vmatprep.subr.bf16.mxu0 0
      %2911 = vmatpush1.bf16.msra.mxu0 %v666
      %2912 = vmatprep.subr.bf16.mxu0 0
      %2913 = vmatpush1.bf16.msra.mxu0 0
      %2914 = vmatprep.subr.bf16.mxu0 0
      %2915 = vmatpush1.bf16.msra.mxu0 0
      %2916 = vmatprep.subr.bf16.mxu0 0
      %2917 = vmatpush1.bf16.msra.mxu0 0
      %2918 = vmatprep.subr.bf16.mxu0 0
      %2919 = vmatpush1.bf16.msra.mxu0 0
      %2920 = vmatprep.subr.bf16.mxu0 0
      %2921 = vmatpush1.bf16.msra.mxu0 0
      %2922 = vmatprep.subr.bf16.mxu0 0
      %2923 = vmatpush1.bf16.msra.mxu0 0
      %2924 = vmatprep.subr.bf16.mxu0 0
      %2925 = vmatpush1.bf16.msra.mxu0 0
      %2926 = vmatprep.subr.bf16.mxu0 0
      %2927 = vmatpush1.bf16.msra.mxu0 0
      %2928 = vmatprep.subr.bf16.mxu0 0
      %2929 = vmatpush1.bf16.msra.mxu0 0
      %2930 = vmatprep.subr.bf16.mxu0 0
      %2931 = vmatpush1.bf16.msra.mxu0 0
      %2932 = vmatprep.subr.bf16.mxu0 0
      %2933 = vmatpush1.bf16.msra.mxu0 0
      %2934 = vmatprep.subr.bf16.mxu0 0
      %2935 = vmatpush1.bf16.msra.mxu0 0
      %2936 = vmatprep.subr.bf16.mxu0 0
      %2937 = vmatpush1.bf16.msra.mxu0 0
      %2938 = vmatprep.subr.bf16.mxu0 0
      %2939 = vmatpush1.bf16.msra.mxu0 0
      %2940 = vmatprep.subr.bf16.mxu0 0
      %2941 = vmatpush1.bf16.msra.mxu0 0
      %2942 = vmatprep.mubr.bf16.mxu0 0
      %2943 = vmatmul.mubr.bf16.gmra.mrb[0].mxu0 %v2908
      %v2944 = vpop.f32.mrb[0].mxu0
      %v2945 = vadd.f32 0.0, %v2944
      %v2946 = vpop.f32.mrb[0].mxu0
      %v2947 = vpop.f32.mrb[0].mxu0
      %v2948 = vpop.f32.mrb[0].mxu0
      %2949 = vdwg.mxu0
      %v2950 = vadd.f32 %v2906, %v2945
      %v2953 = vunpack.c.l.b16 %v2859
      %v2954 = vunpack.c.l.b16 %v2860
      %v2955 = vpack.c.b16 %v2954, %v2953
      %v2957 = vshrl.u32 %v2955, 16
      %v2959 = vshll.u32 %v2955, 16
      %v2961 = vrot.slane %v2959, 1
      %v2962 = vor.u32 %v2957, %v2961
      %v2964 = vsel %vm297, %v2962, 0
      %2966 = vmatprep.subr.bf16.mxu0 0
      %2967 = vmatpush1.bf16.msra.mxu0 %v725
      %2968 = vmatprep.subr.bf16.mxu0 0
      %2969 = vmatpush1.bf16.msra.mxu0 0
      %2970 = vmatprep.subr.bf16.mxu0 0
      %2971 = vmatpush1.bf16.msra.mxu0 0
      %2972 = vmatprep.subr.bf16.mxu0 0
      %2973 = vmatpush1.bf16.msra.mxu0 0
      %2974 = vmatprep.subr.bf16.mxu0 0
      %2975 = vmatpush1.bf16.msra.mxu0 0
      %2976 = vmatprep.subr.bf16.mxu0 0
      %2977 = vmatpush1.bf16.msra.mxu0 0
      %2978 = vmatprep.subr.bf16.mxu0 0
      %2979 = vmatpush1.bf16.msra.mxu0 0
      %2980 = vmatprep.subr.bf16.mxu0 0
      %2981 = vmatpush1.bf16.msra.mxu0 0
      %2982 = vmatprep.subr.bf16.mxu0 0
      %2983 = vmatpush1.bf16.msra.mxu0 0
      %2984 = vmatprep.subr.bf16.mxu0 0
      %2985 = vmatpush1.bf16.msra.mxu0 0
      %2986 = vmatprep.subr.bf16.mxu0 0
      %2987 = vmatpush1.bf16.msra.mxu0 0
      %2988 = vmatprep.subr.bf16.mxu0 0
      %2989 = vmatpush1.bf16.msra.mxu0 0
      %2990 = vmatprep.subr.bf16.mxu0 0
      %2991 = vmatpush1.bf16.msra.mxu0 0
      %2992 = vmatprep.subr.bf16.mxu0 0
      %2993 = vmatpush1.bf16.msra.mxu0 0
      %2994 = vmatprep.subr.bf16.mxu0 0
      %2995 = vmatpush1.bf16.msra.mxu0 0
      %2996 = vmatprep.subr.bf16.mxu0 0
      %2997 = vmatpush1.bf16.msra.mxu0 0
      %2998 = vmatprep.mubr.bf16.mxu0 0
      %2999 = vmatmul.mubr.bf16.gmra.mrb[0].mxu0 %v2964
      %v3000 = vpop.f32.mrb[0].mxu0
      %v3001 = vadd.f32 0.0, %v3000
      %v3002 = vpop.f32.mrb[0].mxu0
      %v3003 = vpop.f32.mrb[0].mxu0
      %v3004 = vpop.f32.mrb[0].mxu0
      %3005 = vdwg.mxu0
      %v3006 = vadd.f32 %v2950, %v3001
      %v3007 = vmax.f32 %v3006, 0.0
      %s3008 = scalar_lea.vmem %s268, 40
      %3009 = vst [vmem:[%s3008] sm:$0xff] %v3007
      %v3010 = vld [vmem:[%s2858] sm:$0xf]
      %v3011 = vld [vmem:[%s2858 + $0x4] sm:$0x1]
      %v3012 = vld [vmem:[%s2861] sm:$0xf]
      %v3014 = vsel %vm297, %v3010, 0
      %3016 = vmatprep.subr.bf16.mxu0 0
      %3017 = vmatpush1.bf16.msra.mxu0 %v303
      %3018 = vmatprep.subr.bf16.mxu0 0
      %3019 = vmatpush1.bf16.msra.mxu0 0
      %3020 = vmatprep.subr.bf16.mxu0 0
      %3021 = vmatpush1.bf16.msra.mxu0 0
      %3022 = vmatprep.subr.bf16.mxu0 0
      %3023 = vmatpush1.bf16.msra.mxu0 0
      %3024 = vmatprep.subr.bf16.mxu0 0
      %3025 = vmatpush1.bf16.msra.mxu0 0
      %3026 = vmatprep.subr.bf16.mxu0 0
      %3027 = vmatpush1.bf16.msra.mxu0 0
      %3028 = vmatprep.subr.bf16.mxu0 0
      %3029 = vmatpush1.bf16.msra.mxu0 0
      %3030 = vmatprep.subr.bf16.mxu0 0
      %3031 = vmatpush1.bf16.msra.mxu0 0
      %3032 = vmatprep.subr.bf16.mxu0 0
      %3033 = vmatpush1.bf16.msra.mxu0 0
      %3034 = vmatprep.subr.bf16.mxu0 0
      %3035 = vmatpush1.bf16.msra.mxu0 0
      %3036 = vmatprep.subr.bf16.mxu0 0
      %3037 = vmatpush1.bf16.msra.mxu0 0
      %3038 = vmatprep.subr.bf16.mxu0 0
      %3039 = vmatpush1.bf16.msra.mxu0 0
      %3040 = vmatprep.subr.bf16.mxu0 0
      %3041 = vmatpush1.bf16.msra.mxu0 0
      %3042 = vmatprep.subr.bf16.mxu0 0
      %3043 = vmatpush1.bf16.msra.mxu0 0
      %3044 = vmatprep.subr.bf16.mxu0 0
      %3045 = vmatpush1.bf16.msra.mxu0 0
      %3046 = vmatprep.subr.bf16.mxu0 0
      %3047 = vmatpush1.bf16.msra.mxu0 0
      %3048 = vmatprep.mubr.bf16.mxu0 0
      %3049 = vmatmul.mubr.bf16.gmra.mrb[0].mxu0 %v3014
      %v3050 = vpop.f32.mrb[0].mxu0
      %v3051 = vadd.f32 0.0, %v3050
      %v3052 = vpop.f32.mrb[0].mxu0
      %v3053 = vpop.f32.mrb[0].mxu0
      %v3054 = vpop.f32.mrb[0].mxu0
      %3055 = vdwg.mxu0
      %v3056 = vadd.f32 %v275, %v3051
      %v3058 = vsel %vm297, %v3012, 0
      %3060 = vmatprep.subr.bf16.mxu0 0
      %3061 = vmatpush1.bf16.msra.mxu0 %v350
      %3062 = vmatprep.subr.bf16.mxu0 0
      %3063 = vmatpush1.bf16.msra.mxu0 0
      %3064 = vmatprep.subr.bf16.mxu0 0
      %3065 = vmatpush1.bf16.msra.mxu0 0
      %3066 = vmatprep.subr.bf16.mxu0 0
      %3067 = vmatpush1.bf16.msra.mxu0 0
      %3068 = vmatprep.subr.bf16.mxu0 0
      %3069 = vmatpush1.bf16.msra.mxu0 0
      %3070 = vmatprep.subr.bf16.mxu0 0
      %3071 = vmatpush1.bf16.msra.mxu0 0
      %3072 = vmatprep.subr.bf16.mxu0 0
      %3073 = vmatpush1.bf16.msra.mxu0 0
      %3074 = vmatprep.subr.bf16.mxu0 0
      %3075 = vmatpush1.bf16.msra.mxu0 0
      %3076 = vmatprep.subr.bf16.mxu0 0
      %3077 = vmatpush1.bf16.msra.mxu0 0
      %3078 = vmatprep.subr.bf16.mxu0 0
      %3079 = vmatpush1.bf16.msra.mxu0 0
      %3080 = vmatprep.subr.bf16.mxu0 0
      %3081 = vmatpush1.bf16.msra.mxu0 0
      %3082 = vmatprep.subr.bf16.mxu0 0
      %3083 = vmatpush1.bf16.msra.mxu0 0
      %3084 = vmatprep.subr.bf16.mxu0 0
      %3085 = vmatpush1.bf16.msra.mxu0 0
      %3086 = vmatprep.subr.bf16.mxu0 0
      %3087 = vmatpush1.bf16.msra.mxu0 0
      %3088 = vmatprep.subr.bf16.mxu0 0
      %3089 = vmatpush1.bf16.msra.mxu0 0
      %3090 = vmatprep.subr.bf16.mxu0 0
      %3091 = vmatpush1.bf16.msra.mxu0 0
      %3092 = vmatprep.mubr.bf16.mxu0 0
      %3093 = vmatmul.mubr.bf16.gmra.mrb[0].mxu0 %v3058
      %v3094 = vpop.f32.mrb[0].mxu0
      %v3095 = vadd.f32 0.0, %v3094
      %v3096 = vpop.f32.mrb[0].mxu0
      %v3097 = vpop.f32.mrb[0].mxu0
      %v3098 = vpop.f32.mrb[0].mxu0
      %3099 = vdwg.mxu0
      %v3100 = vadd.f32 %v3056, %v3095
      %v3103 = vunpack.c.l.b16 %v3010
      %v3104 = vunpack.c.l.b16 %v3011
      %v3105 = vpack.c.b16 %v3104, %v3103
      %v3107 = vshrl.u32 %v3105, 16
      %v3109 = vshll.u32 %v3105, 16
      %v3111 = vrot.slane %v3109, 1
      %v3112 = vor.u32 %v3107, %v3111
      %v3114 = vsel %vm297, %v3112, 0
      %3116 = vmatprep.subr.bf16.mxu0 0
      %3117 = vmatpush1.bf16.msra.mxu0 %v409
      %3118 = vmatprep.subr.bf16.mxu0 0
      %3119 = vmatpush1.bf16.msra.mxu0 0
      %3120 = vmatprep.subr.bf16.mxu0 0
      %3121 = vmatpush1.bf16.msra.mxu0 0
      %3122 = vmatprep.subr.bf16.mxu0 0
      %3123 = vmatpush1.bf16.msra.mxu0 0
      %3124 = vmatprep.subr.bf16.mxu0 0
      %3125 = vmatpush1.bf16.msra.mxu0 0
      %3126 = vmatprep.subr.bf16.mxu0 0
      %3127 = vmatpush1.bf16.msra.mxu0 0
      %3128 = vmatprep.subr.bf16.mxu0 0
      %3129 = vmatpush1.bf16.msra.mxu0 0
      %3130 = vmatprep.subr.bf16.mxu0 0
      %3131 = vmatpush1.bf16.msra.mxu0 0
      %3132 = vmatprep.subr.bf16.mxu0 0
      %3133 = vmatpush1.bf16.msra.mxu0 0
      %3134 = vmatprep.subr.bf16.mxu0 0
      %3135 = vmatpush1.bf16.msra.mxu0 0
      %3136 = vmatprep.subr.bf16.mxu0 0
      %3137 = vmatpush1.bf16.msra.mxu0 0
      %3138 = vmatprep.subr.bf16.mxu0 0
      %3139 = vmatpush1.bf16.msra.mxu0 0
      %3140 = vmatprep.subr.bf16.mxu0 0
      %3141 = vmatpush1.bf16.msra.mxu0 0
      %3142 = vmatprep.subr.bf16.mxu0 0
      %3143 = vmatpush1.bf16.msra.mxu0 0
      %3144 = vmatprep.subr.bf16.mxu0 0
      %3145 = vmatpush1.bf16.msra.mxu0 0
      %3146 = vmatprep.subr.bf16.mxu0 0
      %3147 = vmatpush1.bf16.msra.mxu0 0
      %3148 = vmatprep.mubr.bf16.mxu0 0
      %3149 = vmatmul.mubr.bf16.gmra.mrb[0].mxu0 %v3114
      %v3150 = vpop.f32.mrb[0].mxu0
      %v3151 = vadd.f32 0.0, %v3150
      %v3152 = vpop.f32.mrb[0].mxu0
      %v3153 = vpop.f32.mrb[0].mxu0
      %v3154 = vpop.f32.mrb[0].mxu0
      %3155 = vdwg.mxu0
      %v3156 = vadd.f32 %v3100, %v3151
      %s3157 = scalar_lea.vmem %s248, 104
      %v3158 = vld [vmem:[%s3157] sm:$0xf]
      %v3159 = vld [vmem:[%s3157 + $0x4] sm:$0x1]
      %s3160 = scalar_lea.vmem %s253, 104
      %v3161 = vld [vmem:[%s3160] sm:$0xf]
      %v3163 = vsel %vm297, %v3158, 0
      %3165 = vmatprep.subr.bf16.mxu0 0
      %3166 = vmatpush1.bf16.msra.mxu0 %v461
      %3167 = vmatprep.subr.bf16.mxu0 0
      %3168 = vmatpush1.bf16.msra.mxu0 0
      %3169 = vmatprep.subr.bf16.mxu0 0
      %3170 = vmatpush1.bf16.msra.mxu0 0
      %3171 = vmatprep.subr.bf16.mxu0 0
      %3172 = vmatpush1.bf16.msra.mxu0 0
      %3173 = vmatprep.subr.bf16.mxu0 0
      %3174 = vmatpush1.bf16.msra.mxu0 0
      %3175 = vmatprep.subr.bf16.mxu0 0
      %3176 = vmatpush1.bf16.msra.mxu0 0
      %3177 = vmatprep.subr.bf16.mxu0 0
      %3178 = vmatpush1.bf16.msra.mxu0 0
      %3179 = vmatprep.subr.bf16.mxu0 0
      %3180 = vmatpush1.bf16.msra.mxu0 0
      %3181 = vmatprep.subr.bf16.mxu0 0
      %3182 = vmatpush1.bf16.msra.mxu0 0
      %3183 = vmatprep.subr.bf16.mxu0 0
      %3184 = vmatpush1.bf16.msra.mxu0 0
      %3185 = vmatprep.subr.bf16.mxu0 0
      %3186 = vmatpush1.bf16.msra.mxu0 0
      %3187 = vmatprep.subr.bf16.mxu0 0
      %3188 = vmatpush1.bf16.msra.mxu0 0
      %3189 = vmatprep.subr.bf16.mxu0 0
      %3190 = vmatpush1.bf16.msra.mxu0 0
      %3191 = vmatprep.subr.bf16.mxu0 0
      %3192 = vmatpush1.bf16.msra.mxu0 0
      %3193 = vmatprep.subr.bf16.mxu0 0
      %3194 = vmatpush1.bf16.msra.mxu0 0
      %3195 = vmatprep.subr.bf16.mxu0 0
      %3196 = vmatpush1.bf16.msra.mxu0 0
      %3197 = vmatprep.mubr.bf16.mxu0 0
      %3198 = vmatmul.mubr.bf16.gmra.mrb[0].mxu0 %v3163
      %v3199 = vpop.f32.mrb[0].mxu0
      %v3200 = vadd.f32 0.0, %v3199
      %v3201 = vpop.f32.mrb[0].mxu0
      %v3202 = vpop.f32.mrb[0].mxu0
      %v3203 = vpop.f32.mrb[0].mxu0
      %3204 = vdwg.mxu0
      %v3205 = vadd.f32 %v3156, %v3200
      %v3207 = vsel %vm297, %v3161, 0
      %3209 = vmatprep.subr.bf16.mxu0 0
      %3210 = vmatpush1.bf16.msra.mxu0 %v508
      %3211 = vmatprep.subr.bf16.mxu0 0
      %3212 = vmatpush1.bf16.msra.mxu0 0
      %3213 = vmatprep.subr.bf16.mxu0 0
      %3214 = vmatpush1.bf16.msra.mxu0 0
      %3215 = vmatprep.subr.bf16.mxu0 0
      %3216 = vmatpush1.bf16.msra.mxu0 0
      %3217 = vmatprep.subr.bf16.mxu0 0
      %3218 = vmatpush1.bf16.msra.mxu0 0
      %3219 = vmatprep.subr.bf16.mxu0 0
      %3220 = vmatpush1.bf16.msra.mxu0 0
      %3221 = vmatprep.subr.bf16.mxu0 0
      %3222 = vmatpush1.bf16.msra.mxu0 0
      %3223 = vmatprep.subr.bf16.mxu0 0
      %3224 = vmatpush1.bf16.msra.mxu0 0
      %3225 = vmatprep.subr.bf16.mxu0 0
      %3226 = vmatpush1.bf16.msra.mxu0 0
      %3227 = vmatprep.subr.bf16.mxu0 0
      %3228 = vmatpush1.bf16.msra.mxu0 0
      %3229 = vmatprep.subr.bf16.mxu0 0
      %3230 = vmatpush1.bf16.msra.mxu0 0
      %3231 = vmatprep.subr.bf16.mxu0 0
      %3232 = vmatpush1.bf16.msra.mxu0 0
      %3233 = vmatprep.subr.bf16.mxu0 0
      %3234 = vmatpush1.bf16.msra.mxu0 0
      %3235 = vmatprep.subr.bf16.mxu0 0
      %3236 = vmatpush1.bf16.msra.mxu0 0
      %3237 = vmatprep.subr.bf16.mxu0 0
      %3238 = vmatpush1.bf16.msra.mxu0 0
      %3239 = vmatprep.subr.bf16.mxu0 0
      %3240 = vmatpush1.bf16.msra.mxu0 0
      %3241 = vmatprep.mubr.bf16.mxu0 0
      %3242 = vmatmul.mubr.bf16.gmra.mrb[0].mxu0 %v3207
      %v3243 = vpop.f32.mrb[0].mxu0
      %v3244 = vadd.f32 0.0, %v3243
      %v3245 = vpop.f32.mrb[0].mxu0
      %v3246 = vpop.f32.mrb[0].mxu0
      %v3247 = vpop.f32.mrb[0].mxu0
      %3248 = vdwg.mxu0
      %v3249 = vadd.f32 %v3205, %v3244
      %v3252 = vunpack.c.l.b16 %v3158
      %v3253 = vunpack.c.l.b16 %v3159
      %v3254 = vpack.c.b16 %v3253, %v3252
      %v3256 = vshrl.u32 %v3254, 16
      %v3258 = vshll.u32 %v3254, 16
      %v3260 = vrot.slane %v3258, 1
      %v3261 = vor.u32 %v3256, %v3260
      %v3263 = vsel %vm297, %v3261, 0
      %3265 = vmatprep.subr.bf16.mxu0 0
      %3266 = vmatpush1.bf16.msra.mxu0 %v567
      %3267 = vmatprep.subr.bf16.mxu0 0
      %3268 = vmatpush1.bf16.msra.mxu0 0
      %3269 = vmatprep.subr.bf16.mxu0 0
      %3270 = vmatpush1.bf16.msra.mxu0 0
      %3271 = vmatprep.subr.bf16.mxu0 0
      %3272 = vmatpush1.bf16.msra.mxu0 0
      %3273 = vmatprep.subr.bf16.mxu0 0
      %3274 = vmatpush1.bf16.msra.mxu0 0
      %3275 = vmatprep.subr.bf16.mxu0 0
      %3276 = vmatpush1.bf16.msra.mxu0 0
      %3277 = vmatprep.subr.bf16.mxu0 0
      %3278 = vmatpush1.bf16.msra.mxu0 0
      %3279 = vmatprep.subr.bf16.mxu0 0
      %3280 = vmatpush1.bf16.msra.mxu0 0
      %3281 = vmatprep.subr.bf16.mxu0 0
      %3282 = vmatpush1.bf16.msra.mxu0 0
      %3283 = vmatprep.subr.bf16.mxu0 0
      %3284 = vmatpush1.bf16.msra.mxu0 0
      %3285 = vmatprep.subr.bf16.mxu0 0
      %3286 = vmatpush1.bf16.msra.mxu0 0
      %3287 = vmatprep.subr.bf16.mxu0 0
      %3288 = vmatpush1.bf16.msra.mxu0 0
      %3289 = vmatprep.subr.bf16.mxu0 0
      %3290 = vmatpush1.bf16.msra.mxu0 0
      %3291 = vmatprep.subr.bf16.mxu0 0
      %3292 = vmatpush1.bf16.msra.mxu0 0
      %3293 = vmatprep.subr.bf16.mxu0 0
      %3294 = vmatpush1.bf16.msra.mxu0 0
      %3295 = vmatprep.subr.bf16.mxu0 0
      %3296 = vmatpush1.bf16.msra.mxu0 0
      %3297 = vmatprep.mubr.bf16.mxu0 0
      %3298 = vmatmul.mubr.bf16.gmra.mrb[0].mxu0 %v3263
      %v3299 = vpop.f32.mrb[0].mxu0
      %v3300 = vadd.f32 0.0, %v3299
      %v3301 = vpop.f32.mrb[0].mxu0
      %v3302 = vpop.f32.mrb[0].mxu0
      %v3303 = vpop.f32.mrb[0].mxu0
      %3304 = vdwg.mxu0
      %v3305 = vadd.f32 %v3249, %v3300
      %s3306 = scalar_lea.vmem %s248, 112
      %v3307 = vld [vmem:[%s3306] sm:$0xf]
      %v3308 = vld [vmem:[%s3306 + $0x4] sm:$0x1]
      %s3309 = scalar_lea.vmem %s253, 112
      %v3310 = vld [vmem:[%s3309] sm:$0xf]
      %v3312 = vsel %vm297, %v3307, 0
      %3314 = vmatprep.subr.bf16.mxu0 0
      %3315 = vmatpush1.bf16.msra.mxu0 %v619
      %3316 = vmatprep.subr.bf16.mxu0 0
      %3317 = vmatpush1.bf16.msra.mxu0 0
      %3318 = vmatprep.subr.bf16.mxu0 0
      %3319 = vmatpush1.bf16.msra.mxu0 0
      %3320 = vmatprep.subr.bf16.mxu0 0
      %3321 = vmatpush1.bf16.msra.mxu0 0
      %3322 = vmatprep.subr.bf16.mxu0 0
      %3323 = vmatpush1.bf16.msra.mxu0 0
      %3324 = vmatprep.subr.bf16.mxu0 0
      %3325 = vmatpush1.bf16.msra.mxu0 0
      %3326 = vmatprep.subr.bf16.mxu0 0
      %3327 = vmatpush1.bf16.msra.mxu0 0
      %3328 = vmatprep.subr.bf16.mxu0 0
      %3329 = vmatpush1.bf16.msra.mxu0 0
      %3330 = vmatprep.subr.bf16.mxu0 0
      %3331 = vmatpush1.bf16.msra.mxu0 0
      %3332 = vmatprep.subr.bf16.mxu0 0
      %3333 = vmatpush1.bf16.msra.mxu0 0
      %3334 = vmatprep.subr.bf16.mxu0 0
      %3335 = vmatpush1.bf16.msra.mxu0 0
      %3336 = vmatprep.subr.bf16.mxu0 0
      %3337 = vmatpush1.bf16.msra.mxu0 0
      %3338 = vmatprep.subr.bf16.mxu0 0
      %3339 = vmatpush1.bf16.msra.mxu0 0
      %3340 = vmatprep.subr.bf16.mxu0 0
      %3341 = vmatpush1.bf16.msra.mxu0 0
      %3342 = vmatprep.subr.bf16.mxu0 0
      %3343 = vmatpush1.bf16.msra.mxu0 0
      %3344 = vmatprep.subr.bf16.mxu0 0
      %3345 = vmatpush1.bf16.msra.mxu0 0
      %3346 = vmatprep.mubr.bf16.mxu0 0
      %3347 = vmatmul.mubr.bf16.gmra.mrb[0].mxu0 %v3312
      %v3348 = vpop.f32.mrb[0].mxu0
      %v3349 = vadd.f32 0.0, %v3348
      %v3350 = vpop.f32.mrb[0].mxu0
      %v3351 = vpop.f32.mrb[0].mxu0
      %v3352 = vpop.f32.mrb[0].mxu0
      %3353 = vdwg.mxu0
      %v3354 = vadd.f32 %v3305, %v3349
      %v3356 = vsel %vm297, %v3310, 0
      %3358 = vmatprep.subr.bf16.mxu0 0
      %3359 = vmatpush1.bf16.msra.mxu0 %v666
      %3360 = vmatprep.subr.bf16.mxu0 0
      %3361 = vmatpush1.bf16.msra.mxu0 0
      %3362 = vmatprep.subr.bf16.mxu0 0
      %3363 = vmatpush1.bf16.msra.mxu0 0
      %3364 = vmatprep.subr.bf16.mxu0 0
      %3365 = vmatpush1.bf16.msra.mxu0 0
      %3366 = vmatprep.subr.bf16.mxu0 0
      %3367 = vmatpush1.bf16.msra.mxu0 0
      %3368 = vmatprep.subr.bf16.mxu0 0
      %3369 = vmatpush1.bf16.msra.mxu0 0
      %3370 = vmatprep.subr.bf16.mxu0 0
      %3371 = vmatpush1.bf16.msra.mxu0 0
      %3372 = vmatprep.subr.bf16.mxu0 0
      %3373 = vmatpush1.bf16.msra.mxu0 0
      %3374 = vmatprep.subr.bf16.mxu0 0
      %3375 = vmatpush1.bf16.msra.mxu0 0
      %3376 = vmatprep.subr.bf16.mxu0 0
      %3377 = vmatpush1.bf16.msra.mxu0 0
      %3378 = vmatprep.subr.bf16.mxu0 0
      %3379 = vmatpush1.bf16.msra.mxu0 0
      %3380 = vmatprep.subr.bf16.mxu0 0
      %3381 = vmatpush1.bf16.msra.mxu0 0
      %3382 = vmatprep.subr.bf16.mxu0 0
      %3383 = vmatpush1.bf16.msra.mxu0 0
      %3384 = vmatprep.subr.bf16.mxu0 0
      %3385 = vmatpush1.bf16.msra.mxu0 0
      %3386 = vmatprep.subr.bf16.mxu0 0
      %3387 = vmatpush1.bf16.msra.mxu0 0
      %3388 = vmatprep.subr.bf16.mxu0 0
      %3389 = vmatpush1.bf16.msra.mxu0 0
      %3390 = vmatprep.mubr.bf16.mxu0 0
      %3391 = vmatmul.mubr.bf16.gmra.mrb[0].mxu0 %v3356
      %v3392 = vpop.f32.mrb[0].mxu0
      %v3393 = vadd.f32 0.0, %v3392
      %v3394 = vpop.f32.mrb[0].mxu0
      %v3395 = vpop.f32.mrb[0].mxu0
      %v3396 = vpop.f32.mrb[0].mxu0
      %3397 = vdwg.mxu0
      %v3398 = vadd.f32 %v3354, %v3393
      %v3401 = vunpack.c.l.b16 %v3307
      %v3402 = vunpack.c.l.b16 %v3308
      %v3403 = vpack.c.b16 %v3402, %v3401
      %v3405 = vshrl.u32 %v3403, 16
      %v3407 = vshll.u32 %v3403, 16
      %v3409 = vrot.slane %v3407, 1
      %v3410 = vor.u32 %v3405, %v3409
      %v3412 = vsel %vm297, %v3410, 0
      %3414 = vmatprep.subr.bf16.mxu0 0
      %3415 = vmatpush1.bf16.msra.mxu0 %v725
      %3416 = vmatprep.subr.bf16.mxu0 0
      %3417 = vmatpush1.bf16.msra.mxu0 0
      %3418 = vmatprep.subr.bf16.mxu0 0
      %3419 = vmatpush1.bf16.msra.mxu0 0
      %3420 = vmatprep.subr.bf16.mxu0 0
      %3421 = vmatpush1.bf16.msra.mxu0 0
      %3422 = vmatprep.subr.bf16.mxu0 0
      %3423 = vmatpush1.bf16.msra.mxu0 0
      %3424 = vmatprep.subr.bf16.mxu0 0
      %3425 = vmatpush1.bf16.msra.mxu0 0
      %3426 = vmatprep.subr.bf16.mxu0 0
      %3427 = vmatpush1.bf16.msra.mxu0 0
      %3428 = vmatprep.subr.bf16.mxu0 0
      %3429 = vmatpush1.bf16.msra.mxu0 0
      %3430 = vmatprep.subr.bf16.mxu0 0
      %3431 = vmatpush1.bf16.msra.mxu0 0
      %3432 = vmatprep.subr.bf16.mxu0 0
      %3433 = vmatpush1.bf16.msra.mxu0 0
      %3434 = vmatprep.subr.bf16.mxu0 0
      %3435 = vmatpush1.bf16.msra.mxu0 0
      %3436 = vmatprep.subr.bf16.mxu0 0
      %3437 = vmatpush1.bf16.msra.mxu0 0
      %3438 = vmatprep.subr.bf16.mxu0 0
      %3439 = vmatpush1.bf16.msra.mxu0 0
      %3440 = vmatprep.subr.bf16.mxu0 0
      %3441 = vmatpush1.bf16.msra.mxu0 0
      %3442 = vmatprep.subr.bf16.mxu0 0
      %3443 = vmatpush1.bf16.msra.mxu0 0
      %3444 = vmatprep.subr.bf16.mxu0 0
      %3445 = vmatpush1.bf16.msra.mxu0 0
      %3446 = vmatprep.mubr.bf16.mxu0 0
      %3447 = vmatmul.mubr.bf16.gmra.mrb[0].mxu0 %v3412
      %v3448 = vpop.f32.mrb[0].mxu0
      %v3449 = vadd.f32 0.0, %v3448
      %v3450 = vpop.f32.mrb[0].mxu0
      %v3451 = vpop.f32.mrb[0].mxu0
      %v3452 = vpop.f32.mrb[0].mxu0
      %3453 = vdwg.mxu0
      %v3454 = vadd.f32 %v3398, %v3449
      %v3455 = vmax.f32 %v3454, 0.0
      %s3456 = scalar_lea.vmem %s268, 48
      %3457 = vst [vmem:[%s3456] sm:$0xff] %v3455
      %v3458 = vld [vmem:[%s3306] sm:$0xf]
      %v3459 = vld [vmem:[%s3306 + $0x4] sm:$0x1]
      %v3460 = vld [vmem:[%s3309] sm:$0xf]
      %v3462 = vsel %vm297, %v3458, 0
      %3464 = vmatprep.subr.bf16.mxu0 0
      %3465 = vmatpush1.bf16.msra.mxu0 %v303
      %3466 = vmatprep.subr.bf16.mxu0 0
      %3467 = vmatpush1.bf16.msra.mxu0 0
      %3468 = vmatprep.subr.bf16.mxu0 0
      %3469 = vmatpush1.bf16.msra.mxu0 0
      %3470 = vmatprep.subr.bf16.mxu0 0
      %3471 = vmatpush1.bf16.msra.mxu0 0
      %3472 = vmatprep.subr.bf16.mxu0 0
      %3473 = vmatpush1.bf16.msra.mxu0 0
      %3474 = vmatprep.subr.bf16.mxu0 0
      %3475 = vmatpush1.bf16.msra.mxu0 0
      %3476 = vmatprep.subr.bf16.mxu0 0
      %3477 = vmatpush1.bf16.msra.mxu0 0
      %3478 = vmatprep.subr.bf16.mxu0 0
      %3479 = vmatpush1.bf16.msra.mxu0 0
      %3480 = vmatprep.subr.bf16.mxu0 0
      %3481 = vmatpush1.bf16.msra.mxu0 0
      %3482 = vmatprep.subr.bf16.mxu0 0
      %3483 = vmatpush1.bf16.msra.mxu0 0
      %3484 = vmatprep.subr.bf16.mxu0 0
      %3485 = vmatpush1.bf16.msra.mxu0 0
      %3486 = vmatprep.subr.bf16.mxu0 0
      %3487 = vmatpush1.bf16.msra.mxu0 0
      %3488 = vmatprep.subr.bf16.mxu0 0
      %3489 = vmatpush1.bf16.msra.mxu0 0
      %3490 = vmatprep.subr.bf16.mxu0 0
      %3491 = vmatpush1.bf16.msra.mxu0 0
      %3492 = vmatprep.subr.bf16.mxu0 0
      %3493 = vmatpush1.bf16.msra.mxu0 0
      %3494 = vmatprep.subr.bf16.mxu0 0
      %3495 = vmatpush1.bf16.msra.mxu0 0
      %3496 = vmatprep.mubr.bf16.mxu0 0
      %3497 = vmatmul.mubr.bf16.gmra.mrb[0].mxu0 %v3462
      %v3498 = vpop.f32.mrb[0].mxu0
      %v3499 = vadd.f32 0.0, %v3498
      %v3500 = vpop.f32.mrb[0].mxu0
      %v3501 = vpop.f32.mrb[0].mxu0
      %v3502 = vpop.f32.mrb[0].mxu0
      %3503 = vdwg.mxu0
      %v3504 = vadd.f32 %v275, %v3499
      %v3506 = vsel %vm297, %v3460, 0
      %3508 = vmatprep.subr.bf16.mxu0 0
      %3509 = vmatpush1.bf16.msra.mxu0 %v350
      %3510 = vmatprep.subr.bf16.mxu0 0
      %3511 = vmatpush1.bf16.msra.mxu0 0
      %3512 = vmatprep.subr.bf16.mxu0 0
      %3513 = vmatpush1.bf16.msra.mxu0 0
      %3514 = vmatprep.subr.bf16.mxu0 0
      %3515 = vmatpush1.bf16.msra.mxu0 0
      %3516 = vmatprep.subr.bf16.mxu0 0
      %3517 = vmatpush1.bf16.msra.mxu0 0
      %3518 = vmatprep.subr.bf16.mxu0 0
      %3519 = vmatpush1.bf16.msra.mxu0 0
      %3520 = vmatprep.subr.bf16.mxu0 0
      %3521 = vmatpush1.bf16.msra.mxu0 0
      %3522 = vmatprep.subr.bf16.mxu0 0
      %3523 = vmatpush1.bf16.msra.mxu0 0
      %3524 = vmatprep.subr.bf16.mxu0 0
      %3525 = vmatpush1.bf16.msra.mxu0 0
      %3526 = vmatprep.subr.bf16.mxu0 0
      %3527 = vmatpush1.bf16.msra.mxu0 0
      %3528 = vmatprep.subr.bf16.mxu0 0
      %3529 = vmatpush1.bf16.msra.mxu0 0
      %3530 = vmatprep.subr.bf16.mxu0 0
      %3531 = vmatpush1.bf16.msra.mxu0 0
      %3532 = vmatprep.subr.bf16.mxu0 0
      %3533 = vmatpush1.bf16.msra.mxu0 0
      %3534 = vmatprep.subr.bf16.mxu0 0
      %3535 = vmatpush1.bf16.msra.mxu0 0
      %3536 = vmatprep.subr.bf16.mxu0 0
      %3537 = vmatpush1.bf16.msra.mxu0 0
      %3538 = vmatprep.subr.bf16.mxu0 0
      %3539 = vmatpush1.bf16.msra.mxu0 0
      %3540 = vmatprep.mubr.bf16.mxu0 0
      %3541 = vmatmul.mubr.bf16.gmra.mrb[0].mxu0 %v3506
      %v3542 = vpop.f32.mrb[0].mxu0
      %v3543 = vadd.f32 0.0, %v3542
      %v3544 = vpop.f32.mrb[0].mxu0
      %v3545 = vpop.f32.mrb[0].mxu0
      %v3546 = vpop.f32.mrb[0].mxu0
      %3547 = vdwg.mxu0
      %v3548 = vadd.f32 %v3504, %v3543
      %v3551 = vunpack.c.l.b16 %v3458
      %v3552 = vunpack.c.l.b16 %v3459
      %v3553 = vpack.c.b16 %v3552, %v3551
      %v3555 = vshrl.u32 %v3553, 16
      %v3557 = vshll.u32 %v3553, 16
      %v3559 = vrot.slane %v3557, 1
      %v3560 = vor.u32 %v3555, %v3559
      %v3562 = vsel %vm297, %v3560, 0
      %3564 = vmatprep.subr.bf16.mxu0 0
      %3565 = vmatpush1.bf16.msra.mxu0 %v409
      %3566 = vmatprep.subr.bf16.mxu0 0
      %3567 = vmatpush1.bf16.msra.mxu0 0
      %3568 = vmatprep.subr.bf16.mxu0 0
      %3569 = vmatpush1.bf16.msra.mxu0 0
      %3570 = vmatprep.subr.bf16.mxu0 0
      %3571 = vmatpush1.bf16.msra.mxu0 0
      %3572 = vmatprep.subr.bf16.mxu0 0
      %3573 = vmatpush1.bf16.msra.mxu0 0
      %3574 = vmatprep.subr.bf16.mxu0 0
      %3575 = vmatpush1.bf16.msra.mxu0 0
      %3576 = vmatprep.subr.bf16.mxu0 0
      %3577 = vmatpush1.bf16.msra.mxu0 0
      %3578 = vmatprep.subr.bf16.mxu0 0
      %3579 = vmatpush1.bf16.msra.mxu0 0
      %3580 = vmatprep.subr.bf16.mxu0 0
      %3581 = vmatpush1.bf16.msra.mxu0 0
      %3582 = vmatprep.subr.bf16.mxu0 0
      %3583 = vmatpush1.bf16.msra.mxu0 0
      %3584 = vmatprep.subr.bf16.mxu0 0
      %3585 = vmatpush1.bf16.msra.mxu0 0
      %3586 = vmatprep.subr.bf16.mxu0 0
      %3587 = vmatpush1.bf16.msra.mxu0 0
      %3588 = vmatprep.subr.bf16.mxu0 0
      %3589 = vmatpush1.bf16.msra.mxu0 0
      %3590 = vmatprep.subr.bf16.mxu0 0
      %3591 = vmatpush1.bf16.msra.mxu0 0
      %3592 = vmatprep.subr.bf16.mxu0 0
      %3593 = vmatpush1.bf16.msra.mxu0 0
      %3594 = vmatprep.subr.bf16.mxu0 0
      %3595 = vmatpush1.bf16.msra.mxu0 0
      %3596 = vmatprep.mubr.bf16.mxu0 0
      %3597 = vmatmul.mubr.bf16.gmra.mrb[0].mxu0 %v3562
      %v3598 = vpop.f32.mrb[0].mxu0
      %v3599 = vadd.f32 0.0, %v3598
      %v3600 = vpop.f32.mrb[0].mxu0
      %v3601 = vpop.f32.mrb[0].mxu0
      %v3602 = vpop.f32.mrb[0].mxu0
      %3603 = vdwg.mxu0
      %v3604 = vadd.f32 %v3548, %v3599
      %s3605 = scalar_lea.vmem %s248, 120
      %v3606 = vld [vmem:[%s3605] sm:$0xf]
      %v3607 = vld [vmem:[%s3605 + $0x4] sm:$0x1]
      %s3608 = scalar_lea.vmem %s253, 120
      %v3609 = vld [vmem:[%s3608] sm:$0xf]
      %v3611 = vsel %vm297, %v3606, 0
      %3613 = vmatprep.subr.bf16.mxu0 0
      %3614 = vmatpush1.bf16.msra.mxu0 %v461
      %3615 = vmatprep.subr.bf16.mxu0 0
      %3616 = vmatpush1.bf16.msra.mxu0 0
      %3617 = vmatprep.subr.bf16.mxu0 0
      %3618 = vmatpush1.bf16.msra.mxu0 0
      %3619 = vmatprep.subr.bf16.mxu0 0
      %3620 = vmatpush1.bf16.msra.mxu0 0
      %3621 = vmatprep.subr.bf16.mxu0 0
      %3622 = vmatpush1.bf16.msra.mxu0 0
      %3623 = vmatprep.subr.bf16.mxu0 0
      %3624 = vmatpush1.bf16.msra.mxu0 0
      %3625 = vmatprep.subr.bf16.mxu0 0
      %3626 = vmatpush1.bf16.msra.mxu0 0
      %3627 = vmatprep.subr.bf16.mxu0 0
      %3628 = vmatpush1.bf16.msra.mxu0 0
      %3629 = vmatprep.subr.bf16.mxu0 0
      %3630 = vmatpush1.bf16.msra.mxu0 0
      %3631 = vmatprep.subr.bf16.mxu0 0
      %3632 = vmatpush1.bf16.msra.mxu0 0
      %3633 = vmatprep.subr.bf16.mxu0 0
      %3634 = vmatpush1.bf16.msra.mxu0 0
      %3635 = vmatprep.subr.bf16.mxu0 0
      %3636 = vmatpush1.bf16.msra.mxu0 0
      %3637 = vmatprep.subr.bf16.mxu0 0
      %3638 = vmatpush1.bf16.msra.mxu0 0
      %3639 = vmatprep.subr.bf16.mxu0 0
      %3640 = vmatpush1.bf16.msra.mxu0 0
      %3641 = vmatprep.subr.bf16.mxu0 0
      %3642 = vmatpush1.bf16.msra.mxu0 0
      %3643 = vmatprep.subr.bf16.mxu0 0
      %3644 = vmatpush1.bf16.msra.mxu0 0
      %3645 = vmatprep.mubr.bf16.mxu0 0
      %3646 = vmatmul.mubr.bf16.gmra.mrb[0].mxu0 %v3611
      %v3647 = vpop.f32.mrb[0].mxu0
      %v3648 = vadd.f32 0.0, %v3647
      %v3649 = vpop.f32.mrb[0].mxu0
      %v3650 = vpop.f32.mrb[0].mxu0
      %v3651 = vpop.f32.mrb[0].mxu0
      %3652 = vdwg.mxu0
      %v3653 = vadd.f32 %v3604, %v3648
      %v3655 = vsel %vm297, %v3609, 0
      %3657 = vmatprep.subr.bf16.mxu0 0
      %3658 = vmatpush1.bf16.msra.mxu0 %v508
      %3659 = vmatprep.subr.bf16.mxu0 0
      %3660 = vmatpush1.bf16.msra.mxu0 0
      %3661 = vmatprep.subr.bf16.mxu0 0
      %3662 = vmatpush1.bf16.msra.mxu0 0
      %3663 = vmatprep.subr.bf16.mxu0 0
      %3664 = vmatpush1.bf16.msra.mxu0 0
      %3665 = vmatprep.subr.bf16.mxu0 0
      %3666 = vmatpush1.bf16.msra.mxu0 0
      %3667 = vmatprep.subr.bf16.mxu0 0
      %3668 = vmatpush1.bf16.msra.mxu0 0
      %3669 = vmatprep.subr.bf16.mxu0 0
      %3670 = vmatpush1.bf16.msra.mxu0 0
      %3671 = vmatprep.subr.bf16.mxu0 0
      %3672 = vmatpush1.bf16.msra.mxu0 0
      %3673 = vmatprep.subr.bf16.mxu0 0
      %3674 = vmatpush1.bf16.msra.mxu0 0
      %3675 = vmatprep.subr.bf16.mxu0 0
      %3676 = vmatpush1.bf16.msra.mxu0 0
      %3677 = vmatprep.subr.bf16.mxu0 0
      %3678 = vmatpush1.bf16.msra.mxu0 0
      %3679 = vmatprep.subr.bf16.mxu0 0
      %3680 = vmatpush1.bf16.msra.mxu0 0
      %3681 = vmatprep.subr.bf16.mxu0 0
      %3682 = vmatpush1.bf16.msra.mxu0 0
      %3683 = vmatprep.subr.bf16.mxu0 0
      %3684 = vmatpush1.bf16.msra.mxu0 0
      %3685 = vmatprep.subr.bf16.mxu0 0
      %3686 = vmatpush1.bf16.msra.mxu0 0
      %3687 = vmatprep.subr.bf16.mxu0 0
      %3688 = vmatpush1.bf16.msra.mxu0 0
      %3689 = vmatprep.mubr.bf16.mxu0 0
      %3690 = vmatmul.mubr.bf16.gmra.mrb[0].mxu0 %v3655
      %v3691 = vpop.f32.mrb[0].mxu0
      %v3692 = vadd.f32 0.0, %v3691
      %v3693 = vpop.f32.mrb[0].mxu0
      %v3694 = vpop.f32.mrb[0].mxu0
      %v3695 = vpop.f32.mrb[0].mxu0
      %3696 = vdwg.mxu0
      %v3697 = vadd.f32 %v3653, %v3692
      %v3700 = vunpack.c.l.b16 %v3606
      %v3701 = vunpack.c.l.b16 %v3607
      %v3702 = vpack.c.b16 %v3701, %v3700
      %v3704 = vshrl.u32 %v3702, 16
      %v3706 = vshll.u32 %v3702, 16
      %v3708 = vrot.slane %v3706, 1
      %v3709 = vor.u32 %v3704, %v3708
      %v3711 = vsel %vm297, %v3709, 0
      %3713 = vmatprep.subr.bf16.mxu0 0
      %3714 = vmatpush1.bf16.msra.mxu0 %v567
      %3715 = vmatprep.subr.bf16.mxu0 0
      %3716 = vmatpush1.bf16.msra.mxu0 0
      %3717 = vmatprep.subr.bf16.mxu0 0
      %3718 = vmatpush1.bf16.msra.mxu0 0
      %3719 = vmatprep.subr.bf16.mxu0 0
      %3720 = vmatpush1.bf16.msra.mxu0 0
      %3721 = vmatprep.subr.bf16.mxu0 0
      %3722 = vmatpush1.bf16.msra.mxu0 0
      %3723 = vmatprep.subr.bf16.mxu0 0
      %3724 = vmatpush1.bf16.msra.mxu0 0
      %3725 = vmatprep.subr.bf16.mxu0 0
      %3726 = vmatpush1.bf16.msra.mxu0 0
      %3727 = vmatprep.subr.bf16.mxu0 0
      %3728 = vmatpush1.bf16.msra.mxu0 0
      %3729 = vmatprep.subr.bf16.mxu0 0
      %3730 = vmatpush1.bf16.msra.mxu0 0
      %3731 = vmatprep.subr.bf16.mxu0 0
      %3732 = vmatpush1.bf16.msra.mxu0 0
      %3733 = vmatprep.subr.bf16.mxu0 0
      %3734 = vmatpush1.bf16.msra.mxu0 0
      %3735 = vmatprep.subr.bf16.mxu0 0
      %3736 = vmatpush1.bf16.msra.mxu0 0
      %3737 = vmatprep.subr.bf16.mxu0 0
      %3738 = vmatpush1.bf16.msra.mxu0 0
      %3739 = vmatprep.subr.bf16.mxu0 0
      %3740 = vmatpush1.bf16.msra.mxu0 0
      %3741 = vmatprep.subr.bf16.mxu0 0
      %3742 = vmatpush1.bf16.msra.mxu0 0
      %3743 = vmatprep.subr.bf16.mxu0 0
      %3744 = vmatpush1.bf16.msra.mxu0 0
      %3745 = vmatprep.mubr.bf16.mxu0 0
      %3746 = vmatmul.mubr.bf16.gmra.mrb[0].mxu0 %v3711
      %v3747 = vpop.f32.mrb[0].mxu0
      %v3748 = vadd.f32 0.0, %v3747
      %v3749 = vpop.f32.mrb[0].mxu0
      %v3750 = vpop.f32.mrb[0].mxu0
      %v3751 = vpop.f32.mrb[0].mxu0
      %3752 = vdwg.mxu0
      %v3753 = vadd.f32 %v3697, %v3748
      %s3754 = scalar_lea.vmem %s248, 128
      %v3755 = vld [vmem:[%s3754] sm:$0xf]
      %v3756 = vld [vmem:[%s3754 + $0x4] sm:$0x1]
      %s3757 = scalar_lea.vmem %s253, 128
      %v3758 = vld [vmem:[%s3757] sm:$0xf]
      %v3760 = vsel %vm297, %v3755, 0
      %3762 = vmatprep.subr.bf16.mxu0 0
      %3763 = vmatpush1.bf16.msra.mxu0 %v619
      %3764 = vmatprep.subr.bf16.mxu0 0
      %3765 = vmatpush1.bf16.msra.mxu0 0
      %3766 = vmatprep.subr.bf16.mxu0 0
      %3767 = vmatpush1.bf16.msra.mxu0 0
      %3768 = vmatprep.subr.bf16.mxu0 0
      %3769 = vmatpush1.bf16.msra.mxu0 0
      %3770 = vmatprep.subr.bf16.mxu0 0
      %3771 = vmatpush1.bf16.msra.mxu0 0
      %3772 = vmatprep.subr.bf16.mxu0 0
      %3773 = vmatpush1.bf16.msra.mxu0 0
      %3774 = vmatprep.subr.bf16.mxu0 0
      %3775 = vmatpush1.bf16.msra.mxu0 0
      %3776 = vmatprep.subr.bf16.mxu0 0
      %3777 = vmatpush1.bf16.msra.mxu0 0
      %3778 = vmatprep.subr.bf16.mxu0 0
      %3779 = vmatpush1.bf16.msra.mxu0 0
      %3780 = vmatprep.subr.bf16.mxu0 0
      %3781 = vmatpush1.bf16.msra.mxu0 0
      %3782 = vmatprep.subr.bf16.mxu0 0
      %3783 = vmatpush1.bf16.msra.mxu0 0
      %3784 = vmatprep.subr.bf16.mxu0 0
      %3785 = vmatpush1.bf16.msra.mxu0 0
      %3786 = vmatprep.subr.bf16.mxu0 0
      %3787 = vmatpush1.bf16.msra.mxu0 0
      %3788 = vmatprep.subr.bf16.mxu0 0
      %3789 = vmatpush1.bf16.msra.mxu0 0
      %3790 = vmatprep.subr.bf16.mxu0 0
      %3791 = vmatpush1.bf16.msra.mxu0 0
      %3792 = vmatprep.subr.bf16.mxu0 0
      %3793 = vmatpush1.bf16.msra.mxu0 0
      %3794 = vmatprep.mubr.bf16.mxu0 0
      %3795 = vmatmul.mubr.bf16.gmra.mrb[0].mxu0 %v3760
      %v3796 = vpop.f32.mrb[0].mxu0
      %v3797 = vadd.f32 0.0, %v3796
      %v3798 = vpop.f32.mrb[0].mxu0
      %v3799 = vpop.f32.mrb[0].mxu0
      %v3800 = vpop.f32.mrb[0].mxu0
      %3801 = vdwg.mxu0
      %v3802 = vadd.f32 %v3753, %v3797
      %v3804 = vsel %vm297, %v3758, 0
      %3806 = vmatprep.subr.bf16.mxu0 0
      %3807 = vmatpush1.bf16.msra.mxu0 %v666
      %3808 = vmatprep.subr.bf16.mxu0 0
      %3809 = vmatpush1.bf16.msra.mxu0 0
      %3810 = vmatprep.subr.bf16.mxu0 0
      %3811 = vmatpush1.bf16.msra.mxu0 0
      %3812 = vmatprep.subr.bf16.mxu0 0
      %3813 = vmatpush1.bf16.msra.mxu0 0
      %3814 = vmatprep.subr.bf16.mxu0 0
      %3815 = vmatpush1.bf16.msra.mxu0 0
      %3816 = vmatprep.subr.bf16.mxu0 0
      %3817 = vmatpush1.bf16.msra.mxu0 0
      %3818 = vmatprep.subr.bf16.mxu0 0
      %3819 = vmatpush1.bf16.msra.mxu0 0
      %3820 = vmatprep.subr.bf16.mxu0 0
      %3821 = vmatpush1.bf16.msra.mxu0 0
      %3822 = vmatprep.subr.bf16.mxu0 0
      %3823 = vmatpush1.bf16.msra.mxu0 0
      %3824 = vmatprep.subr.bf16.mxu0 0
      %3825 = vmatpush1.bf16.msra.mxu0 0
      %3826 = vmatprep.subr.bf16.mxu0 0
      %3827 = vmatpush1.bf16.msra.mxu0 0
      %3828 = vmatprep.subr.bf16.mxu0 0
      %3829 = vmatpush1.bf16.msra.mxu0 0
      %3830 = vmatprep.subr.bf16.mxu0 0
      %3831 = vmatpush1.bf16.msra.mxu0 0
      %3832 = vmatprep.subr.bf16.mxu0 0
      %3833 = vmatpush1.bf16.msra.mxu0 0
      %3834 = vmatprep.subr.bf16.mxu0 0
      %3835 = vmatpush1.bf16.msra.mxu0 0
      %3836 = vmatprep.subr.bf16.mxu0 0
      %3837 = vmatpush1.bf16.msra.mxu0 0
      %3838 = vmatprep.mubr.bf16.mxu0 0
      %3839 = vmatmul.mubr.bf16.gmra.mrb[0].mxu0 %v3804
      %v3840 = vpop.f32.mrb[0].mxu0
      %v3841 = vadd.f32 0.0, %v3840
      %v3842 = vpop.f32.mrb[0].mxu0
      %v3843 = vpop.f32.mrb[0].mxu0
      %v3844 = vpop.f32.mrb[0].mxu0
      %3845 = vdwg.mxu0
      %v3846 = vadd.f32 %v3802, %v3841
      %v3849 = vunpack.c.l.b16 %v3755
      %v3850 = vunpack.c.l.b16 %v3756
      %v3851 = vpack.c.b16 %v3850, %v3849
      %v3853 = vshrl.u32 %v3851, 16
      %v3855 = vshll.u32 %v3851, 16
      %v3857 = vrot.slane %v3855, 1
      %v3858 = vor.u32 %v3853, %v3857
      %v3860 = vsel %vm297, %v3858, 0
      %3862 = vmatprep.subr.bf16.mxu0 0
      %3863 = vmatpush1.bf16.msra.mxu0 %v725
      %3864 = vmatprep.subr.bf16.mxu0 0
      %3865 = vmatpush1.bf16.msra.mxu0 0
      %3866 = vmatprep.subr.bf16.mxu0 0
      %3867 = vmatpush1.bf16.msra.mxu0 0
      %3868 = vmatprep.subr.bf16.mxu0 0
      %3869 = vmatpush1.bf16.msra.mxu0 0
      %3870 = vmatprep.subr.bf16.mxu0 0
      %3871 = vmatpush1.bf16.msra.mxu0 0
      %3872 = vmatprep.subr.bf16.mxu0 0
      %3873 = vmatpush1.bf16.msra.mxu0 0
      %3874 = vmatprep.subr.bf16.mxu0 0
      %3875 = vmatpush1.bf16.msra.mxu0 0
      %3876 = vmatprep.subr.bf16.mxu0 0
      %3877 = vmatpush1.bf16.msra.mxu0 0
      %3878 = vmatprep.subr.bf16.mxu0 0
      %3879 = vmatpush1.bf16.msra.mxu0 0
      %3880 = vmatprep.subr.bf16.mxu0 0
      %3881 = vmatpush1.bf16.msra.mxu0 0
      %3882 = vmatprep.subr.bf16.mxu0 0
      %3883 = vmatpush1.bf16.msra.mxu0 0
      %3884 = vmatprep.subr.bf16.mxu0 0
      %3885 = vmatpush1.bf16.msra.mxu0 0
      %3886 = vmatprep.subr.bf16.mxu0 0
      %3887 = vmatpush1.bf16.msra.mxu0 0
      %3888 = vmatprep.subr.bf16.mxu0 0
      %3889 = vmatpush1.bf16.msra.mxu0 0
      %3890 = vmatprep.subr.bf16.mxu0 0
      %3891 = vmatpush1.bf16.msra.mxu0 0
      %3892 = vmatprep.subr.bf16.mxu0 0
      %3893 = vmatpush1.bf16.msra.mxu0 0
      %3894 = vmatprep.mubr.bf16.mxu0 0
      %3895 = vmatmul.mubr.bf16.gmra.mrb[0].mxu0 %v3860
      %v3896 = vpop.f32.mrb[0].mxu0
      %v3897 = vadd.f32 0.0, %v3896
      %v3898 = vpop.f32.mrb[0].mxu0
      %v3899 = vpop.f32.mrb[0].mxu0
      %v3900 = vpop.f32.mrb[0].mxu0
      %3901 = vdwg.mxu0
      %v3902 = vadd.f32 %v3846, %v3897
      %v3903 = vmax.f32 %v3902, 0.0
      %s3904 = scalar_lea.vmem %s268, 56
      %3905 = vst [vmem:[%s3904] sm:$0xff] %v3903
      %p3906 = scmp.lt.s32.totalorder %s19, 1
      %s3907 = scalar_select %p3906, %s19, 1
      %p3908 = scmp.lt.s32.totalorder %s20, 0
      %s3909 = scalar_select %p3908, %s20, 0
      %s3910 = smul.addr %s3907, 8
      %s3911 = sadd.s32 %s3909, %s3910
      %s3912 = smul.addr %s3911, 8
      %s3913 = scalar_lea.vmem %s4, %s3912
      // Predicated region
      $region37: #{_conv3x3_s2_relu_pallas.1} parent=35 // pred_check
        %p3914 = pneg %p151
      $region38: #{_conv3x3_s2_relu_pallas.1} parent=35 // pred_check_branch
        %3916 = sbr.rel (%p3914) target = $region40
      $region39: #{_conv3x3_s2_relu_pallas.1} parent=35 // pred_region
        _
      $region40: #{_conv3x3_s2_relu_pallas.1} parent=35 // pred_fallthru
        _
    $region36: #{_conv3x3_s2_relu_pallas.1} parent=5 // pred_fallthru
      _
    %p3917 = scmp.le.s32.totalorder 2, %s10
    // Predicated region
    $region41: #{_conv3x3_s2_relu_pallas.1} parent=5 // pred_check
      %p3918 = pneg %p3917
    $region42: #{_conv3x3_s2_relu_pallas.1} parent=5 // pred_check_branch
      %3920 = sbr.rel (%p3918) target = $region44
    $region43: #{_conv3x3_s2_relu_pallas.1} parent=5 // pred_region
      %s3921 = ssub.s32 %s10, 2
      // Predicated region
      $region45: #{_conv3x3_s2_relu_pallas.1} parent=43 // pred_check
        %p3922 = pneg %p157
      $region46: #{_conv3x3_s2_relu_pallas.1} parent=43 // pred_check_branch
        %3924 = sbr.rel (%p3922) target = $region48
      $region47: #{_conv3x3_s2_relu_pallas.1} parent=43 // pred_region
        %p3925 = scmp.lt.s32.totalorder %s21, 1
        %s3926 = scalar_select %p3925, %s21, 1
        %p3927 = scmp.lt.s32.totalorder %s22, 0
        %s3928 = scalar_select %p3927, %s22, 0
        %s3929 = smul.addr %s3926, 8
        %s3930 = sadd.s32 %s3928, %s3929
        %s3931 = smul.addr %s3930, 8
        %s3932 = scalar_lea.vmem %s4, %s3931
      $region48: #{_conv3x3_s2_relu_pallas.1} parent=43 // pred_fallthru
        _
    $region44: #{_conv3x3_s2_relu_pallas.1} parent=5 // pred_fallthru
      _
  $region6: #{_conv3x3_s2_relu_pallas.1} parent=0 // loop_footer
    %s14 = sadd.s32 1, %s10
  $region7: #{_conv3x3_s2_relu_pallas.1} parent=0 // loop_footer_branch
    %9 = sbr.rel target = $region3
  $region8: #{_conv3x3_s2_relu_pallas.1} parent=0 // loop_exit
    _

</llo_original>
